<compile_context>
chip_gen: v7x
topology: tpu7x:2x2x1
jax: 0.10.0
libtpu: 0.0.40
codegen_flags: <defaults>
</compile_context>

<pallas_src>
import functools

import numpy as np
import jax
import jax.numpy as jnp
from jax import lax
from jax.experimental import pallas as pl
from jax.experimental.pallas import tpu as pltpu


_LANE = 128
# Dense one-hot resize operator allowed while S_in*S_out <= 32768 elements
# (128 KiB f32 transient); above that the separable per-axis form is used.
_DENSE_RESIZE_LIMIT = 1 << 15


def _round_up(x, m):
    return (x + m - 1) // m * m


# ----------------------------------------------------------------------------
# Deterministic parameter construction (stands in for torch's random init).
# Everything stays a concrete numpy array so nothing tracer-valued can leak
# out of a jit trace.
# ----------------------------------------------------------------------------
def make_conv_params_np(seed, cin, cout):
    rng = np.random.default_rng(seed)
    bound = 1.0 / (cin ** 0.5)
    w = rng.uniform(-bound, bound, size=(cin, cout)).astype(np.float32)
    b = rng.uniform(-bound, bound, size=(cout,)).astype(np.float32)
    return w, b


# ----------------------------------------------------------------------------
# Nearest-neighbour index math, shared by kernel operands and reference path
# (matches torch F.interpolate 'nearest': src = floor(dst * in/out), clipped).
# ----------------------------------------------------------------------------
def _nearest_idx(out_size, in_size):
    idx = (np.arange(out_size, dtype=np.int64) * in_size) // out_size
    return np.minimum(idx, in_size - 1)


def _dense_resize_matrix_np(h2, w2, h1, w1):
    """One-hot (h2*w2, h1*w1) gather matrix for a nearest resize."""
    h_idx = _nearest_idx(h1, h2)
    w_idx = _nearest_idx(w1, w2)
    src = (h_idx[:, None] * w2 + w_idx[None, :]).reshape(-1)
    g = np.zeros((h2 * w2, h1 * w1), dtype=np.float32)
    g[src, np.arange(h1 * w1)] = 1.0
    return g


def nearest_resize_ref(x, out_h, out_w):
    """Pure-JAX NCHW nearest resize (reference path only)."""
    h_idx = _nearest_idx(out_h, x.shape[2])
    w_idx = _nearest_idx(out_w, x.shape[3])
    return x[:, :, h_idx, :][:, :, :, w_idx]


def conv1x1_ref(x, w, b):
    """Pure-JAX NCHW 1x1 conv (reference path only)."""
    return (jnp.einsum('nchw,cd->ndhw', x, jnp.asarray(w),
                       precision=jax.lax.Precision.HIGHEST)
            + jnp.asarray(b)[None, :, None, None])


# ----------------------------------------------------------------------------
# Static plan: the NasNet forward is symbolically executed once (pure Python,
# concrete numpy params only) into a flat op list over (C, N*H*W) slabs, with
# CSE on identical sub-expressions.  The op list is replayed inside one kernel.
# ----------------------------------------------------------------------------
class _Node:
    __slots__ = ('planner', 'idx', 'c', 'h', 'w')

    def __init__(self, planner, idx, c, h, w):
        self.planner, self.idx, self.c, self.h, self.w = planner, idx, c, h, w


class _Planner:

    def __init__(self, batch):
        self.batch = batch
        self.ops = []
        self.nodes = []
        self.input_idx = []
        self.params = []          # list of (w (cin,cout), b (cout,)) numpy
        self._param_slot = {}
        self._cse = {}
        self.head_idx = None
        self.slot = 8
        self.wpack = None
        self.bpack = None
        self.dense_g_index = {}
        self.gmats = []

    # -- graph construction -------------------------------------------------
    def _new_node(self, c, h, w):
        nd = _Node(self, len(self.nodes), c, h, w)
        self.nodes.append(nd)
        return nd

    def add_input(self, shape):
        _, c, h, w = shape
        nd = self._new_node(c, h, w)
        self.input_idx.append(nd.idx)
        return nd

    def register_param(self, owner, w, b):
        key = id(owner)
        if key not in self._param_slot:
            self._param_slot[key] = len(self.params)
            self.params.append((np.asarray(w, np.float32),
                                np.asarray(b, np.float32)))
        return self._param_slot[key]

    def conv(self, x, slot):
        w, _ = self.params[slot]
        cin, cout = w.shape
        assert x.c == cin
        key = ('conv', x.idx, slot)
        if key not in self._cse:
            out = self._new_node(cout, x.h, x.w)
            self.ops.append(('conv', out.idx, x.idx, slot, cout, cin))
            self._cse[key] = out
        return self._cse[key]

    def resize(self, x, out_h, out_w):
        if (out_h, out_w) == (x.h, x.w):
            return x                      # nearest resize to same size == copy
        key = ('resize', x.idx, out_h, out_w)
        if key not in self._cse:
            out = self._new_node(x.c, out_h, out_w)
            self.ops.append(('resize', out.idx, x.idx, x.h, x.w, out_h, out_w))
            self._cse[key] = out
        return self._cse[key]

    def add(self, a, b):
        key = ('add', a.idx, b.idx)
        if key not in self._cse:
            out = self._new_node(a.c, a.h, a.w)
            self.ops.append(('add', out.idx, a.idx, b.idx))
            self._cse[key] = out
        return self._cse[key]

    # -- finalisation: pack params, build dense resize operators -------------
    def finalize(self, head_nodes):
        self.head_idx = [nd.idx for nd in head_nodes]

        maxc = 8
        for w, _ in self.params:
            maxc = max(maxc, w.shape[0], w.shape[1])
        self.slot = _round_up(maxc, 8)
        nparams = max(len(self.params), 1)
        self.wpack = np.zeros((self.slot, self.slot * nparams), np.float32)
        self.bpack = np.zeros((self.slot, nparams), np.float32)
        for k, (w, b) in enumerate(self.params):
            cin, cout = w.shape
            self.wpack[:cout, k * self.slot:k * self.slot + cin] = w.T
            self.bpack[:cout, k] = b

        self.dense_g_index = {}
        self.gmats = []
        for op in self.ops:
            if op[0] != 'resize':
                continue
            _, _, _, h2, w2, h1, w1 = op
            spec = (h2, w2, h1, w1)
            if spec in self.dense_g_index:
                continue
            if (h2 * w2) * (h1 * w1) <= _DENSE_RESIZE_LIMIT:
                self.dense_g_index[spec] = len(self.gmats)
                self.gmats.append(_dense_resize_matrix_np(h2, w2, h1, w1))


# ----------------------------------------------------------------------------
# In-kernel resize helpers (slabs are (C, N*H*W), n-major/h/w flattening)
# ----------------------------------------------------------------------------
def _resize_dense(x, n, s2, s1, g):
    """Per-image one-hot gather matmul: (C, n*s2) -> (C, n*s1)."""
    parts = [jnp.dot(x[:, i * s2:(i + 1) * s2], g,
                     preferred_element_type=jnp.float32) for i in range(n)]
    return parts[0] if n == 1 else jnp.concatenate(parts, axis=1)


def _axis_onehot_iota(in_size, out_size, transposed=False):
    """One-hot per-axis nearest operator built from iotas (no HBM constant)."""
    if transposed:
        shape, s_dim, d_dim = (out_size, in_size), 1, 0
    else:
        shape, s_dim, d_dim = (in_size, out_size), 0, 1
    s = lax.broadcasted_iota(jnp.int32, shape, s_dim)
    d = lax.broadcasted_iota(jnp.int32, shape, d_dim)
    src = jnp.minimum((d * in_size) // out_size, in_size - 1)
    return (s == src).astype(jnp.float32)


def _resize_separable(x, n, c, h2, w2, h1, w1):
    """Separable (W then H) nearest resize for large feature maps.

    Operator memory is O(w2*w1 + h1*h2) instead of O(s2*s1); this is the
    scaling path for realistic FPN sizes (not exercised at the toy shapes
    in __main__, which all fall under _DENSE_RESIZE_LIMIT).
    """
    s1 = h1 * w1
    t = x.reshape(c * n * h2, w2)
    if w1 != w2:
        t = jnp.dot(t, _axis_onehot_iota(w2, w1),
                    preferred_element_type=jnp.float32)
    t = t.reshape(c * n, h2, w1)
    if h1 != h2:
        gh = jnp.broadcast_to(_axis_onehot_iota(h2, h1, transposed=True),
                              (c * n, h1, h2))
        t = jnp.einsum('bih,bhw->biw', gh, t,
                       preferred_element_type=jnp.float32)
    return t.reshape(c, n * s1)


# ----------------------------------------------------------------------------
# The single fused kernel: replays the plan with all intermediates in VMEM.
# ----------------------------------------------------------------------------
def _nasnet_kernel(*refs, plan):
    n_g = len(plan.gmats)
    x_refs = refs[:4]
    wpack = refs[4][...]
    bpack = refs[5][...]
    g_refs = refs[6:6 + n_g]
    out_refs = refs[6 + n_g:]

    n = plan.batch
    slot = plan.slot

    vals = {}
    for head_i in range(4):
        vals[plan.input_idx[head_i]] = x_refs[head_i][...].astype(jnp.float32)

    gvals = {}
    for op in plan.ops:
        kind = op[0]
        if kind == 'conv':
            _, out_i, in_i, k, cout, cin = op
            wt = wpack[0:cout, k * slot:k * slot + cin]        # (cout, cin)
            b = bpack[0:cout, k:k + 1]                         # (cout, 1)
            vals[out_i] = (jnp.dot(wt, vals[in_i],
                                   preferred_element_type=jnp.float32) + b)
        elif kind == 'resize':
            _, out_i, in_i, h2, w2, h1, w1 = op
            spec = (h2, w2, h1, w1)
            x = vals[in_i]
            if spec in plan.dense_g_index:
                gi = plan.dense_g_index[spec]
                if gi not in gvals:
                    gvals[gi] = g_refs[gi][...]
                vals[out_i] = _resize_dense(x, n, h2 * w2, h1 * w1, gvals[gi])
            else:
                c = plan.nodes[in_i].c
                vals[out_i] = _resize_separable(x, n, c, h2, w2, h1, w1)
        else:  # 'add'
            _, out_i, a_i, b_i = op
            vals[out_i] = vals[a_i] + vals[b_i]

    # lane-dense stores: pad the last dim up to the (128-multiple) output width
    for head_i in range(4):
        v = vals[plan.head_idx[head_i]]
        ref = out_refs[head_i]
        pad = ref.shape[1] - v.shape[1]
        if pad:
            v = jnp.concatenate(
                [v, jnp.zeros((v.shape[0], pad), jnp.float32)], axis=1)
        ref[...] = v.astype(ref.dtype)


def _run_plan_pallas(plan, inputs):
    n = plan.batch
    dtype = inputs[0].dtype

    # (N,C,H,W) -> (C, N*H*W): layout plumbing done once per call on tiny
    # arrays; keeps channels on sublanes and batch*spatial on lanes in-kernel.
    slabs = []
    for x in inputs:
        _, c, h, w = x.shape
        slabs.append(jnp.transpose(x, (1, 0, 2, 3)).reshape(c, n * h * w))

    out_shapes = []
    out_meta = []
    for idx in plan.head_idx:
        node = plan.nodes[idx]
        lanes = n * node.h * node.w
        padded = _round_up(lanes, _LANE)
        out_shapes.append(jax.ShapeDtypeStruct((node.c, padded), dtype))
        out_meta.append((node.c, node.h, node.w, lanes))

    operands = (tuple(slabs)
                + (jnp.asarray(plan.wpack), jnp.asarray(plan.bpack))
                + tuple(jnp.asarray(g) for g in plan.gmats))

    def full_spec(shape):
        nd = len(shape)
        return pl.BlockSpec(tuple(shape), lambda i, _nd=nd: (0,) * _nd)

    in_specs = [full_spec(a.shape) for a in operands]
    out_specs = tuple(full_spec(s.shape) for s in out_shapes)

    outs = pl.pallas_call(
        functools.partial(_nasnet_kernel, plan=plan),
        out_shape=tuple(out_shapes),
        grid=(1,),
        in_specs=in_specs,
        out_specs=out_specs,
        compiler_params=pltpu.CompilerParams(
            dimension_semantics=("arbitrary",),
            # whole-net footprint is ~hundreds of KiB; explicit limit kept
            # comfortably under v7x's 64 MiB physical VMEM as a scaling guard.
            vmem_limit_bytes=32 * 1024 * 1024,
        ),
    )(*operands)

    results = []
    for o, (c, h, w, lanes) in zip(outs, out_meta):
        o = o[:, :lanes].reshape(c, n, h, w)
        results.append(jnp.transpose(o, (1, 0, 2, 3)))
    return tuple(results)


# ----------------------------------------------------------------------------
# Network structure (faithful port of ConcatLayer / HeadCreator /
# NetworkCreator / NasNet, including the shared mutable feature list).
# Each module __call__ works on real arrays (pure-JAX reference path) or on
# _Node objects (plan-building path for the fused Pallas kernel).
# ----------------------------------------------------------------------------
class FeatureMap:
    """The 'fm*' modules of feature_maps_dict: a 1x1 conv (Cin == Cout)."""

    def __init__(self, w, b):
        self.w = np.asarray(w, np.float32)
        self.b = np.asarray(b, np.float32)

    def __call__(self, x):
        if isinstance(x, _Node):
            slot = x.planner.register_param(self, self.w, self.b)
            return x.planner.conv(x, slot)
        return conv1x1_ref(x, self.w, self.b)


class ConcatLayer:

    def __init__(self, based_layer, concat_layer, based_id, concat_id,
                 up_sample=True, seed=0):
        self.based_layer = based_layer
        self.concat_layer = concat_layer
        self.up_sample = up_sample      # both reference branches are identical
        self.based_id = based_id
        self.concat_id = concat_id
        self._seed = seed
        self._trans = None              # (w, b) as concrete numpy only

    def _transformer(self, cin, cout):
        # TODO(synk): the torch reference builds a FRESH randomly-initialised
        # nn.Conv2d on every forward call; this deterministic port uses one
        # fixed conv per ConcatLayer instance (numpy weights, never tracers).
        if self._trans is None:
            self._trans = make_conv_params_np(1000 + self._seed, cin, cout)
        return self._trans

    def __call__(self, x):
        if isinstance(self.based_layer, ConcatLayer):
            out1 = self.based_layer(x)
        else:
            out1 = self.based_layer(x[self.based_id])
        if isinstance(self.concat_layer, ConcatLayer):
            out2 = self.concat_layer(x)
        else:
            out2 = self.concat_layer(x[self.concat_id])

        c1 = out1.c if isinstance(out1, _Node) else out1.shape[1]
        c2 = out2.c if isinstance(out2, _Node) else out2.shape[1]
        w, b = self._transformer(c2, c1)

        if isinstance(out1, _Node):
            p = out1.planner
            slot = p.register_param(self, w, b)
            conv = p.conv(out2, slot)
            resized = p.resize(conv, out1.h, out1.w)
            return p.add(out1, resized)

        conv = conv1x1_ref(out2, w, b)
        resized = nearest_resize_ref(conv, out1.shape[2], out1.shape[3])
        return out1 + resized


class HeadCreator:

    def __init__(self, model_modules, head_id):
        self.head_id = head_id
        self.modules = list(model_modules)

    def __call__(self, x):
        x[self.head_id] = self.modules[0](x[self.head_id])
        for module in self.modules[1:]:
            x[self.head_id] = module(x)
        return x[self.head_id]


class NetworkCreator:

    def __init__(self, feature_maps, nas_matrix):
        self.feature_maps = feature_maps
        self.nas_matrix = nas_matrix
        self._layer_seed = 0
        self.layers_head_1 = [self.feature_maps['fm1']]
        self.layers_head_2 = [self.feature_maps['fm2']]
        self.layers_head_3 = [self.feature_maps['fm3']]
        self.layers_head_4 = [self.feature_maps['fm4']]
        self.creator()

    def head_x_1(self):
        return HeadCreator(self.layers_head_1, 0)

    def head_x_2(self):
        return HeadCreator(self.layers_head_2, 1)

    def head_x_3(self):
        return HeadCreator(self.layers_head_3, 2)

    def head_x_4(self):
        return HeadCreator(self.layers_head_4, 3)

    def creator(self):
        for column_id in range(0, self.nas_matrix.shape[1]):
            self.layers_head_1 += self.make_layers(
                layer_exist=self.nas_matrix[0, column_id, 0],
                concat_layer_id=self.nas_matrix[0, column_id, 1], layer_row_id=0)
        for column_id in range(0, self.nas_matrix.shape[1]):
            self.layers_head_2 += self.make_layers(
                layer_exist=self.nas_matrix[0, column_id, 0],
                concat_layer_id=self.nas_matrix[0, column_id, 1], layer_row_id=1)
        for column_id in range(0, self.nas_matrix.shape[1]):
            self.layers_head_3 += self.make_layers(
                layer_exist=self.nas_matrix[0, column_id, 0],
                concat_layer_id=self.nas_matrix[0, column_id, 1], layer_row_id=2)
        for column_id in range(0, self.nas_matrix.shape[1]):
            self.layers_head_4 += self.make_layers(
                layer_exist=self.nas_matrix[0, column_id, 0],
                concat_layer_id=self.nas_matrix[0, column_id, 1], layer_row_id=3)
        return True

    def make_layers(self, layer_exist, concat_layer_id, layer_row_id):
        layers_list = [self.layers_head_1, self.layers_head_2,
                       self.layers_head_3, self.layers_head_4]
        if layer_exist == 0:
            return []
        if layer_row_id > concat_layer_id:
            self._layer_seed += 1
            return [ConcatLayer(layers_list[layer_row_id][-1],
                                layers_list[int(concat_layer_id)][-1],
                                based_id=layer_row_id,
                                concat_id=int(concat_layer_id),
                                up_sample=False, seed=self._layer_seed)]
        if layer_row_id < concat_layer_id:
            self._layer_seed += 1
            return [ConcatLayer(layers_list[layer_row_id][-1],
                                layers_list[int(concat_layer_id)][-1],
                                based_id=layer_row_id,
                                concat_id=int(concat_layer_id),
                                up_sample=True, seed=self._layer_seed)]
        if layer_row_id == concat_layer_id:
            return []


class NasNet:

    def __init__(self, feature_maps_dict, nas_matrix):
        self.network_creator = NetworkCreator(feature_maps_dict, nas_matrix)
        self.head_x1 = self.network_creator.head_x_1()
        self.head_x2 = self.network_creator.head_x_2()
        self.head_x3 = self.network_creator.head_x_3()
        self.head_x4 = self.network_creator.head_x_4()
        self._plans = {}

    def _plan(self, shapes):
        key = tuple(shapes)
        if key not in self._plans:
            planner = _Planner(batch=shapes[0][0])
            x = [planner.add_input(s) for s in shapes]
            heads = [self.head_x1(x), self.head_x2(x),
                     self.head_x3(x), self.head_x4(x)]
            planner.finalize(heads)
            self._plans[key] = planner
        return self._plans[key]

    def forward(self, input_head_1, input_head_2, input_head_3, input_head_4):
        inputs = (input_head_1, input_head_2, input_head_3, input_head_4)
        plan = self._plan(tuple(x.shape for x in inputs))
        return _run_plan_pallas(plan, inputs)

    def forward_reference(self, input_head_1, input_head_2, input_head_3,
                          input_head_4):
        x = [input_head_1, input_head_2, input_head_3, input_head_4]
        out_1 = self.head_x1(x)
        out_2 = self.head_x2(x)
        out_3 = self.head_x3(x)
        out_4 = self.head_x4(x)
        return (out_1, out_2, out_3, out_4)


# ----------------------------------------------------------------------------
# Main
# ----------------------------------------------------------------------------
if __name__ == "__main__":
    key = jax.random.PRNGKey(0)
    keys = jax.random.split(key, 8)

    N = 2
    # per-head (channels, spatial) like a small FPN pyramid
    C = {1: 4, 2: 8, 3: 4, 4: 8}
    HW = {1: 16, 2: 8, 3: 4, 4: 4}

    feature_maps = {}
    for i in range(1, 5):
        w, b = make_conv_params_np(i, C[i], C[i])
        feature_maps[f'fm{i}'] = FeatureMap(w, b)

    # nas_matrix: only row 0 is read by the reference; shape (1, columns, 2)
    nas_matrix = np.array([[[1, 2], [1, 0]]], dtype=np.int32)

    net = NasNet(feature_maps, nas_matrix)

    inputs = []
    for i in range(1, 5):
        inputs.append(jax.random.normal(
            keys[3 + i], (N, C[i], HW[i], HW[i]), jnp.float32))

    # --- Pallas path: whole forward is one fused kernel under one jit ---
    forward_jit = jax.jit(net.forward)
    out_1, out_2, out_3, out_4 = forward_jit(*inputs)
    for o in (out_1, out_2, out_3, out_4):
        o.block_until_ready()

    assert out_1.shape == (N, C[1], HW[1], HW[1])
    assert out_2.shape == (N, C[2], HW[2], HW[2])
    assert out_3.shape == (N, C[3], HW[3], HW[3])
    assert out_4.shape == (N, C[4], HW[4], HW[4])

    # --- pure-JAX reference with the same fixed weights (run eagerly) ---
    ref_1, ref_2, ref_3, ref_4 = net.forward_reference(*inputs)
    for got, ref in zip((out_1, out_2, out_3, out_4),
                        (ref_1, ref_2, ref_3, ref_4)):
        np.testing.assert_allclose(np.asarray(got), np.asarray(ref),
                                   rtol=1e-3, atol=1e-3)

    print("KERNEL_OK")
</pallas_src>

<mosaic_0001>
module attributes {stable_mosaic.version = 11 : i64} {
  func.func @_nasnet_kernel(%arg0: i32, %arg1: memref<4x512xf32, #tpu.memory_space<vmem>>, %arg2: memref<8x128xf32, #tpu.memory_space<vmem>>, %arg3: memref<4x32xf32, #tpu.memory_space<vmem>>, %arg4: memref<8x32xf32, #tpu.memory_space<vmem>>, %arg5: memref<8x80xf32, #tpu.memory_space<vmem>>, %arg6: memref<8x10xf32, #tpu.memory_space<vmem>>, %arg7: memref<16x256xf32, #tpu.memory_space<vmem>>, %arg8: memref<16x64xf32, #tpu.memory_space<vmem>>, %arg9: memref<256x64xf32, #tpu.memory_space<vmem>>, %arg10: memref<256x16xf32, #tpu.memory_space<vmem>>, %arg11: memref<4x512xf32, #tpu.memory_space<vmem>>, %arg12: memref<8x128xf32, #tpu.memory_space<vmem>>, %arg13: memref<4x128xf32, #tpu.memory_space<vmem>>, %arg14: memref<8x128xf32, #tpu.memory_space<vmem>>) attributes {dimension_semantics = [#tpu.dimension_semantics<arbitrary>], iteration_bounds = array<i64: 1>, scalar_prefetch = 0 : i64, scratch_operands = 0 : i64, tpu.core_type = #tpu.core_type<tc>, window_params = [{pipeline_mode = #tpu.pipeline_mode<synchronous>, transform_indices = @transform_0, window_bounds = array<i64: 4, 512>}, {pipeline_mode = #tpu.pipeline_mode<synchronous>, transform_indices = @transform_1, window_bounds = array<i64: 8, 128>}, {pipeline_mode = #tpu.pipeline_mode<synchronous>, transform_indices = @transform_2, window_bounds = array<i64: 4, 32>}, {pipeline_mode = #tpu.pipeline_mode<synchronous>, transform_indices = @transform_3, window_bounds = array<i64: 8, 32>}, {pipeline_mode = #tpu.pipeline_mode<synchronous>, transform_indices = @transform_4, window_bounds = array<i64: 8, 80>}, {pipeline_mode = #tpu.pipeline_mode<synchronous>, transform_indices = @transform_5, window_bounds = array<i64: 8, 10>}, {pipeline_mode = #tpu.pipeline_mode<synchronous>, transform_indices = @transform_6, window_bounds = array<i64: 16, 256>}, {pipeline_mode = #tpu.pipeline_mode<synchronous>, transform_indices = @transform_7, window_bounds = array<i64: 16, 64>}, {pipeline_mode = #tpu.pipeline_mode<synchronous>, transform_indices = @transform_8, window_bounds = array<i64: 256, 64>}, {pipeline_mode = #tpu.pipeline_mode<synchronous>, transform_indices = @transform_9, window_bounds = array<i64: 256, 16>}, {pipeline_mode = #tpu.pipeline_mode<synchronous>, transform_indices = @transform_10, window_bounds = array<i64: 4, 512>}, {pipeline_mode = #tpu.pipeline_mode<synchronous>, transform_indices = @transform_11, window_bounds = array<i64: 8, 128>}, {pipeline_mode = #tpu.pipeline_mode<synchronous>, transform_indices = @transform_12, window_bounds = array<i64: 4, 128>}, {pipeline_mode = #tpu.pipeline_mode<synchronous>, transform_indices = @transform_13, window_bounds = array<i64: 8, 128>}]} {
    %c0 = arith.constant 0 : index
    %c0_0 = arith.constant 0 : index
    %0 = vector.load %arg5[%c0, %c0_0] : memref<8x80xf32, #tpu.memory_space<vmem>>, vector<8x80xf32>
    %c0_1 = arith.constant 0 : index
    %c0_2 = arith.constant 0 : index
    %1 = vector.load %arg6[%c0_1, %c0_2] : memref<8x10xf32, #tpu.memory_space<vmem>>, vector<8x10xf32>
    %c0_3 = arith.constant 0 : index
    %c0_4 = arith.constant 0 : index
    %2 = vector.load %arg1[%c0_3, %c0_4] : memref<4x512xf32, #tpu.memory_space<vmem>>, vector<4x512xf32>
    %c0_5 = arith.constant 0 : index
    %c0_6 = arith.constant 0 : index
    %3 = vector.load %arg2[%c0_5, %c0_6] : memref<8x128xf32, #tpu.memory_space<vmem>>, vector<8x128xf32>
    %c0_7 = arith.constant 0 : index
    %c0_8 = arith.constant 0 : index
    %4 = vector.load %arg3[%c0_7, %c0_8] : memref<4x32xf32, #tpu.memory_space<vmem>>, vector<4x32xf32>
    %c0_9 = arith.constant 0 : index
    %c0_10 = arith.constant 0 : index
    %5 = vector.load %arg4[%c0_9, %c0_10] : memref<8x32xf32, #tpu.memory_space<vmem>>, vector<8x32xf32>
    %6 = vector.extract_strided_slice %0 {offsets = [0, 0], sizes = [4, 4], strides = [1, 1]} : vector<8x80xf32> to vector<4x4xf32>
    %7 = vector.extract_strided_slice %1 {offsets = [0, 0], sizes = [4, 1], strides = [1, 1]} : vector<8x10xf32> to vector<4x1xf32>
    %cst = arith.constant dense<0.000000e+00> : vector<4x512xf32>
    %8 = tpu.matmul %6, %2, %cst {dimension_numbers = #tpu.dot_dimension_numbers<[1], [0], [0], [1], [0, 0, 1, 1], [], []>} : vector<4x4xf32>, vector<4x512xf32>, vector<4x512xf32> -> vector<4x512xf32>
    %9 = vector.broadcast %7 : vector<4x1xf32> to vector<4x512xf32>
    %10 = arith.addf %8, %9 : vector<4x512xf32>
    %11 = vector.extract_strided_slice %0 {offsets = [0, 0], sizes = [4, 4], strides = [1, 1]} : vector<8x80xf32> to vector<4x4xf32>
    %12 = vector.extract_strided_slice %1 {offsets = [0, 0], sizes = [4, 1], strides = [1, 1]} : vector<8x10xf32> to vector<4x1xf32>
    %cst_11 = arith.constant dense<0.000000e+00> : vector<4x512xf32>
    %13 = tpu.matmul %11, %10, %cst_11 {dimension_numbers = #tpu.dot_dimension_numbers<[1], [0], [0], [1], [0, 0, 1, 1], [], []>} : vector<4x4xf32>, vector<4x512xf32>, vector<4x512xf32> -> vector<4x512xf32>
    %14 = vector.broadcast %12 : vector<4x1xf32> to vector<4x512xf32>
    %15 = arith.addf %13, %14 : vector<4x512xf32>
    %16 = vector.extract_strided_slice %0 {offsets = [0, 8], sizes = [4, 4], strides = [1, 1]} : vector<8x80xf32> to vector<4x4xf32>
    %17 = vector.extract_strided_slice %1 {offsets = [0, 1], sizes = [4, 1], strides = [1, 1]} : vector<8x10xf32> to vector<4x1xf32>
    %cst_12 = arith.constant dense<0.000000e+00> : vector<4x32xf32>
    %18 = tpu.matmul %16, %4, %cst_12 {dimension_numbers = #tpu.dot_dimension_numbers<[1], [0], [0], [1], [0, 0, 1, 1], [], []>} : vector<4x4xf32>, vector<4x32xf32>, vector<4x32xf32> -> vector<4x32xf32>
    %19 = vector.broadcast %17 : vector<4x1xf32> to vector<4x32xf32>
    %20 = arith.addf %18, %19 : vector<4x32xf32>
    %21 = vector.extract_strided_slice %0 {offsets = [0, 16], sizes = [4, 4], strides = [1, 1]} : vector<8x80xf32> to vector<4x4xf32>
    %22 = vector.extract_strided_slice %1 {offsets = [0, 2], sizes = [4, 1], strides = [1, 1]} : vector<8x10xf32> to vector<4x1xf32>
    %cst_13 = arith.constant dense<0.000000e+00> : vector<4x32xf32>
    %23 = tpu.matmul %21, %20, %cst_13 {dimension_numbers = #tpu.dot_dimension_numbers<[1], [0], [0], [1], [0, 0, 1, 1], [], []>} : vector<4x4xf32>, vector<4x32xf32>, vector<4x32xf32> -> vector<4x32xf32>
    %24 = vector.broadcast %22 : vector<4x1xf32> to vector<4x32xf32>
    %25 = arith.addf %23, %24 : vector<4x32xf32>
    %c0_14 = arith.constant 0 : index
    %c0_15 = arith.constant 0 : index
    %26 = vector.load %arg7[%c0_14, %c0_15] : memref<16x256xf32, #tpu.memory_space<vmem>>, vector<16x256xf32>
    %27 = vector.extract_strided_slice %25 {offsets = [0, 0], sizes = [4, 16], strides = [1, 1]} : vector<4x32xf32> to vector<4x16xf32>
    %cst_16 = arith.constant dense<0.000000e+00> : vector<4x256xf32>
    %28 = tpu.matmul %27, %26, %cst_16 {dimension_numbers = #tpu.dot_dimension_numbers<[1], [0], [0], [1], [0, 0, 1, 1], [], []>} : vector<4x16xf32>, vector<16x256xf32>, vector<4x256xf32> -> vector<4x256xf32>
    %29 = vector.extract_strided_slice %25 {offsets = [0, 16], sizes = [4, 16], strides = [1, 1]} : vector<4x32xf32> to vector<4x16xf32>
    %cst_17 = arith.constant dense<0.000000e+00> : vector<4x256xf32>
    %30 = tpu.matmul %29, %26, %cst_17 {dimension_numbers = #tpu.dot_dimension_numbers<[1], [0], [0], [1], [0, 0, 1, 1], [], []>} : vector<4x16xf32>, vector<16x256xf32>, vector<4x256xf32> -> vector<4x256xf32>
    %31 = tpu.concatenate %28, %30 in 1 : vector<4x256xf32>, vector<4x256xf32> -> vector<4x512xf32>
    %32 = arith.addf %15, %31 : vector<4x512xf32>
    %33 = vector.extract_strided_slice %0 {offsets = [0, 24], sizes = [8, 8], strides = [1, 1]} : vector<8x80xf32> to vector<8x8xf32>
    %34 = vector.extract_strided_slice %1 {offsets = [0, 3], sizes = [8, 1], strides = [1, 1]} : vector<8x10xf32> to vector<8x1xf32>
    %cst_18 = arith.constant dense<0.000000e+00> : vector<8x128xf32>
    %35 = tpu.matmul %33, %3, %cst_18 {dimension_numbers = #tpu.dot_dimension_numbers<[1], [0], [0], [1], [0, 0, 1, 1], [], []>} : vector<8x8xf32>, vector<8x128xf32>, vector<8x128xf32> -> vector<8x128xf32>
    %36 = vector.broadcast %34 : vector<8x1xf32> to vector<8x128xf32>
    %37 = arith.addf %35, %36 : vector<8x128xf32>
    %38 = vector.extract_strided_slice %0 {offsets = [0, 24], sizes = [8, 8], strides = [1, 1]} : vector<8x80xf32> to vector<8x8xf32>
    %39 = vector.extract_strided_slice %1 {offsets = [0, 3], sizes = [8, 1], strides = [1, 1]} : vector<8x10xf32> to vector<8x1xf32>
    %cst_19 = arith.constant dense<0.000000e+00> : vector<8x128xf32>
    %40 = tpu.matmul %38, %37, %cst_19 {dimension_numbers = #tpu.dot_dimension_numbers<[1], [0], [0], [1], [0, 0, 1, 1], [], []>} : vector<8x8xf32>, vector<8x128xf32>, vector<8x128xf32> -> vector<8x128xf32>
    %41 = vector.broadcast %39 : vector<8x1xf32> to vector<8x128xf32>
    %42 = arith.addf %40, %41 : vector<8x128xf32>
    %43 = vector.extract_strided_slice %0 {offsets = [0, 32], sizes = [8, 4], strides = [1, 1]} : vector<8x80xf32> to vector<8x4xf32>
    %44 = vector.extract_strided_slice %1 {offsets = [0, 4], sizes = [8, 1], strides = [1, 1]} : vector<8x10xf32> to vector<8x1xf32>
    %cst_20 = arith.constant dense<0.000000e+00> : vector<8x32xf32>
    %45 = tpu.matmul %43, %20, %cst_20 {dimension_numbers = #tpu.dot_dimension_numbers<[1], [0], [0], [1], [0, 0, 1, 1], [], []>} : vector<8x4xf32>, vector<4x32xf32>, vector<8x32xf32> -> vector<8x32xf32>
    %46 = vector.broadcast %44 : vector<8x1xf32> to vector<8x32xf32>
    %47 = arith.addf %45, %46 : vector<8x32xf32>
    %c0_21 = arith.constant 0 : index
    %c0_22 = arith.constant 0 : index
    %48 = vector.load %arg8[%c0_21, %c0_22] : memref<16x64xf32, #tpu.memory_space<vmem>>, vector<16x64xf32>
    %49 = vector.extract_strided_slice %47 {offsets = [0, 0], sizes = [8, 16], strides = [1, 1]} : vector<8x32xf32> to vector<8x16xf32>
    %cst_23 = arith.constant dense<0.000000e+00> : vector<8x64xf32>
    %50 = tpu.matmul %49, %48, %cst_23 {dimension_numbers = #tpu.dot_dimension_numbers<[1], [0], [0], [1], [0, 0, 1, 1], [], []>} : vector<8x16xf32>, vector<16x64xf32>, vector<8x64xf32> -> vector<8x64xf32>
    %51 = vector.extract_strided_slice %47 {offsets = [0, 16], sizes = [8, 16], strides = [1, 1]} : vector<8x32xf32> to vector<8x16xf32>
    %cst_24 = arith.constant dense<0.000000e+00> : vector<8x64xf32>
    %52 = tpu.matmul %51, %48, %cst_24 {dimension_numbers = #tpu.dot_dimension_numbers<[1], [0], [0], [1], [0, 0, 1, 1], [], []>} : vector<8x16xf32>, vector<16x64xf32>, vector<8x64xf32> -> vector<8x64xf32>
    %53 = tpu.concatenate %50, %52 in 1 : vector<8x64xf32>, vector<8x64xf32> -> vector<8x128xf32>
    %54 = arith.addf %42, %53 : vector<8x128xf32>
    %55 = vector.extract_strided_slice %0 {offsets = [0, 24], sizes = [8, 8], strides = [1, 1]} : vector<8x80xf32> to vector<8x8xf32>
    %56 = vector.extract_strided_slice %1 {offsets = [0, 3], sizes = [8, 1], strides = [1, 1]} : vector<8x10xf32> to vector<8x1xf32>
    %cst_25 = arith.constant dense<0.000000e+00> : vector<8x128xf32>
    %57 = tpu.matmul %55, %54, %cst_25 {dimension_numbers = #tpu.dot_dimension_numbers<[1], [0], [0], [1], [0, 0, 1, 1], [], []>} : vector<8x8xf32>, vector<8x128xf32>, vector<8x128xf32> -> vector<8x128xf32>
    %58 = vector.broadcast %56 : vector<8x1xf32> to vector<8x128xf32>
    %59 = arith.addf %57, %58 : vector<8x128xf32>
    %60 = arith.addf %59, %53 : vector<8x128xf32>
    %61 = vector.extract_strided_slice %0 {offsets = [0, 0], sizes = [4, 4], strides = [1, 1]} : vector<8x80xf32> to vector<4x4xf32>
    %62 = vector.extract_strided_slice %1 {offsets = [0, 0], sizes = [4, 1], strides = [1, 1]} : vector<8x10xf32> to vector<4x1xf32>
    %cst_26 = arith.constant dense<0.000000e+00> : vector<4x512xf32>
    %63 = tpu.matmul %61, %32, %cst_26 {dimension_numbers = #tpu.dot_dimension_numbers<[1], [0], [0], [1], [0, 0, 1, 1], [], []>} : vector<4x4xf32>, vector<4x512xf32>, vector<4x512xf32> -> vector<4x512xf32>
    %64 = vector.broadcast %62 : vector<4x1xf32> to vector<4x512xf32>
    %65 = arith.addf %63, %64 : vector<4x512xf32>
    %66 = arith.addf %65, %31 : vector<4x512xf32>
    %67 = vector.extract_strided_slice %0 {offsets = [0, 40], sizes = [8, 4], strides = [1, 1]} : vector<8x80xf32> to vector<8x4xf32>
    %68 = vector.extract_strided_slice %1 {offsets = [0, 5], sizes = [8, 1], strides = [1, 1]} : vector<8x10xf32> to vector<8x1xf32>
    %cst_27 = arith.constant dense<0.000000e+00> : vector<8x512xf32>
    %69 = tpu.matmul %67, %66, %cst_27 {dimension_numbers = #tpu.dot_dimension_numbers<[1], [0], [0], [1], [0, 0, 1, 1], [], []>} : vector<8x4xf32>, vector<4x512xf32>, vector<8x512xf32> -> vector<8x512xf32>
    %70 = vector.broadcast %68 : vector<8x1xf32> to vector<8x512xf32>
    %71 = arith.addf %69, %70 : vector<8x512xf32>
    %c0_28 = arith.constant 0 : index
    %c0_29 = arith.constant 0 : index
    %72 = vector.load %arg9[%c0_28, %c0_29] : memref<256x64xf32, #tpu.memory_space<vmem>>, vector<256x64xf32>
    %73 = vector.extract_strided_slice %71 {offsets = [0, 0], sizes = [8, 256], strides = [1, 1]} : vector<8x512xf32> to vector<8x256xf32>
    %cst_30 = arith.constant dense<0.000000e+00> : vector<8x64xf32>
    %74 = tpu.matmul %73, %72, %cst_30 {dimension_numbers = #tpu.dot_dimension_numbers<[1], [0], [0], [1], [0, 0, 1, 1], [], []>} : vector<8x256xf32>, vector<256x64xf32>, vector<8x64xf32> -> vector<8x64xf32>
    %75 = vector.extract_strided_slice %71 {offsets = [0, 256], sizes = [8, 256], strides = [1, 1]} : vector<8x512xf32> to vector<8x256xf32>
    %cst_31 = arith.constant dense<0.000000e+00> : vector<8x64xf32>
    %76 = tpu.matmul %75, %72, %cst_31 {dimension_numbers = #tpu.dot_dimension_numbers<[1], [0], [0], [1], [0, 0, 1, 1], [], []>} : vector<8x256xf32>, vector<256x64xf32>, vector<8x64xf32> -> vector<8x64xf32>
    %77 = tpu.concatenate %74, %76 in 1 : vector<8x64xf32>, vector<8x64xf32> -> vector<8x128xf32>
    %78 = arith.addf %60, %77 : vector<8x128xf32>
    %79 = vector.extract_strided_slice %0 {offsets = [0, 8], sizes = [4, 4], strides = [1, 1]} : vector<8x80xf32> to vector<4x4xf32>
    %80 = vector.extract_strided_slice %1 {offsets = [0, 1], sizes = [4, 1], strides = [1, 1]} : vector<8x10xf32> to vector<4x1xf32>
    %cst_32 = arith.constant dense<0.000000e+00> : vector<4x32xf32>
    %81 = tpu.matmul %79, %20, %cst_32 {dimension_numbers = #tpu.dot_dimension_numbers<[1], [0], [0], [1], [0, 0, 1, 1], [], []>} : vector<4x4xf32>, vector<4x32xf32>, vector<4x32xf32> -> vector<4x32xf32>
    %82 = vector.broadcast %80 : vector<4x1xf32> to vector<4x32xf32>
    %83 = arith.addf %81, %82 : vector<4x32xf32>
    %84 = vector.extract_strided_slice %0 {offsets = [0, 16], sizes = [4, 4], strides = [1, 1]} : vector<8x80xf32> to vector<4x4xf32>
    %85 = vector.extract_strided_slice %1 {offsets = [0, 2], sizes = [4, 1], strides = [1, 1]} : vector<8x10xf32> to vector<4x1xf32>
    %cst_33 = arith.constant dense<0.000000e+00> : vector<4x32xf32>
    %86 = tpu.matmul %84, %83, %cst_33 {dimension_numbers = #tpu.dot_dimension_numbers<[1], [0], [0], [1], [0, 0, 1, 1], [], []>} : vector<4x4xf32>, vector<4x32xf32>, vector<4x32xf32> -> vector<4x32xf32>
    %87 = vector.broadcast %85 : vector<4x1xf32> to vector<4x32xf32>
    %88 = arith.addf %86, %87 : vector<4x32xf32>
    %89 = vector.extract_strided_slice %88 {offsets = [0, 0], sizes = [4, 16], strides = [1, 1]} : vector<4x32xf32> to vector<4x16xf32>
    %cst_34 = arith.constant dense<0.000000e+00> : vector<4x256xf32>
    %90 = tpu.matmul %89, %26, %cst_34 {dimension_numbers = #tpu.dot_dimension_numbers<[1], [0], [0], [1], [0, 0, 1, 1], [], []>} : vector<4x16xf32>, vector<16x256xf32>, vector<4x256xf32> -> vector<4x256xf32>
    %91 = vector.extract_strided_slice %88 {offsets = [0, 16], sizes = [4, 16], strides = [1, 1]} : vector<4x32xf32> to vector<4x16xf32>
    %cst_35 = arith.constant dense<0.000000e+00> : vector<4x256xf32>
    %92 = tpu.matmul %91, %26, %cst_35 {dimension_numbers = #tpu.dot_dimension_numbers<[1], [0], [0], [1], [0, 0, 1, 1], [], []>} : vector<4x16xf32>, vector<16x256xf32>, vector<4x256xf32> -> vector<4x256xf32>
    %93 = tpu.concatenate %90, %92 in 1 : vector<4x256xf32>, vector<4x256xf32> -> vector<4x512xf32>
    %94 = arith.addf %65, %93 : vector<4x512xf32>
    %95 = vector.extract_strided_slice %0 {offsets = [0, 48], sizes = [4, 4], strides = [1, 1]} : vector<8x80xf32> to vector<4x4xf32>
    %96 = vector.extract_strided_slice %1 {offsets = [0, 6], sizes = [4, 1], strides = [1, 1]} : vector<8x10xf32> to vector<4x1xf32>
    %cst_36 = arith.constant dense<0.000000e+00> : vector<4x512xf32>
    %97 = tpu.matmul %95, %94, %cst_36 {dimension_numbers = #tpu.dot_dimension_numbers<[1], [0], [0], [1], [0, 0, 1, 1], [], []>} : vector<4x4xf32>, vector<4x512xf32>, vector<4x512xf32> -> vector<4x512xf32>
    %98 = vector.broadcast %96 : vector<4x1xf32> to vector<4x512xf32>
    %99 = arith.addf %97, %98 : vector<4x512xf32>
    %c0_37 = arith.constant 0 : index
    %c0_38 = arith.constant 0 : index
    %100 = vector.load %arg10[%c0_37, %c0_38] : memref<256x16xf32, #tpu.memory_space<vmem>>, vector<256x16xf32>
    %101 = vector.extract_strided_slice %99 {offsets = [0, 0], sizes = [4, 256], strides = [1, 1]} : vector<4x512xf32> to vector<4x256xf32>
    %cst_39 = arith.constant dense<0.000000e+00> : vector<4x16xf32>
    %102 = tpu.matmul %101, %100, %cst_39 {dimension_numbers = #tpu.dot_dimension_numbers<[1], [0], [0], [1], [0, 0, 1, 1], [], []>} : vector<4x256xf32>, vector<256x16xf32>, vector<4x16xf32> -> vector<4x16xf32>
    %103 = vector.extract_strided_slice %99 {offsets = [0, 256], sizes = [4, 256], strides = [1, 1]} : vector<4x512xf32> to vector<4x256xf32>
    %cst_40 = arith.constant dense<0.000000e+00> : vector<4x16xf32>
    %104 = tpu.matmul %103, %100, %cst_40 {dimension_numbers = #tpu.dot_dimension_numbers<[1], [0], [0], [1], [0, 0, 1, 1], [], []>} : vector<4x256xf32>, vector<256x16xf32>, vector<4x16xf32> -> vector<4x16xf32>
    %105 = tpu.concatenate %102, %104 in 1 : vector<4x16xf32>, vector<4x16xf32> -> vector<4x32xf32>
    %106 = arith.addf %83, %105 : vector<4x32xf32>
    %107 = vector.extract_strided_slice %0 {offsets = [0, 56], sizes = [8, 8], strides = [1, 1]} : vector<8x80xf32> to vector<8x8xf32>
    %108 = vector.extract_strided_slice %1 {offsets = [0, 7], sizes = [8, 1], strides = [1, 1]} : vector<8x10xf32> to vector<8x1xf32>
    %cst_41 = arith.constant dense<0.000000e+00> : vector<8x32xf32>
    %109 = tpu.matmul %107, %5, %cst_41 {dimension_numbers = #tpu.dot_dimension_numbers<[1], [0], [0], [1], [0, 0, 1, 1], [], []>} : vector<8x8xf32>, vector<8x32xf32>, vector<8x32xf32> -> vector<8x32xf32>
    %110 = vector.broadcast %108 : vector<8x1xf32> to vector<8x32xf32>
    %111 = arith.addf %109, %110 : vector<8x32xf32>
    %112 = vector.extract_strided_slice %0 {offsets = [0, 56], sizes = [8, 8], strides = [1, 1]} : vector<8x80xf32> to vector<8x8xf32>
    %113 = vector.extract_strided_slice %1 {offsets = [0, 7], sizes = [8, 1], strides = [1, 1]} : vector<8x10xf32> to vector<8x1xf32>
    %cst_42 = arith.constant dense<0.000000e+00> : vector<8x32xf32>
    %114 = tpu.matmul %112, %111, %cst_42 {dimension_numbers = #tpu.dot_dimension_numbers<[1], [0], [0], [1], [0, 0, 1, 1], [], []>} : vector<8x8xf32>, vector<8x32xf32>, vector<8x32xf32> -> vector<8x32xf32>
    %115 = vector.broadcast %113 : vector<8x1xf32> to vector<8x32xf32>
    %116 = arith.addf %114, %115 : vector<8x32xf32>
    %117 = vector.extract_strided_slice %0 {offsets = [0, 8], sizes = [4, 4], strides = [1, 1]} : vector<8x80xf32> to vector<4x4xf32>
    %118 = vector.extract_strided_slice %1 {offsets = [0, 1], sizes = [4, 1], strides = [1, 1]} : vector<8x10xf32> to vector<4x1xf32>
    %cst_43 = arith.constant dense<0.000000e+00> : vector<4x32xf32>
    %119 = tpu.matmul %117, %106, %cst_43 {dimension_numbers = #tpu.dot_dimension_numbers<[1], [0], [0], [1], [0, 0, 1, 1], [], []>} : vector<4x4xf32>, vector<4x32xf32>, vector<4x32xf32> -> vector<4x32xf32>
    %120 = vector.broadcast %118 : vector<4x1xf32> to vector<4x32xf32>
    %121 = arith.addf %119, %120 : vector<4x32xf32>
    %122 = vector.extract_strided_slice %0 {offsets = [0, 16], sizes = [4, 4], strides = [1, 1]} : vector<8x80xf32> to vector<4x4xf32>
    %123 = vector.extract_strided_slice %1 {offsets = [0, 2], sizes = [4, 1], strides = [1, 1]} : vector<8x10xf32> to vector<4x1xf32>
    %cst_44 = arith.constant dense<0.000000e+00> : vector<4x32xf32>
    %124 = tpu.matmul %122, %121, %cst_44 {dimension_numbers = #tpu.dot_dimension_numbers<[1], [0], [0], [1], [0, 0, 1, 1], [], []>} : vector<4x4xf32>, vector<4x32xf32>, vector<4x32xf32> -> vector<4x32xf32>
    %125 = vector.broadcast %123 : vector<4x1xf32> to vector<4x32xf32>
    %126 = arith.addf %124, %125 : vector<4x32xf32>
    %127 = vector.extract_strided_slice %126 {offsets = [0, 0], sizes = [4, 16], strides = [1, 1]} : vector<4x32xf32> to vector<4x16xf32>
    %cst_45 = arith.constant dense<0.000000e+00> : vector<4x256xf32>
    %128 = tpu.matmul %127, %26, %cst_45 {dimension_numbers = #tpu.dot_dimension_numbers<[1], [0], [0], [1], [0, 0, 1, 1], [], []>} : vector<4x16xf32>, vector<16x256xf32>, vector<4x256xf32> -> vector<4x256xf32>
    %129 = vector.extract_strided_slice %126 {offsets = [0, 16], sizes = [4, 16], strides = [1, 1]} : vector<4x32xf32> to vector<4x16xf32>
    %cst_46 = arith.constant dense<0.000000e+00> : vector<4x256xf32>
    %130 = tpu.matmul %129, %26, %cst_46 {dimension_numbers = #tpu.dot_dimension_numbers<[1], [0], [0], [1], [0, 0, 1, 1], [], []>} : vector<4x16xf32>, vector<16x256xf32>, vector<4x256xf32> -> vector<4x256xf32>
    %131 = tpu.concatenate %128, %130 in 1 : vector<4x256xf32>, vector<4x256xf32> -> vector<4x512xf32>
    %132 = arith.addf %65, %131 : vector<4x512xf32>
    %133 = vector.extract_strided_slice %0 {offsets = [0, 48], sizes = [4, 4], strides = [1, 1]} : vector<8x80xf32> to vector<4x4xf32>
    %134 = vector.extract_strided_slice %1 {offsets = [0, 6], sizes = [4, 1], strides = [1, 1]} : vector<8x10xf32> to vector<4x1xf32>
    %cst_47 = arith.constant dense<0.000000e+00> : vector<4x512xf32>
    %135 = tpu.matmul %133, %132, %cst_47 {dimension_numbers = #tpu.dot_dimension_numbers<[1], [0], [0], [1], [0, 0, 1, 1], [], []>} : vector<4x4xf32>, vector<4x512xf32>, vector<4x512xf32> -> vector<4x512xf32>
    %136 = vector.broadcast %134 : vector<4x1xf32> to vector<4x512xf32>
    %137 = arith.addf %135, %136 : vector<4x512xf32>
    %138 = vector.extract_strided_slice %137 {offsets = [0, 0], sizes = [4, 256], strides = [1, 1]} : vector<4x512xf32> to vector<4x256xf32>
    %cst_48 = arith.constant dense<0.000000e+00> : vector<4x16xf32>
    %139 = tpu.matmul %138, %100, %cst_48 {dimension_numbers = #tpu.dot_dimension_numbers<[1], [0], [0], [1], [0, 0, 1, 1], [], []>} : vector<4x256xf32>, vector<256x16xf32>, vector<4x16xf32> -> vector<4x16xf32>
    %140 = vector.extract_strided_slice %137 {offsets = [0, 256], sizes = [4, 256], strides = [1, 1]} : vector<4x512xf32> to vector<4x256xf32>
    %cst_49 = arith.constant dense<0.000000e+00> : vector<4x16xf32>
    %141 = tpu.matmul %140, %100, %cst_49 {dimension_numbers = #tpu.dot_dimension_numbers<[1], [0], [0], [1], [0, 0, 1, 1], [], []>} : vector<4x256xf32>, vector<256x16xf32>, vector<4x16xf32> -> vector<4x16xf32>
    %142 = tpu.concatenate %139, %141 in 1 : vector<4x16xf32>, vector<4x16xf32> -> vector<4x32xf32>
    %143 = arith.addf %121, %142 : vector<4x32xf32>
    %144 = vector.extract_strided_slice %0 {offsets = [0, 64], sizes = [8, 4], strides = [1, 1]} : vector<8x80xf32> to vector<8x4xf32>
    %145 = vector.extract_strided_slice %1 {offsets = [0, 8], sizes = [8, 1], strides = [1, 1]} : vector<8x10xf32> to vector<8x1xf32>
    %cst_50 = arith.constant dense<0.000000e+00> : vector<8x32xf32>
    %146 = tpu.matmul %144, %143, %cst_50 {dimension_numbers = #tpu.dot_dimension_numbers<[1], [0], [0], [1], [0, 0, 1, 1], [], []>} : vector<8x4xf32>, vector<4x32xf32>, vector<8x32xf32> -> vector<8x32xf32>
    %147 = vector.broadcast %145 : vector<8x1xf32> to vector<8x32xf32>
    %148 = arith.addf %146, %147 : vector<8x32xf32>
    %149 = arith.addf %116, %148 : vector<8x32xf32>
    %150 = vector.extract_strided_slice %0 {offsets = [0, 56], sizes = [8, 8], strides = [1, 1]} : vector<8x80xf32> to vector<8x8xf32>
    %151 = vector.extract_strided_slice %1 {offsets = [0, 7], sizes = [8, 1], strides = [1, 1]} : vector<8x10xf32> to vector<8x1xf32>
    %cst_51 = arith.constant dense<0.000000e+00> : vector<8x32xf32>
    %152 = tpu.matmul %150, %149, %cst_51 {dimension_numbers = #tpu.dot_dimension_numbers<[1], [0], [0], [1], [0, 0, 1, 1], [], []>} : vector<8x8xf32>, vector<8x32xf32>, vector<8x32xf32> -> vector<8x32xf32>
    %153 = vector.broadcast %151 : vector<8x1xf32> to vector<8x32xf32>
    %154 = arith.addf %152, %153 : vector<8x32xf32>
    %155 = arith.addf %154, %148 : vector<8x32xf32>
    %156 = vector.extract_strided_slice %0 {offsets = [0, 72], sizes = [8, 4], strides = [1, 1]} : vector<8x80xf32> to vector<8x4xf32>
    %157 = vector.extract_strided_slice %1 {offsets = [0, 9], sizes = [8, 1], strides = [1, 1]} : vector<8x10xf32> to vector<8x1xf32>
    %cst_52 = arith.constant dense<0.000000e+00> : vector<8x512xf32>
    %158 = tpu.matmul %156, %132, %cst_52 {dimension_numbers = #tpu.dot_dimension_numbers<[1], [0], [0], [1], [0, 0, 1, 1], [], []>} : vector<8x4xf32>, vector<4x512xf32>, vector<8x512xf32> -> vector<8x512xf32>
    %159 = vector.broadcast %157 : vector<8x1xf32> to vector<8x512xf32>
    %160 = arith.addf %158, %159 : vector<8x512xf32>
    %161 = vector.extract_strided_slice %160 {offsets = [0, 0], sizes = [8, 256], strides = [1, 1]} : vector<8x512xf32> to vector<8x256xf32>
    %cst_53 = arith.constant dense<0.000000e+00> : vector<8x16xf32>
    %162 = tpu.matmul %161, %100, %cst_53 {dimension_numbers = #tpu.dot_dimension_numbers<[1], [0], [0], [1], [0, 0, 1, 1], [], []>} : vector<8x256xf32>, vector<256x16xf32>, vector<8x16xf32> -> vector<8x16xf32>
    %163 = vector.extract_strided_slice %160 {offsets = [0, 256], sizes = [8, 256], strides = [1, 1]} : vector<8x512xf32> to vector<8x256xf32>
    %cst_54 = arith.constant dense<0.000000e+00> : vector<8x16xf32>
    %164 = tpu.matmul %163, %100, %cst_54 {dimension_numbers = #tpu.dot_dimension_numbers<[1], [0], [0], [1], [0, 0, 1, 1], [], []>} : vector<8x256xf32>, vector<256x16xf32>, vector<8x16xf32> -> vector<8x16xf32>
    %165 = tpu.concatenate %162, %164 in 1 : vector<8x16xf32>, vector<8x16xf32> -> vector<8x32xf32>
    %166 = arith.addf %155, %165 : vector<8x32xf32>
    %c0_55 = arith.constant 0 : index
    %c0_56 = arith.constant 0 : index
    %167 = vector.load %arg11[%c0_55, %c0_56] : memref<4x512xf32, #tpu.memory_space<vmem>>, vector<4x512xf32>
    tpu.vector_store %arg11[%c0_55, %c0_56], %32 {strides = array<i32>} : memref<4x512xf32, #tpu.memory_space<vmem>>, vector<4x512xf32>,
    %c0_57 = arith.constant 0 : index
    %c0_58 = arith.constant 0 : index
    %168 = vector.load %arg12[%c0_57, %c0_58] : memref<8x128xf32, #tpu.memory_space<vmem>>, vector<8x128xf32>
    tpu.vector_store %arg12[%c0_57, %c0_58], %78 {strides = array<i32>} : memref<8x128xf32, #tpu.memory_space<vmem>>, vector<8x128xf32>,
    %cst_59 = arith.constant 0.000000e+00 : f32
    %169 = vector.broadcast %cst_59 : f32 to vector<4x96xf32>
    %170 = tpu.concatenate %106, %169 in 1 : vector<4x32xf32>, vector<4x96xf32> -> vector<4x128xf32>
    %c0_60 = arith.constant 0 : index
    %c0_61 = arith.constant 0 : index
    %171 = vector.load %arg13[%c0_60, %c0_61] : memref<4x128xf32, #tpu.memory_space<vmem>>, vector<4x128xf32>
    tpu.vector_store %arg13[%c0_60, %c0_61], %170 {strides = array<i32>} : memref<4x128xf32, #tpu.memory_space<vmem>>, vector<4x128xf32>,
    %cst_62 = arith.constant 0.000000e+00 : f32
    %172 = vector.broadcast %cst_62 : f32 to vector<8x96xf32>
    %173 = tpu.concatenate %166, %172 in 1 : vector<8x32xf32>, vector<8x96xf32> -> vector<8x128xf32>
    %c0_63 = arith.constant 0 : index
    %c0_64 = arith.constant 0 : index
    %174 = vector.load %arg14[%c0_63, %c0_64] : memref<8x128xf32, #tpu.memory_space<vmem>>, vector<8x128xf32>
    tpu.vector_store %arg14[%c0_63, %c0_64], %173 {strides = array<i32>} : memref<8x128xf32, #tpu.memory_space<vmem>>, vector<8x128xf32>,
    return
  }
  func.func @transform_0(%arg0: i32) -> (i32, i32) {
    %c0_i32 = arith.constant 0 : i32
    %c0_i32_0 = arith.constant 0 : i32
    %c0_i32_1 = arith.constant 0 : i32
    return %c0_i32, %c0_i32_0 : i32, i32
  }
  func.func @transform_1(%arg0: i32) -> (i32, i32) {
    %c0_i32 = arith.constant 0 : i32
    %c0_i32_0 = arith.constant 0 : i32
    %c0_i32_1 = arith.constant 0 : i32
    return %c0_i32, %c0_i32_0 : i32, i32
  }
  func.func @transform_2(%arg0: i32) -> (i32, i32) {
    %c0_i32 = arith.constant 0 : i32
    %c0_i32_0 = arith.constant 0 : i32
    %c0_i32_1 = arith.constant 0 : i32
    return %c0_i32, %c0_i32_0 : i32, i32
  }
  func.func @transform_3(%arg0: i32) -> (i32, i32) {
    %c0_i32 = arith.constant 0 : i32
    %c0_i32_0 = arith.constant 0 : i32
    %c0_i32_1 = arith.constant 0 : i32
    return %c0_i32, %c0_i32_0 : i32, i32
  }
  func.func @transform_4(%arg0: i32) -> (i32, i32) {
    %c0_i32 = arith.constant 0 : i32
    %c0_i32_0 = arith.constant 0 : i32
    %c0_i32_1 = arith.constant 0 : i32
    return %c0_i32, %c0_i32_0 : i32, i32
  }
  func.func @transform_5(%arg0: i32) -> (i32, i32) {
    %c0_i32 = arith.constant 0 : i32
    %c0_i32_0 = arith.constant 0 : i32
    %c0_i32_1 = arith.constant 0 : i32
    return %c0_i32, %c0_i32_0 : i32, i32
  }
  func.func @transform_6(%arg0: i32) -> (i32, i32) {
    %c0_i32 = arith.constant 0 : i32
    %c0_i32_0 = arith.constant 0 : i32
    %c0_i32_1 = arith.constant 0 : i32
    return %c0_i32, %c0_i32_0 : i32, i32
  }
  func.func @transform_7(%arg0: i32) -> (i32, i32) {
    %c0_i32 = arith.constant 0 : i32
    %c0_i32_0 = arith.constant 0 : i32
    %c0_i32_1 = arith.constant 0 : i32
    return %c0_i32, %c0_i32_0 : i32, i32
  }
  func.func @transform_8(%arg0: i32) -> (i32, i32) {
    %c0_i32 = arith.constant 0 : i32
    %c0_i32_0 = arith.constant 0 : i32
    %c0_i32_1 = arith.constant 0 : i32
    return %c0_i32, %c0_i32_0 : i32, i32
  }
  func.func @transform_9(%arg0: i32) -> (i32, i32) {
    %c0_i32 = arith.constant 0 : i32
    %c0_i32_0 = arith.constant 0 : i32
    %c0_i32_1 = arith.constant 0 : i32
    return %c0_i32, %c0_i32_0 : i32, i32
  }
  func.func @transform_10(%arg0: i32) -> (i32, i32) {
    %c0_i32 = arith.constant 0 : i32
    %c0_i32_0 = arith.constant 0 : i32
    %c0_i32_1 = arith.constant 0 : i32
    return %c0_i32, %c0_i32_0 : i32, i32
  }
  func.func @transform_11(%arg0: i32) -> (i32, i32) {
    %c0_i32 = arith.constant 0 : i32
    %c0_i32_0 = arith.constant 0 : i32
    %c0_i32_1 = arith.constant 0 : i32
    return %c0_i32, %c0_i32_0 : i32, i32
  }
  func.func @transform_12(%arg0: i32) -> (i32, i32) {
    %c0_i32 = arith.constant 0 : i32
    %c0_i32_0 = arith.constant 0 : i32
    %c0_i32_1 = arith.constant 0 : i32
    return %c0_i32, %c0_i32_0 : i32, i32
  }
  func.func @transform_13(%arg0: i32) -> (i32, i32) {
    %c0_i32 = arith.constant 0 : i32
    %c0_i32_0 = arith.constant 0 : i32
    %c0_i32_1 = arith.constant 0 : i32
    return %c0_i32, %c0_i32_0 : i32, i32
  }
}

</mosaic_0001>

<llo_original>
// kernel: forward.1
$region0: #{forward.1}
  #allocation0 [shape = 'u32[]', space=smem, size = 0x4, offset = 0x4, fixed_abs, tag = 'smem constant byte address 0x4 - core index']
  #allocation1 [shape = 'u32[144,128]{1,0:T(1,128)}', space=vmem, size = 0x12000, scoped, tag = 'internal scratch']
  %s0 = inlined_call_operand.vmem [shape: f32[4,512], index: 0, kind: input, shape index: {}]
  %s1 = inlined_call_operand.vmem [shape: f32[8,128], index: 1, kind: input, shape index: {}]
  %s2 = inlined_call_operand.vmem [shape: f32[4,32], index: 2, kind: input, shape index: {}]
  %s3 = inlined_call_operand.vmem [shape: f32[8,32], index: 3, kind: input, shape index: {}]
  %s4 = inlined_call_operand.vmem [shape: f32[8,80], index: 4, kind: input, shape index: {}]
  %s5 = inlined_call_operand.vmem [shape: f32[8,10], index: 5, kind: input, shape index: {}]
  %s6 = inlined_call_operand.vmem [shape: f32[16,256], index: 6, kind: input, shape index: {}]
  %s7 = inlined_call_operand.vmem [shape: f32[16,64], index: 7, kind: input, shape index: {}]
  %s8 = inlined_call_operand.vmem [shape: f32[256,64], index: 8, kind: input, shape index: {}]
  %s9 = inlined_call_operand.vmem [shape: f32[256,16], index: 9, kind: input, shape index: {}]
  %s10 = inlined_call_operand.vmem [shape: f32[4,512], index: 10, kind: output, shape index: {0}]
  %s11 = inlined_call_operand.vmem [shape: f32[8,128], index: 11, kind: output, shape index: {1}]
  %s12 = inlined_call_operand.vmem [shape: f32[4,128], index: 12, kind: output, shape index: {2}]
  %s13 = inlined_call_operand.vmem [shape: f32[8,128], index: 13, kind: output, shape index: {3}]
  %14 = xla_tuple %s10, %s11, %s12, %s13
  %s15 = sld [smem:[#allocation0]]
  $region74: #{forward.1} parent=0
    _
  %s17 = ssub.s32 1, %s15
  %s18 = scalar_select 0, %s17, %s15
  // Predicated region
  $region2: #{forward.1} parent=0 // pred_check
    _
  $region3: #{forward.1} parent=0 // pred_check_branch
    %20 = sbr.rel (0) target = $region5
  $region4: #{forward.1} parent=0 // pred_region
    _
  $region5: #{forward.1} parent=0 // pred_fallthru
    _
  // Predicated region
  $region6: #{forward.1} parent=0 // pred_check
    _
  $region7: #{forward.1} parent=0 // pred_check_branch
    %22 = sbr.rel (0) target = $region9
  $region8: #{forward.1} parent=0 // pred_region
    _
  $region9: #{forward.1} parent=0 // pred_fallthru
    _
  // Predicated region
  $region10: #{forward.1} parent=0 // pred_check
    _
  $region11: #{forward.1} parent=0 // pred_check_branch
    %24 = sbr.rel (0) target = $region13
  $region12: #{forward.1} parent=0 // pred_region
    _
  $region13: #{forward.1} parent=0 // pred_fallthru
    _
  // Predicated region
  $region14: #{forward.1} parent=0 // pred_check
    _
  $region15: #{forward.1} parent=0 // pred_check_branch
    %26 = sbr.rel (0) target = $region17
  $region16: #{forward.1} parent=0 // pred_region
    _
  $region17: #{forward.1} parent=0 // pred_fallthru
    _
  // Predicated region
  $region18: #{forward.1} parent=0 // pred_check
    _
  $region19: #{forward.1} parent=0 // pred_check_branch
    %28 = sbr.rel (0) target = $region21
  $region20: #{forward.1} parent=0 // pred_region
    _
  $region21: #{forward.1} parent=0 // pred_fallthru
    _
  // Predicated region
  $region22: #{forward.1} parent=0 // pred_check
    _
  $region23: #{forward.1} parent=0 // pred_check_branch
    %30 = sbr.rel (0) target = $region25
  $region24: #{forward.1} parent=0 // pred_region
    _
  $region25: #{forward.1} parent=0 // pred_fallthru
    _
  // Predicated region
  $region26: #{forward.1} parent=0 // pred_check
    _
  $region27: #{forward.1} parent=0 // pred_check_branch
    %32 = sbr.rel (0) target = $region29
  $region28: #{forward.1} parent=0 // pred_region
    _
  $region29: #{forward.1} parent=0 // pred_fallthru
    _
  // Predicated region
  $region30: #{forward.1} parent=0 // pred_check
    _
  $region31: #{forward.1} parent=0 // pred_check_branch
    %34 = sbr.rel (0) target = $region33
  $region32: #{forward.1} parent=0 // pred_region
    _
  $region33: #{forward.1} parent=0 // pred_fallthru
    _
  // Predicated region
  $region34: #{forward.1} parent=0 // pred_check
    _
  $region35: #{forward.1} parent=0 // pred_check_branch
    %36 = sbr.rel (0) target = $region37
  $region36: #{forward.1} parent=0 // pred_region
    _
  $region37: #{forward.1} parent=0 // pred_fallthru
    _
  // Predicated region
  $region38: #{forward.1} parent=0 // pred_check
    _
  $region39: #{forward.1} parent=0 // pred_check_branch
    %38 = sbr.rel (0) target = $region41
  $region40: #{forward.1} parent=0 // pred_region
    _
  $region41: #{forward.1} parent=0 // pred_fallthru
    _
  %v39 = vld [vmem:[%s4] sm:$0xff]
  %v40 = vld [vmem:[%s5] sm:$0xff]
  %v41 = vld [vmem:[%s0] sm:$0xff]
  %v42 = vld [vmem:[%s0 + $0x8] sm:$0xff]
  %v43 = vld [vmem:[%s1] sm:$0xff]
  %v44 = vld [vmem:[%s2] sm:$0xf]
  %v45 = vld [vmem:[%s3] sm:$0xff]
  %47 = vset.pattern.permute.xlu0 0
  %48 = vperm.xlu0 %47, %v40
  %v49 = vpop.permute.xlu0 %48
  %v53 = vcombine.high %v41, %v41
  %v54 = vcombine.high %v42, %v42
  %vm55 = vcmask 31744
  %v57 = vsel %vm55, %v39, 0
  %vm59 = vcmask 1043456
  %v60 = vsel %vm59, %v41, 0
  %v62 = vsel %vm59, %v53, 0
  %v64 = vsel %vm59, %v42, 0
  %v66 = vsel %vm59, %v54, 0
  %68 = vmatprep.subr.mxu0 %v62
  %69 = vmatpush1.msra.mxu0 %v60
  %70 = vmatprep.subr.mxu0 0.0
  %71 = vmatpush1.msra.mxu0 0.0
  %72 = vmatprep.subr.mxu0 0.0
  %73 = vmatpush1.msra.mxu0 0.0
  %74 = vmatprep.subr.mxu0 0.0
  %75 = vmatpush1.msra.mxu0 0.0
  %76 = vmatprep.subr.mxu0 0.0
  %77 = vmatpush1.msra.mxu0 0.0
  %78 = vmatprep.subr.mxu0 0.0
  %79 = vmatpush1.msra.mxu0 0.0
  %80 = vmatprep.subr.mxu0 0.0
  %81 = vmatpush1.msra.mxu0 0.0
  %82 = vmatprep.subr.mxu0 0.0
  %83 = vmatpush1.msra.mxu0 0.0
  %84 = vmatprep.subr.mxu0 0.0
  %85 = vmatpush1.msra.mxu0 0.0
  %86 = vmatprep.subr.mxu0 0.0
  %87 = vmatpush1.msra.mxu0 0.0
  %88 = vmatprep.subr.mxu0 0.0
  %89 = vmatpush1.msra.mxu0 0.0
  %90 = vmatprep.subr.mxu0 0.0
  %91 = vmatpush1.msra.mxu0 0.0
  %92 = vmatprep.subr.mxu0 0.0
  %93 = vmatpush1.msra.mxu0 0.0
  %94 = vmatprep.subr.mxu0 0.0
  %95 = vmatpush1.msra.mxu0 0.0
  %96 = vmatprep.subr.mxu0 0.0
  %97 = vmatpush1.msra.mxu0 0.0
  %98 = vmatprep.subr.mxu0 0.0
  %99 = vmatpush1.msra.mxu0 0.0
  %100 = vmatprep.subr.mxu0 0.0
  %101 = vmatpush1.msra.mxu0 0.0
  %102 = vmatprep.subr.mxu0 0.0
  %103 = vmatpush1.msra.mxu0 0.0
  %104 = vmatprep.subr.mxu0 0.0
  %105 = vmatpush1.msra.mxu0 0.0
  %106 = vmatprep.subr.mxu0 0.0
  %107 = vmatpush1.msra.mxu0 0.0
  %108 = vmatprep.subr.mxu0 0.0
  %109 = vmatpush1.msra.mxu0 0.0
  %110 = vmatprep.subr.mxu0 0.0
  %111 = vmatpush1.msra.mxu0 0.0
  %112 = vmatprep.subr.mxu0 0.0
  %113 = vmatpush1.msra.mxu0 0.0
  %114 = vmatprep.subr.mxu0 0.0
  %115 = vmatpush1.msra.mxu0 0.0
  %116 = vmatprep.subr.mxu0 0.0
  %117 = vmatpush1.msra.mxu0 0.0
  %118 = vmatprep.subr.mxu0 0.0
  %119 = vmatpush1.msra.mxu0 0.0
  %120 = vmatprep.subr.mxu0 0.0
  %121 = vmatpush1.msra.mxu0 0.0
  %122 = vmatprep.subr.mxu0 0.0
  %123 = vmatpush1.msra.mxu0 0.0
  %124 = vmatprep.subr.mxu0 0.0
  %125 = vmatpush1.msra.mxu0 0.0
  %126 = vmatprep.subr.mxu0 0.0
  %127 = vmatpush1.msra.mxu0 0.0
  %128 = vmatprep.subr.mxu0 0.0
  %129 = vmatpush1.msra.mxu0 0.0
  %130 = vmatprep.subr.mxu0 0.0
  %131 = vmatpush1.msra.mxu0 0.0
  %132 = vmatprep.mubr.f32.mxu0 0.0
  %133 = vmatmul.mubr.f32.gmra.mrb[0].mxu0 %v57
  %v134 = vpop.f32.mrb[0].mxu0
  %v135 = vadd.f32 %v49, %v134
  %v136 = vpop.f32.mrb[0].mxu0
  %v137 = vadd.f32 %v49, %v136
  %138 = vdwg.mxu0
  %139 = vmatprep.subr.mxu0 %v66
  %140 = vmatpush1.msra.mxu0 %v64
  %141 = vmatprep.subr.mxu0 0.0
  %142 = vmatpush1.msra.mxu0 0.0
  %143 = vmatprep.subr.mxu0 0.0
  %144 = vmatpush1.msra.mxu0 0.0
  %145 = vmatprep.subr.mxu0 0.0
  %146 = vmatpush1.msra.mxu0 0.0
  %147 = vmatprep.subr.mxu0 0.0
  %148 = vmatpush1.msra.mxu0 0.0
  %149 = vmatprep.subr.mxu0 0.0
  %150 = vmatpush1.msra.mxu0 0.0
  %151 = vmatprep.subr.mxu0 0.0
  %152 = vmatpush1.msra.mxu0 0.0
  %153 = vmatprep.subr.mxu0 0.0
  %154 = vmatpush1.msra.mxu0 0.0
  %155 = vmatprep.subr.mxu0 0.0
  %156 = vmatpush1.msra.mxu0 0.0
  %157 = vmatprep.subr.mxu0 0.0
  %158 = vmatpush1.msra.mxu0 0.0
  %159 = vmatprep.subr.mxu0 0.0
  %160 = vmatpush1.msra.mxu0 0.0
  %161 = vmatprep.subr.mxu0 0.0
  %162 = vmatpush1.msra.mxu0 0.0
  %163 = vmatprep.subr.mxu0 0.0
  %164 = vmatpush1.msra.mxu0 0.0
  %165 = vmatprep.subr.mxu0 0.0
  %166 = vmatpush1.msra.mxu0 0.0
  %167 = vmatprep.subr.mxu0 0.0
  %168 = vmatpush1.msra.mxu0 0.0
  %169 = vmatprep.subr.mxu0 0.0
  %170 = vmatpush1.msra.mxu0 0.0
  %171 = vmatprep.subr.mxu0 0.0
  %172 = vmatpush1.msra.mxu0 0.0
  %173 = vmatprep.subr.mxu0 0.0
  %174 = vmatpush1.msra.mxu0 0.0
  %175 = vmatprep.subr.mxu0 0.0
  %176 = vmatpush1.msra.mxu0 0.0
  %177 = vmatprep.subr.mxu0 0.0
  %178 = vmatpush1.msra.mxu0 0.0
  %179 = vmatprep.subr.mxu0 0.0
  %180 = vmatpush1.msra.mxu0 0.0
  %181 = vmatprep.subr.mxu0 0.0
  %182 = vmatpush1.msra.mxu0 0.0
  %183 = vmatprep.subr.mxu0 0.0
  %184 = vmatpush1.msra.mxu0 0.0
  %185 = vmatprep.subr.mxu0 0.0
  %186 = vmatpush1.msra.mxu0 0.0
  %187 = vmatprep.subr.mxu0 0.0
  %188 = vmatpush1.msra.mxu0 0.0
  %189 = vmatprep.subr.mxu0 0.0
  %190 = vmatpush1.msra.mxu0 0.0
  %191 = vmatprep.subr.mxu0 0.0
  %192 = vmatpush1.msra.mxu0 0.0
  %193 = vmatprep.subr.mxu0 0.0
  %194 = vmatpush1.msra.mxu0 0.0
  %195 = vmatprep.subr.mxu0 0.0
  %196 = vmatpush1.msra.mxu0 0.0
  %197 = vmatprep.subr.mxu0 0.0
  %198 = vmatpush1.msra.mxu0 0.0
  %199 = vmatprep.subr.mxu0 0.0
  %200 = vmatpush1.msra.mxu0 0.0
  %201 = vmatprep.subr.mxu0 0.0
  %202 = vmatpush1.msra.mxu0 0.0
  %203 = vmatprep.mubr.f32.mxu0 0.0
  %204 = vmatmul.mubr.f32.gmra.mrb[0].mxu0 %v57
  %v205 = vpop.f32.mrb[0].mxu0
  %v206 = vadd.f32 %v49, %v205
  %v207 = vpop.f32.mrb[0].mxu0
  %v208 = vadd.f32 %v49, %v207
  %209 = vdwg.mxu0
  %v211 = vsel %vm59, %v135, 0
  %v214 = vsel %vm59, %v137, 0
  %v217 = vsel %vm59, %v206, 0
  %v220 = vsel %vm59, %v208, 0
  %222 = vmatprep.subr.mxu0 %v214
  %223 = vmatpush1.msra.mxu0 %v211
  %224 = vmatprep.subr.mxu0 0.0
  %225 = vmatpush1.msra.mxu0 0.0
  %226 = vmatprep.subr.mxu0 0.0
  %227 = vmatpush1.msra.mxu0 0.0
  %228 = vmatprep.subr.mxu0 0.0
  %229 = vmatpush1.msra.mxu0 0.0
  %230 = vmatprep.subr.mxu0 0.0
  %231 = vmatpush1.msra.mxu0 0.0
  %232 = vmatprep.subr.mxu0 0.0
  %233 = vmatpush1.msra.mxu0 0.0
  %234 = vmatprep.subr.mxu0 0.0
  %235 = vmatpush1.msra.mxu0 0.0
  %236 = vmatprep.subr.mxu0 0.0
  %237 = vmatpush1.msra.mxu0 0.0
  %238 = vmatprep.subr.mxu0 0.0
  %239 = vmatpush1.msra.mxu0 0.0
  %240 = vmatprep.subr.mxu0 0.0
  %241 = vmatpush1.msra.mxu0 0.0
  %242 = vmatprep.subr.mxu0 0.0
  %243 = vmatpush1.msra.mxu0 0.0
  %244 = vmatprep.subr.mxu0 0.0
  %245 = vmatpush1.msra.mxu0 0.0
  %246 = vmatprep.subr.mxu0 0.0
  %247 = vmatpush1.msra.mxu0 0.0
  %248 = vmatprep.subr.mxu0 0.0
  %249 = vmatpush1.msra.mxu0 0.0
  %250 = vmatprep.subr.mxu0 0.0
  %251 = vmatpush1.msra.mxu0 0.0
  %252 = vmatprep.subr.mxu0 0.0
  %253 = vmatpush1.msra.mxu0 0.0
  %254 = vmatprep.subr.mxu0 0.0
  %255 = vmatpush1.msra.mxu0 0.0
  %256 = vmatprep.subr.mxu0 0.0
  %257 = vmatpush1.msra.mxu0 0.0
  %258 = vmatprep.subr.mxu0 0.0
  %259 = vmatpush1.msra.mxu0 0.0
  %260 = vmatprep.subr.mxu0 0.0
  %261 = vmatpush1.msra.mxu0 0.0
  %262 = vmatprep.subr.mxu0 0.0
  %263 = vmatpush1.msra.mxu0 0.0
  %264 = vmatprep.subr.mxu0 0.0
  %265 = vmatpush1.msra.mxu0 0.0
  %266 = vmatprep.subr.mxu0 0.0
  %267 = vmatpush1.msra.mxu0 0.0
  %268 = vmatprep.subr.mxu0 0.0
  %269 = vmatpush1.msra.mxu0 0.0
  %270 = vmatprep.subr.mxu0 0.0
  %271 = vmatpush1.msra.mxu0 0.0
  %272 = vmatprep.subr.mxu0 0.0
  %273 = vmatpush1.msra.mxu0 0.0
  %274 = vmatprep.subr.mxu0 0.0
  %275 = vmatpush1.msra.mxu0 0.0
  %276 = vmatprep.subr.mxu0 0.0
  %277 = vmatpush1.msra.mxu0 0.0
  %278 = vmatprep.subr.mxu0 0.0
  %279 = vmatpush1.msra.mxu0 0.0
  %280 = vmatprep.subr.mxu0 0.0
  %281 = vmatpush1.msra.mxu0 0.0
  %282 = vmatprep.subr.mxu0 0.0
  %283 = vmatpush1.msra.mxu0 0.0
  %284 = vmatprep.subr.mxu0 0.0
  %285 = vmatpush1.msra.mxu0 0.0
  %286 = vmatprep.mubr.f32.mxu0 0.0
  %287 = vmatmul.mubr.f32.gmra.mrb[0].mxu0 %v57
  %v288 = vpop.f32.mrb[0].mxu0
  %v289 = vadd.f32 %v49, %v288
  %v290 = vpop.f32.mrb[0].mxu0
  %v291 = vadd.f32 %v49, %v290
  %292 = vdwg.mxu0
  %293 = vmatprep.subr.mxu0 %v220
  %294 = vmatpush1.msra.mxu0 %v217
  %295 = vmatprep.subr.mxu0 0.0
  %296 = vmatpush1.msra.mxu0 0.0
  %297 = vmatprep.subr.mxu0 0.0
  %298 = vmatpush1.msra.mxu0 0.0
  %299 = vmatprep.subr.mxu0 0.0
  %300 = vmatpush1.msra.mxu0 0.0
  %301 = vmatprep.subr.mxu0 0.0
  %302 = vmatpush1.msra.mxu0 0.0
  %303 = vmatprep.subr.mxu0 0.0
  %304 = vmatpush1.msra.mxu0 0.0
  %305 = vmatprep.subr.mxu0 0.0
  %306 = vmatpush1.msra.mxu0 0.0
  %307 = vmatprep.subr.mxu0 0.0
  %308 = vmatpush1.msra.mxu0 0.0
  %309 = vmatprep.subr.mxu0 0.0
  %310 = vmatpush1.msra.mxu0 0.0
  %311 = vmatprep.subr.mxu0 0.0
  %312 = vmatpush1.msra.mxu0 0.0
  %313 = vmatprep.subr.mxu0 0.0
  %314 = vmatpush1.msra.mxu0 0.0
  %315 = vmatprep.subr.mxu0 0.0
  %316 = vmatpush1.msra.mxu0 0.0
  %317 = vmatprep.subr.mxu0 0.0
  %318 = vmatpush1.msra.mxu0 0.0
  %319 = vmatprep.subr.mxu0 0.0
  %320 = vmatpush1.msra.mxu0 0.0
  %321 = vmatprep.subr.mxu0 0.0
  %322 = vmatpush1.msra.mxu0 0.0
  %323 = vmatprep.subr.mxu0 0.0
  %324 = vmatpush1.msra.mxu0 0.0
  %325 = vmatprep.subr.mxu0 0.0
  %326 = vmatpush1.msra.mxu0 0.0
  %327 = vmatprep.subr.mxu0 0.0
  %328 = vmatpush1.msra.mxu0 0.0
  %329 = vmatprep.subr.mxu0 0.0
  %330 = vmatpush1.msra.mxu0 0.0
  %331 = vmatprep.subr.mxu0 0.0
  %332 = vmatpush1.msra.mxu0 0.0
  %333 = vmatprep.subr.mxu0 0.0
  %334 = vmatpush1.msra.mxu0 0.0
  %335 = vmatprep.subr.mxu0 0.0
  %336 = vmatpush1.msra.mxu0 0.0
  %337 = vmatprep.subr.mxu0 0.0
  %338 = vmatpush1.msra.mxu0 0.0
  %339 = vmatprep.subr.mxu0 0.0
  %340 = vmatpush1.msra.mxu0 0.0
  %341 = vmatprep.subr.mxu0 0.0
  %342 = vmatpush1.msra.mxu0 0.0
  %343 = vmatprep.subr.mxu0 0.0
  %344 = vmatpush1.msra.mxu0 0.0
  %345 = vmatprep.subr.mxu0 0.0
  %346 = vmatpush1.msra.mxu0 0.0
  %347 = vmatprep.subr.mxu0 0.0
  %348 = vmatpush1.msra.mxu0 0.0
  %349 = vmatprep.subr.mxu0 0.0
  %350 = vmatpush1.msra.mxu0 0.0
  %351 = vmatprep.subr.mxu0 0.0
  %352 = vmatpush1.msra.mxu0 0.0
  %353 = vmatprep.subr.mxu0 0.0
  %354 = vmatpush1.msra.mxu0 0.0
  %355 = vmatprep.subr.mxu0 0.0
  %356 = vmatpush1.msra.mxu0 0.0
  %357 = vmatprep.mubr.f32.mxu0 0.0
  %358 = vmatmul.mubr.f32.gmra.mrb[0].mxu0 %v57
  %v359 = vpop.f32.mrb[0].mxu0
  %v360 = vadd.f32 %v49, %v359
  %v361 = vpop.f32.mrb[0].mxu0
  %v362 = vadd.f32 %v49, %v361
  %363 = vdwg.mxu0
  %364 = vset.pattern.permute.xlu0 1
  %365 = vperm.xlu0 %364, %v40
  %v366 = vpop.permute.xlu0 %365
  %368 = vrot.lane.b32.xlu0 %v39, 120
  %v369 = vpop.permute.xlu0 %368
  %v370 = vsel %vm55, %v369, 0
  %v373 = vsel %vm59, %v44, 0
  %375 = vmatprep.subr.mxu0 0.0
  %376 = vmatpush1.msra.mxu0 %v373
  %377 = vmatprep.subr.mxu0 0.0
  %378 = vmatpush1.msra.mxu0 0.0
  %379 = vmatprep.subr.mxu0 0.0
  %380 = vmatpush1.msra.mxu0 0.0
  %381 = vmatprep.subr.mxu0 0.0
  %382 = vmatpush1.msra.mxu0 0.0
  %383 = vmatprep.subr.mxu0 0.0
  %384 = vmatpush1.msra.mxu0 0.0
  %385 = vmatprep.subr.mxu0 0.0
  %386 = vmatpush1.msra.mxu0 0.0
  %387 = vmatprep.subr.mxu0 0.0
  %388 = vmatpush1.msra.mxu0 0.0
  %389 = vmatprep.subr.mxu0 0.0
  %390 = vmatpush1.msra.mxu0 0.0
  %391 = vmatprep.subr.mxu0 0.0
  %392 = vmatpush1.msra.mxu0 0.0
  %393 = vmatprep.subr.mxu0 0.0
  %394 = vmatpush1.msra.mxu0 0.0
  %395 = vmatprep.subr.mxu0 0.0
  %396 = vmatpush1.msra.mxu0 0.0
  %397 = vmatprep.subr.mxu0 0.0
  %398 = vmatpush1.msra.mxu0 0.0
  %399 = vmatprep.subr.mxu0 0.0
  %400 = vmatpush1.msra.mxu0 0.0
  %401 = vmatprep.subr.mxu0 0.0
  %402 = vmatpush1.msra.mxu0 0.0
  %403 = vmatprep.subr.mxu0 0.0
  %404 = vmatpush1.msra.mxu0 0.0
  %405 = vmatprep.subr.mxu0 0.0
  %406 = vmatpush1.msra.mxu0 0.0
  %407 = vmatprep.subr.mxu0 0.0
  %408 = vmatpush1.msra.mxu0 0.0
  %409 = vmatprep.subr.mxu0 0.0
  %410 = vmatpush1.msra.mxu0 0.0
  %411 = vmatprep.subr.mxu0 0.0
  %412 = vmatpush1.msra.mxu0 0.0
  %413 = vmatprep.subr.mxu0 0.0
  %414 = vmatpush1.msra.mxu0 0.0
  %415 = vmatprep.subr.mxu0 0.0
  %416 = vmatpush1.msra.mxu0 0.0
  %417 = vmatprep.subr.mxu0 0.0
  %418 = vmatpush1.msra.mxu0 0.0
  %419 = vmatprep.subr.mxu0 0.0
  %420 = vmatpush1.msra.mxu0 0.0
  %421 = vmatprep.subr.mxu0 0.0
  %422 = vmatpush1.msra.mxu0 0.0
  %423 = vmatprep.subr.mxu0 0.0
  %424 = vmatpush1.msra.mxu0 0.0
  %425 = vmatprep.subr.mxu0 0.0
  %426 = vmatpush1.msra.mxu0 0.0
  %427 = vmatprep.subr.mxu0 0.0
  %428 = vmatpush1.msra.mxu0 0.0
  %429 = vmatprep.subr.mxu0 0.0
  %430 = vmatpush1.msra.mxu0 0.0
  %431 = vmatprep.subr.mxu0 0.0
  %432 = vmatpush1.msra.mxu0 0.0
  %433 = vmatprep.subr.mxu0 0.0
  %434 = vmatpush1.msra.mxu0 0.0
  %435 = vmatprep.subr.mxu0 0.0
  %436 = vmatpush1.msra.mxu0 0.0
  %437 = vmatprep.subr.mxu0 0.0
  %438 = vmatpush1.msra.mxu0 0.0
  %439 = vmatprep.mubr.f32.mxu0 0.0
  %440 = vmatmul.mubr.f32.gmra.mrb[0].mxu0 %v370
  %v441 = vpop.f32.mrb[0].mxu0
  %v442 = vadd.f32 %v366, %v441
  %v443 = vpop.f32.mrb[0].mxu0
  %444 = vdwg.mxu0
  %445 = vset.pattern.permute.xlu0 2
  %446 = vperm.xlu0 %445, %v40
  %v447 = vpop.permute.xlu0 %446
  %449 = vrot.lane.b32.xlu0 %v39, 112
  %v450 = vpop.permute.xlu0 %449
  %v451 = vsel %vm55, %v450, 0
  %v454 = vsel %vm59, %v442, 0
  %456 = vmatprep.subr.mxu0 0.0
  %457 = vmatpush1.msra.mxu0 %v454
  %458 = vmatprep.subr.mxu0 0.0
  %459 = vmatpush1.msra.mxu0 0.0
  %460 = vmatprep.subr.mxu0 0.0
  %461 = vmatpush1.msra.mxu0 0.0
  %462 = vmatprep.subr.mxu0 0.0
  %463 = vmatpush1.msra.mxu0 0.0
  %464 = vmatprep.subr.mxu0 0.0
  %465 = vmatpush1.msra.mxu0 0.0
  %466 = vmatprep.subr.mxu0 0.0
  %467 = vmatpush1.msra.mxu0 0.0
  %468 = vmatprep.subr.mxu0 0.0
  %469 = vmatpush1.msra.mxu0 0.0
  %470 = vmatprep.subr.mxu0 0.0
  %471 = vmatpush1.msra.mxu0 0.0
  %472 = vmatprep.subr.mxu0 0.0
  %473 = vmatpush1.msra.mxu0 0.0
  %474 = vmatprep.subr.mxu0 0.0
  %475 = vmatpush1.msra.mxu0 0.0
  %476 = vmatprep.subr.mxu0 0.0
  %477 = vmatpush1.msra.mxu0 0.0
  %478 = vmatprep.subr.mxu0 0.0
  %479 = vmatpush1.msra.mxu0 0.0
  %480 = vmatprep.subr.mxu0 0.0
  %481 = vmatpush1.msra.mxu0 0.0
  %482 = vmatprep.subr.mxu0 0.0
  %483 = vmatpush1.msra.mxu0 0.0
  %484 = vmatprep.subr.mxu0 0.0
  %485 = vmatpush1.msra.mxu0 0.0
  %486 = vmatprep.subr.mxu0 0.0
  %487 = vmatpush1.msra.mxu0 0.0
  %488 = vmatprep.subr.mxu0 0.0
  %489 = vmatpush1.msra.mxu0 0.0
  %490 = vmatprep.subr.mxu0 0.0
  %491 = vmatpush1.msra.mxu0 0.0
  %492 = vmatprep.subr.mxu0 0.0
  %493 = vmatpush1.msra.mxu0 0.0
  %494 = vmatprep.subr.mxu0 0.0
  %495 = vmatpush1.msra.mxu0 0.0
  %496 = vmatprep.subr.mxu0 0.0
  %497 = vmatpush1.msra.mxu0 0.0
  %498 = vmatprep.subr.mxu0 0.0
  %499 = vmatpush1.msra.mxu0 0.0
  %500 = vmatprep.subr.mxu0 0.0
  %501 = vmatpush1.msra.mxu0 0.0
  %502 = vmatprep.subr.mxu0 0.0
  %503 = vmatpush1.msra.mxu0 0.0
  %504 = vmatprep.subr.mxu0 0.0
  %505 = vmatpush1.msra.mxu0 0.0
  %506 = vmatprep.subr.mxu0 0.0
  %507 = vmatpush1.msra.mxu0 0.0
  %508 = vmatprep.subr.mxu0 0.0
  %509 = vmatpush1.msra.mxu0 0.0
  %510 = vmatprep.subr.mxu0 0.0
  %511 = vmatpush1.msra.mxu0 0.0
  %512 = vmatprep.subr.mxu0 0.0
  %513 = vmatpush1.msra.mxu0 0.0
  %514 = vmatprep.subr.mxu0 0.0
  %515 = vmatpush1.msra.mxu0 0.0
  %516 = vmatprep.subr.mxu0 0.0
  %517 = vmatpush1.msra.mxu0 0.0
  %518 = vmatprep.subr.mxu0 0.0
  %519 = vmatpush1.msra.mxu0 0.0
  %520 = vmatprep.mubr.f32.mxu0 0.0
  %521 = vmatmul.mubr.f32.gmra.mrb[0].mxu0 %v451
  %v522 = vpop.f32.mrb[0].mxu0
  %v523 = vadd.f32 %v447, %v522
  %v524 = vpop.f32.mrb[0].mxu0
  %525 = vdwg.mxu0
  %v526 = vld [vmem:[%s6] sm:$0xff]
  %v527 = vld [vmem:[%s6 + $0x8] sm:$0xff]
  %v528 = vld [vmem:[%s6 + $0x10] sm:$0xff]
  %v529 = vld [vmem:[%s6 + $0x18] sm:$0xff]
  %vm530 = vcmask 130048
  %v532 = vsel %vm530, %v523, 0
  %534 = vmatprep.subr.mxu0 %v527
  %535 = vmatpush1.msra.mxu0 %v526
  %536 = vmatprep.subr.mxu0 %v529
  %537 = vmatpush1.msra.mxu0 %v528
  %538 = vmatprep.subr.mxu0 0.0
  %539 = vmatpush1.msra.mxu0 0.0
  %540 = vmatprep.subr.mxu0 0.0
  %541 = vmatpush1.msra.mxu0 0.0
  %542 = vmatprep.subr.mxu0 0.0
  %543 = vmatpush1.msra.mxu0 0.0
  %544 = vmatprep.subr.mxu0 0.0
  %545 = vmatpush1.msra.mxu0 0.0
  %546 = vmatprep.subr.mxu0 0.0
  %547 = vmatpush1.msra.mxu0 0.0
  %548 = vmatprep.subr.mxu0 0.0
  %549 = vmatpush1.msra.mxu0 0.0
  %550 = vmatprep.subr.mxu0 0.0
  %551 = vmatpush1.msra.mxu0 0.0
  %552 = vmatprep.subr.mxu0 0.0
  %553 = vmatpush1.msra.mxu0 0.0
  %554 = vmatprep.subr.mxu0 0.0
  %555 = vmatpush1.msra.mxu0 0.0
  %556 = vmatprep.subr.mxu0 0.0
  %557 = vmatpush1.msra.mxu0 0.0
  %558 = vmatprep.subr.mxu0 0.0
  %559 = vmatpush1.msra.mxu0 0.0
  %560 = vmatprep.subr.mxu0 0.0
  %561 = vmatpush1.msra.mxu0 0.0
  %562 = vmatprep.subr.mxu0 0.0
  %563 = vmatpush1.msra.mxu0 0.0
  %564 = vmatprep.subr.mxu0 0.0
  %565 = vmatpush1.msra.mxu0 0.0
  %566 = vmatprep.subr.mxu0 0.0
  %567 = vmatpush1.msra.mxu0 0.0
  %568 = vmatprep.subr.mxu0 0.0
  %569 = vmatpush1.msra.mxu0 0.0
  %570 = vmatprep.subr.mxu0 0.0
  %571 = vmatpush1.msra.mxu0 0.0
  %572 = vmatprep.subr.mxu0 0.0
  %573 = vmatpush1.msra.mxu0 0.0
  %574 = vmatprep.subr.mxu0 0.0
  %575 = vmatpush1.msra.mxu0 0.0
  %576 = vmatprep.subr.mxu0 0.0
  %577 = vmatpush1.msra.mxu0 0.0
  %578 = vmatprep.subr.mxu0 0.0
  %579 = vmatpush1.msra.mxu0 0.0
  %580 = vmatprep.subr.mxu0 0.0
  %581 = vmatpush1.msra.mxu0 0.0
  %582 = vmatprep.subr.mxu0 0.0
  %583 = vmatpush1.msra.mxu0 0.0
  %584 = vmatprep.subr.mxu0 0.0
  %585 = vmatpush1.msra.mxu0 0.0
  %586 = vmatprep.subr.mxu0 0.0
  %587 = vmatpush1.msra.mxu0 0.0
  %588 = vmatprep.subr.mxu0 0.0
  %589 = vmatpush1.msra.mxu0 0.0
  %590 = vmatprep.subr.mxu0 0.0
  %591 = vmatpush1.msra.mxu0 0.0
  %592 = vmatprep.subr.mxu0 0.0
  %593 = vmatpush1.msra.mxu0 0.0
  %594 = vmatprep.subr.mxu0 0.0
  %595 = vmatpush1.msra.mxu0 0.0
  %596 = vmatprep.subr.mxu0 0.0
  %597 = vmatpush1.msra.mxu0 0.0
  %598 = vmatprep.mubr.f32.mxu0 0.0
  %599 = vmatmul.mubr.f32.gmra.mrb[0].mxu0 %v532
  %v600 = vpop.f32.mrb[0].mxu0
  %v601 = vadd.f32 0.0, %v600
  %v602 = vpop.f32.mrb[0].mxu0
  %v603 = vadd.f32 0.0, %v602
  %604 = vdwg.mxu0
  %605 = vrot.lane.b32.xlu0 %v523, 112
  %v606 = vpop.permute.xlu0 %605
  %v607 = vsel %vm530, %v606, 0
  %609 = vmatprep.subr.mxu0 %v527
  %610 = vmatpush1.msra.mxu0 %v526
  %611 = vmatprep.subr.mxu0 %v529
  %612 = vmatpush1.msra.mxu0 %v528
  %613 = vmatprep.subr.mxu0 0.0
  %614 = vmatpush1.msra.mxu0 0.0
  %615 = vmatprep.subr.mxu0 0.0
  %616 = vmatpush1.msra.mxu0 0.0
  %617 = vmatprep.subr.mxu0 0.0
  %618 = vmatpush1.msra.mxu0 0.0
  %619 = vmatprep.subr.mxu0 0.0
  %620 = vmatpush1.msra.mxu0 0.0
  %621 = vmatprep.subr.mxu0 0.0
  %622 = vmatpush1.msra.mxu0 0.0
  %623 = vmatprep.subr.mxu0 0.0
  %624 = vmatpush1.msra.mxu0 0.0
  %625 = vmatprep.subr.mxu0 0.0
  %626 = vmatpush1.msra.mxu0 0.0
  %627 = vmatprep.subr.mxu0 0.0
  %628 = vmatpush1.msra.mxu0 0.0
  %629 = vmatprep.subr.mxu0 0.0
  %630 = vmatpush1.msra.mxu0 0.0
  %631 = vmatprep.subr.mxu0 0.0
  %632 = vmatpush1.msra.mxu0 0.0
  %633 = vmatprep.subr.mxu0 0.0
  %634 = vmatpush1.msra.mxu0 0.0
  %635 = vmatprep.subr.mxu0 0.0
  %636 = vmatpush1.msra.mxu0 0.0
  %637 = vmatprep.subr.mxu0 0.0
  %638 = vmatpush1.msra.mxu0 0.0
  %639 = vmatprep.subr.mxu0 0.0
  %640 = vmatpush1.msra.mxu0 0.0
  %641 = vmatprep.subr.mxu0 0.0
  %642 = vmatpush1.msra.mxu0 0.0
  %643 = vmatprep.subr.mxu0 0.0
  %644 = vmatpush1.msra.mxu0 0.0
  %645 = vmatprep.subr.mxu0 0.0
  %646 = vmatpush1.msra.mxu0 0.0
  %647 = vmatprep.subr.mxu0 0.0
  %648 = vmatpush1.msra.mxu0 0.0
  %649 = vmatprep.subr.mxu0 0.0
  %650 = vmatpush1.msra.mxu0 0.0
  %651 = vmatprep.subr.mxu0 0.0
  %652 = vmatpush1.msra.mxu0 0.0
  %653 = vmatprep.subr.mxu0 0.0
  %654 = vmatpush1.msra.mxu0 0.0
  %655 = vmatprep.subr.mxu0 0.0
  %656 = vmatpush1.msra.mxu0 0.0
  %657 = vmatprep.subr.mxu0 0.0
  %658 = vmatpush1.msra.mxu0 0.0
  %659 = vmatprep.subr.mxu0 0.0
  %660 = vmatpush1.msra.mxu0 0.0
  %661 = vmatprep.subr.mxu0 0.0
  %662 = vmatpush1.msra.mxu0 0.0
  %663 = vmatprep.subr.mxu0 0.0
  %664 = vmatpush1.msra.mxu0 0.0
  %665 = vmatprep.subr.mxu0 0.0
  %666 = vmatpush1.msra.mxu0 0.0
  %667 = vmatprep.subr.mxu0 0.0
  %668 = vmatpush1.msra.mxu0 0.0
  %669 = vmatprep.subr.mxu0 0.0
  %670 = vmatpush1.msra.mxu0 0.0
  %671 = vmatprep.subr.mxu0 0.0
  %672 = vmatpush1.msra.mxu0 0.0
  %673 = vmatprep.mubr.f32.mxu0 0.0
  %674 = vmatmul.mubr.f32.gmra.mrb[0].mxu0 %v607
  %v675 = vpop.f32.mrb[0].mxu0
  %v676 = vadd.f32 0.0, %v675
  %v677 = vpop.f32.mrb[0].mxu0
  %v678 = vadd.f32 0.0, %v677
  %679 = vdwg.mxu0
  %v680 = vadd.f32 %v289, %v601
  %v681 = vadd.f32 %v291, %v603
  %v682 = vadd.f32 %v360, %v676
  %v683 = vadd.f32 %v362, %v678
  %684 = vset.pattern.permute.xlu0 3
  %685 = vperm.xlu0 %684, %v40
  %v686 = vpop.permute.xlu0 %685
  %688 = vrot.lane.b32.xlu0 %v39, 104
  %v689 = vpop.permute.xlu0 %688
  %vm690 = vcmask 64512
  %v691 = vsel %vm690, %v689, 0
  %693 = vmatprep.subr.mxu0 0.0
  %694 = vmatpush1.msra.mxu0 %v43
  %695 = vmatprep.subr.mxu0 0.0
  %696 = vmatpush1.msra.mxu0 0.0
  %697 = vmatprep.subr.mxu0 0.0
  %698 = vmatpush1.msra.mxu0 0.0
  %699 = vmatprep.subr.mxu0 0.0
  %700 = vmatpush1.msra.mxu0 0.0
  %701 = vmatprep.subr.mxu0 0.0
  %702 = vmatpush1.msra.mxu0 0.0
  %703 = vmatprep.subr.mxu0 0.0
  %704 = vmatpush1.msra.mxu0 0.0
  %705 = vmatprep.subr.mxu0 0.0
  %706 = vmatpush1.msra.mxu0 0.0
  %707 = vmatprep.subr.mxu0 0.0
  %708 = vmatpush1.msra.mxu0 0.0
  %709 = vmatprep.subr.mxu0 0.0
  %710 = vmatpush1.msra.mxu0 0.0
  %711 = vmatprep.subr.mxu0 0.0
  %712 = vmatpush1.msra.mxu0 0.0
  %713 = vmatprep.subr.mxu0 0.0
  %714 = vmatpush1.msra.mxu0 0.0
  %715 = vmatprep.subr.mxu0 0.0
  %716 = vmatpush1.msra.mxu0 0.0
  %717 = vmatprep.subr.mxu0 0.0
  %718 = vmatpush1.msra.mxu0 0.0
  %719 = vmatprep.subr.mxu0 0.0
  %720 = vmatpush1.msra.mxu0 0.0
  %721 = vmatprep.subr.mxu0 0.0
  %722 = vmatpush1.msra.mxu0 0.0
  %723 = vmatprep.subr.mxu0 0.0
  %724 = vmatpush1.msra.mxu0 0.0
  %725 = vmatprep.subr.mxu0 0.0
  %726 = vmatpush1.msra.mxu0 0.0
  %727 = vmatprep.subr.mxu0 0.0
  %728 = vmatpush1.msra.mxu0 0.0
  %729 = vmatprep.subr.mxu0 0.0
  %730 = vmatpush1.msra.mxu0 0.0
  %731 = vmatprep.subr.mxu0 0.0
  %732 = vmatpush1.msra.mxu0 0.0
  %733 = vmatprep.subr.mxu0 0.0
  %734 = vmatpush1.msra.mxu0 0.0
  %735 = vmatprep.subr.mxu0 0.0
  %736 = vmatpush1.msra.mxu0 0.0
  %737 = vmatprep.subr.mxu0 0.0
  %738 = vmatpush1.msra.mxu0 0.0
  %739 = vmatprep.subr.mxu0 0.0
  %740 = vmatpush1.msra.mxu0 0.0
  %741 = vmatprep.subr.mxu0 0.0
  %742 = vmatpush1.msra.mxu0 0.0
  %743 = vmatprep.subr.mxu0 0.0
  %744 = vmatpush1.msra.mxu0 0.0
  %745 = vmatprep.subr.mxu0 0.0
  %746 = vmatpush1.msra.mxu0 0.0
  %747 = vmatprep.subr.mxu0 0.0
  %748 = vmatpush1.msra.mxu0 0.0
  %749 = vmatprep.subr.mxu0 0.0
  %750 = vmatpush1.msra.mxu0 0.0
  %751 = vmatprep.subr.mxu0 0.0
  %752 = vmatpush1.msra.mxu0 0.0
  %753 = vmatprep.subr.mxu0 0.0
  %754 = vmatpush1.msra.mxu0 0.0
  %755 = vmatprep.subr.mxu0 0.0
  %756 = vmatpush1.msra.mxu0 0.0
  %757 = vmatprep.mubr.f32.mxu0 0.0
  %758 = vmatmul.mubr.f32.gmra.mrb[0].mxu0 %v691
  %v759 = vpop.f32.mrb[0].mxu0
  %v760 = vadd.f32 %v686, %v759
  %v761 = vpop.f32.mrb[0].mxu0
  %762 = vdwg.mxu0
  %763 = vmatprep.subr.mxu0 0.0
  %764 = vmatpush1.msra.mxu0 %v760
  %765 = vmatprep.subr.mxu0 0.0
  %766 = vmatpush1.msra.mxu0 0.0
  %767 = vmatprep.subr.mxu0 0.0
  %768 = vmatpush1.msra.mxu0 0.0
  %769 = vmatprep.subr.mxu0 0.0
  %770 = vmatpush1.msra.mxu0 0.0
  %771 = vmatprep.subr.mxu0 0.0
  %772 = vmatpush1.msra.mxu0 0.0
  %773 = vmatprep.subr.mxu0 0.0
  %774 = vmatpush1.msra.mxu0 0.0
  %775 = vmatprep.subr.mxu0 0.0
  %776 = vmatpush1.msra.mxu0 0.0
  %777 = vmatprep.subr.mxu0 0.0
  %778 = vmatpush1.msra.mxu0 0.0
  %779 = vmatprep.subr.mxu0 0.0
  %780 = vmatpush1.msra.mxu0 0.0
  %781 = vmatprep.subr.mxu0 0.0
  %782 = vmatpush1.msra.mxu0 0.0
  %783 = vmatprep.subr.mxu0 0.0
  %784 = vmatpush1.msra.mxu0 0.0
  %785 = vmatprep.subr.mxu0 0.0
  %786 = vmatpush1.msra.mxu0 0.0
  %787 = vmatprep.subr.mxu0 0.0
  %788 = vmatpush1.msra.mxu0 0.0
  %789 = vmatprep.subr.mxu0 0.0
  %790 = vmatpush1.msra.mxu0 0.0
  %791 = vmatprep.subr.mxu0 0.0
  %792 = vmatpush1.msra.mxu0 0.0
  %793 = vmatprep.subr.mxu0 0.0
  %794 = vmatpush1.msra.mxu0 0.0
  %795 = vmatprep.subr.mxu0 0.0
  %796 = vmatpush1.msra.mxu0 0.0
  %797 = vmatprep.subr.mxu0 0.0
  %798 = vmatpush1.msra.mxu0 0.0
  %799 = vmatprep.subr.mxu0 0.0
  %800 = vmatpush1.msra.mxu0 0.0
  %801 = vmatprep.subr.mxu0 0.0
  %802 = vmatpush1.msra.mxu0 0.0
  %803 = vmatprep.subr.mxu0 0.0
  %804 = vmatpush1.msra.mxu0 0.0
  %805 = vmatprep.subr.mxu0 0.0
  %806 = vmatpush1.msra.mxu0 0.0
  %807 = vmatprep.subr.mxu0 0.0
  %808 = vmatpush1.msra.mxu0 0.0
  %809 = vmatprep.subr.mxu0 0.0
  %810 = vmatpush1.msra.mxu0 0.0
  %811 = vmatprep.subr.mxu0 0.0
  %812 = vmatpush1.msra.mxu0 0.0
  %813 = vmatprep.subr.mxu0 0.0
  %814 = vmatpush1.msra.mxu0 0.0
  %815 = vmatprep.subr.mxu0 0.0
  %816 = vmatpush1.msra.mxu0 0.0
  %817 = vmatprep.subr.mxu0 0.0
  %818 = vmatpush1.msra.mxu0 0.0
  %819 = vmatprep.subr.mxu0 0.0
  %820 = vmatpush1.msra.mxu0 0.0
  %821 = vmatprep.subr.mxu0 0.0
  %822 = vmatpush1.msra.mxu0 0.0
  %823 = vmatprep.subr.mxu0 0.0
  %824 = vmatpush1.msra.mxu0 0.0
  %825 = vmatprep.subr.mxu0 0.0
  %826 = vmatpush1.msra.mxu0 0.0
  %827 = vmatprep.mubr.f32.mxu0 0.0
  %828 = vmatmul.mubr.f32.gmra.mrb[0].mxu0 %v691
  %v829 = vpop.f32.mrb[0].mxu0
  %v830 = vadd.f32 %v686, %v829
  %v831 = vpop.f32.mrb[0].mxu0
  %832 = vdwg.mxu0
  %833 = vset.pattern.permute.xlu0 4
  %834 = vperm.xlu0 %833, %v40
  %v835 = vpop.permute.xlu0 %834
  %837 = vrot.lane.b32.xlu0 %v39, 96
  %v838 = vpop.permute.xlu0 %837
  %v839 = vsel %vm55, %v838, 0
  %841 = vmatprep.subr.mxu0 0.0
  %842 = vmatpush1.msra.mxu0 %v454
  %843 = vmatprep.subr.mxu0 0.0
  %844 = vmatpush1.msra.mxu0 0.0
  %845 = vmatprep.subr.mxu0 0.0
  %846 = vmatpush1.msra.mxu0 0.0
  %847 = vmatprep.subr.mxu0 0.0
  %848 = vmatpush1.msra.mxu0 0.0
  %849 = vmatprep.subr.mxu0 0.0
  %850 = vmatpush1.msra.mxu0 0.0
  %851 = vmatprep.subr.mxu0 0.0
  %852 = vmatpush1.msra.mxu0 0.0
  %853 = vmatprep.subr.mxu0 0.0
  %854 = vmatpush1.msra.mxu0 0.0
  %855 = vmatprep.subr.mxu0 0.0
  %856 = vmatpush1.msra.mxu0 0.0
  %857 = vmatprep.subr.mxu0 0.0
  %858 = vmatpush1.msra.mxu0 0.0
  %859 = vmatprep.subr.mxu0 0.0
  %860 = vmatpush1.msra.mxu0 0.0
  %861 = vmatprep.subr.mxu0 0.0
  %862 = vmatpush1.msra.mxu0 0.0
  %863 = vmatprep.subr.mxu0 0.0
  %864 = vmatpush1.msra.mxu0 0.0
  %865 = vmatprep.subr.mxu0 0.0
  %866 = vmatpush1.msra.mxu0 0.0
  %867 = vmatprep.subr.mxu0 0.0
  %868 = vmatpush1.msra.mxu0 0.0
  %869 = vmatprep.subr.mxu0 0.0
  %870 = vmatpush1.msra.mxu0 0.0
  %871 = vmatprep.subr.mxu0 0.0
  %872 = vmatpush1.msra.mxu0 0.0
  %873 = vmatprep.subr.mxu0 0.0
  %874 = vmatpush1.msra.mxu0 0.0
  %875 = vmatprep.subr.mxu0 0.0
  %876 = vmatpush1.msra.mxu0 0.0
  %877 = vmatprep.subr.mxu0 0.0
  %878 = vmatpush1.msra.mxu0 0.0
  %879 = vmatprep.subr.mxu0 0.0
  %880 = vmatpush1.msra.mxu0 0.0
  %881 = vmatprep.subr.mxu0 0.0
  %882 = vmatpush1.msra.mxu0 0.0
  %883 = vmatprep.subr.mxu0 0.0
  %884 = vmatpush1.msra.mxu0 0.0
  %885 = vmatprep.subr.mxu0 0.0
  %886 = vmatpush1.msra.mxu0 0.0
  %887 = vmatprep.subr.mxu0 0.0
  %888 = vmatpush1.msra.mxu0 0.0
  %889 = vmatprep.subr.mxu0 0.0
  %890 = vmatpush1.msra.mxu0 0.0
  %891 = vmatprep.subr.mxu0 0.0
  %892 = vmatpush1.msra.mxu0 0.0
  %893 = vmatprep.subr.mxu0 0.0
  %894 = vmatpush1.msra.mxu0 0.0
  %895 = vmatprep.subr.mxu0 0.0
  %896 = vmatpush1.msra.mxu0 0.0
  %897 = vmatprep.subr.mxu0 0.0
  %898 = vmatpush1.msra.mxu0 0.0
  %899 = vmatprep.subr.mxu0 0.0
  %900 = vmatpush1.msra.mxu0 0.0
  %901 = vmatprep.subr.mxu0 0.0
  %902 = vmatpush1.msra.mxu0 0.0
  %903 = vmatprep.subr.mxu0 0.0
  %904 = vmatpush1.msra.mxu0 0.0
  %905 = vmatprep.mubr.f32.mxu0 0.0
  %906 = vmatmul.mubr.f32.gmra.mrb[0].mxu0 %v839
  %v907 = vpop.f32.mrb[0].mxu0
  %v908 = vadd.f32 %v835, %v907
  %v909 = vpop.f32.mrb[0].mxu0
  %910 = vdwg.mxu0
  %v911 = vld [vmem:[%s7] sm:$0xff]
  %v912 = vld [vmem:[%s7 + $0x8] sm:$0xff]
  %v914 = vsel %vm530, %v908, 0
  %916 = vmatprep.subr.mxu0 0.0
  %917 = vmatpush1.msra.mxu0 %v911
  %918 = vmatprep.subr.mxu0 0.0
  %919 = vmatpush1.msra.mxu0 %v912
  %920 = vmatprep.subr.mxu0 0.0
  %921 = vmatpush1.msra.mxu0 0.0
  %922 = vmatprep.subr.mxu0 0.0
  %923 = vmatpush1.msra.mxu0 0.0
  %924 = vmatprep.subr.mxu0 0.0
  %925 = vmatpush1.msra.mxu0 0.0
  %926 = vmatprep.subr.mxu0 0.0
  %927 = vmatpush1.msra.mxu0 0.0
  %928 = vmatprep.subr.mxu0 0.0
  %929 = vmatpush1.msra.mxu0 0.0
  %930 = vmatprep.subr.mxu0 0.0
  %931 = vmatpush1.msra.mxu0 0.0
  %932 = vmatprep.subr.mxu0 0.0
  %933 = vmatpush1.msra.mxu0 0.0
  %934 = vmatprep.subr.mxu0 0.0
  %935 = vmatpush1.msra.mxu0 0.0
  %936 = vmatprep.subr.mxu0 0.0
  %937 = vmatpush1.msra.mxu0 0.0
  %938 = vmatprep.subr.mxu0 0.0
  %939 = vmatpush1.msra.mxu0 0.0
  %940 = vmatprep.subr.mxu0 0.0
  %941 = vmatpush1.msra.mxu0 0.0
  %942 = vmatprep.subr.mxu0 0.0
  %943 = vmatpush1.msra.mxu0 0.0
  %944 = vmatprep.subr.mxu0 0.0
  %945 = vmatpush1.msra.mxu0 0.0
  %946 = vmatprep.subr.mxu0 0.0
  %947 = vmatpush1.msra.mxu0 0.0
  %948 = vmatprep.subr.mxu0 0.0
  %949 = vmatpush1.msra.mxu0 0.0
  %950 = vmatprep.subr.mxu0 0.0
  %951 = vmatpush1.msra.mxu0 0.0
  %952 = vmatprep.subr.mxu0 0.0
  %953 = vmatpush1.msra.mxu0 0.0
  %954 = vmatprep.subr.mxu0 0.0
  %955 = vmatpush1.msra.mxu0 0.0
  %956 = vmatprep.subr.mxu0 0.0
  %957 = vmatpush1.msra.mxu0 0.0
  %958 = vmatprep.subr.mxu0 0.0
  %959 = vmatpush1.msra.mxu0 0.0
  %960 = vmatprep.subr.mxu0 0.0
  %961 = vmatpush1.msra.mxu0 0.0
  %962 = vmatprep.subr.mxu0 0.0
  %963 = vmatpush1.msra.mxu0 0.0
  %964 = vmatprep.subr.mxu0 0.0
  %965 = vmatpush1.msra.mxu0 0.0
  %966 = vmatprep.subr.mxu0 0.0
  %967 = vmatpush1.msra.mxu0 0.0
  %968 = vmatprep.subr.mxu0 0.0
  %969 = vmatpush1.msra.mxu0 0.0
  %970 = vmatprep.subr.mxu0 0.0
  %971 = vmatpush1.msra.mxu0 0.0
  %972 = vmatprep.subr.mxu0 0.0
  %973 = vmatpush1.msra.mxu0 0.0
  %974 = vmatprep.subr.mxu0 0.0
  %975 = vmatpush1.msra.mxu0 0.0
  %976 = vmatprep.subr.mxu0 0.0
  %977 = vmatpush1.msra.mxu0 0.0
  %978 = vmatprep.subr.mxu0 0.0
  %979 = vmatpush1.msra.mxu0 0.0
  %980 = vmatprep.mubr.f32.mxu0 0.0
  %981 = vmatmul.mubr.f32.gmra.mrb[0].mxu0 %v914
  %v982 = vpop.f32.mrb[0].mxu0
  %v983 = vadd.f32 0.0, %v982
  %v984 = vpop.f32.mrb[0].mxu0
  %985 = vdwg.mxu0
  %986 = vrot.lane.b32.xlu0 %v908, 112
  %v987 = vpop.permute.xlu0 %986
  %v988 = vsel %vm530, %v987, 0
  %990 = vmatprep.subr.mxu0 0.0
  %991 = vmatpush1.msra.mxu0 %v911
  %992 = vmatprep.subr.mxu0 0.0
  %993 = vmatpush1.msra.mxu0 %v912
  %994 = vmatprep.subr.mxu0 0.0
  %995 = vmatpush1.msra.mxu0 0.0
  %996 = vmatprep.subr.mxu0 0.0
  %997 = vmatpush1.msra.mxu0 0.0
  %998 = vmatprep.subr.mxu0 0.0
  %999 = vmatpush1.msra.mxu0 0.0
  %1000 = vmatprep.subr.mxu0 0.0
  %1001 = vmatpush1.msra.mxu0 0.0
  %1002 = vmatprep.subr.mxu0 0.0
  %1003 = vmatpush1.msra.mxu0 0.0
  %1004 = vmatprep.subr.mxu0 0.0
  %1005 = vmatpush1.msra.mxu0 0.0
  %1006 = vmatprep.subr.mxu0 0.0
  %1007 = vmatpush1.msra.mxu0 0.0
  %1008 = vmatprep.subr.mxu0 0.0
  %1009 = vmatpush1.msra.mxu0 0.0
  %1010 = vmatprep.subr.mxu0 0.0
  %1011 = vmatpush1.msra.mxu0 0.0
  %1012 = vmatprep.subr.mxu0 0.0
  %1013 = vmatpush1.msra.mxu0 0.0
  %1014 = vmatprep.subr.mxu0 0.0
  %1015 = vmatpush1.msra.mxu0 0.0
  %1016 = vmatprep.subr.mxu0 0.0
  %1017 = vmatpush1.msra.mxu0 0.0
  %1018 = vmatprep.subr.mxu0 0.0
  %1019 = vmatpush1.msra.mxu0 0.0
  %1020 = vmatprep.subr.mxu0 0.0
  %1021 = vmatpush1.msra.mxu0 0.0
  %1022 = vmatprep.subr.mxu0 0.0
  %1023 = vmatpush1.msra.mxu0 0.0
  %1024 = vmatprep.subr.mxu0 0.0
  %1025 = vmatpush1.msra.mxu0 0.0
  %1026 = vmatprep.subr.mxu0 0.0
  %1027 = vmatpush1.msra.mxu0 0.0
  %1028 = vmatprep.subr.mxu0 0.0
  %1029 = vmatpush1.msra.mxu0 0.0
  %1030 = vmatprep.subr.mxu0 0.0
  %1031 = vmatpush1.msra.mxu0 0.0
  %1032 = vmatprep.subr.mxu0 0.0
  %1033 = vmatpush1.msra.mxu0 0.0
  %1034 = vmatprep.subr.mxu0 0.0
  %1035 = vmatpush1.msra.mxu0 0.0
  %1036 = vmatprep.subr.mxu0 0.0
  %1037 = vmatpush1.msra.mxu0 0.0
  %1038 = vmatprep.subr.mxu0 0.0
  %1039 = vmatpush1.msra.mxu0 0.0
  %1040 = vmatprep.subr.mxu0 0.0
  %1041 = vmatpush1.msra.mxu0 0.0
  %1042 = vmatprep.subr.mxu0 0.0
  %1043 = vmatpush1.msra.mxu0 0.0
  %1044 = vmatprep.subr.mxu0 0.0
  %1045 = vmatpush1.msra.mxu0 0.0
  %1046 = vmatprep.subr.mxu0 0.0
  %1047 = vmatpush1.msra.mxu0 0.0
  %1048 = vmatprep.subr.mxu0 0.0
  %1049 = vmatpush1.msra.mxu0 0.0
  %1050 = vmatprep.subr.mxu0 0.0
  %1051 = vmatpush1.msra.mxu0 0.0
  %1052 = vmatprep.subr.mxu0 0.0
  %1053 = vmatpush1.msra.mxu0 0.0
  %1054 = vmatprep.mubr.f32.mxu0 0.0
  %1055 = vmatmul.mubr.f32.gmra.mrb[0].mxu0 %v988
  %v1056 = vpop.f32.mrb[0].mxu0
  %v1057 = vadd.f32 0.0, %v1056
  %v1058 = vpop.f32.mrb[0].mxu0
  %1059 = vdwg.mxu0
  %1061 = vrot.lane.b32.xlu0 %v1057, 64
  %v1062 = vpop.permute.xlu0 %1061
  %vm1064 = vcmask 523264
  %v1065 = vsel %vm1064, %v983, %v1062
  %v1066 = vadd.f32 %v830, %v1065
  %1067 = vmatprep.subr.mxu0 0.0
  %1068 = vmatpush1.msra.mxu0 %v1066
  %1069 = vmatprep.subr.mxu0 0.0
  %1070 = vmatpush1.msra.mxu0 0.0
  %1071 = vmatprep.subr.mxu0 0.0
  %1072 = vmatpush1.msra.mxu0 0.0
  %1073 = vmatprep.subr.mxu0 0.0
  %1074 = vmatpush1.msra.mxu0 0.0
  %1075 = vmatprep.subr.mxu0 0.0
  %1076 = vmatpush1.msra.mxu0 0.0
  %1077 = vmatprep.subr.mxu0 0.0
  %1078 = vmatpush1.msra.mxu0 0.0
  %1079 = vmatprep.subr.mxu0 0.0
  %1080 = vmatpush1.msra.mxu0 0.0
  %1081 = vmatprep.subr.mxu0 0.0
  %1082 = vmatpush1.msra.mxu0 0.0
  %1083 = vmatprep.subr.mxu0 0.0
  %1084 = vmatpush1.msra.mxu0 0.0
  %1085 = vmatprep.subr.mxu0 0.0
  %1086 = vmatpush1.msra.mxu0 0.0
  %1087 = vmatprep.subr.mxu0 0.0
  %1088 = vmatpush1.msra.mxu0 0.0
  %1089 = vmatprep.subr.mxu0 0.0
  %1090 = vmatpush1.msra.mxu0 0.0
  %1091 = vmatprep.subr.mxu0 0.0
  %1092 = vmatpush1.msra.mxu0 0.0
  %1093 = vmatprep.subr.mxu0 0.0
  %1094 = vmatpush1.msra.mxu0 0.0
  %1095 = vmatprep.subr.mxu0 0.0
  %1096 = vmatpush1.msra.mxu0 0.0
  %1097 = vmatprep.subr.mxu0 0.0
  %1098 = vmatpush1.msra.mxu0 0.0
  %1099 = vmatprep.subr.mxu0 0.0
  %1100 = vmatpush1.msra.mxu0 0.0
  %1101 = vmatprep.subr.mxu0 0.0
  %1102 = vmatpush1.msra.mxu0 0.0
  %1103 = vmatprep.subr.mxu0 0.0
  %1104 = vmatpush1.msra.mxu0 0.0
  %1105 = vmatprep.subr.mxu0 0.0
  %1106 = vmatpush1.msra.mxu0 0.0
  %1107 = vmatprep.subr.mxu0 0.0
  %1108 = vmatpush1.msra.mxu0 0.0
  %1109 = vmatprep.subr.mxu0 0.0
  %1110 = vmatpush1.msra.mxu0 0.0
  %1111 = vmatprep.subr.mxu0 0.0
  %1112 = vmatpush1.msra.mxu0 0.0
  %1113 = vmatprep.subr.mxu0 0.0
  %1114 = vmatpush1.msra.mxu0 0.0
  %1115 = vmatprep.subr.mxu0 0.0
  %1116 = vmatpush1.msra.mxu0 0.0
  %1117 = vmatprep.subr.mxu0 0.0
  %1118 = vmatpush1.msra.mxu0 0.0
  %1119 = vmatprep.subr.mxu0 0.0
  %1120 = vmatpush1.msra.mxu0 0.0
  %1121 = vmatprep.subr.mxu0 0.0
  %1122 = vmatpush1.msra.mxu0 0.0
  %1123 = vmatprep.subr.mxu0 0.0
  %1124 = vmatpush1.msra.mxu0 0.0
  %1125 = vmatprep.subr.mxu0 0.0
  %1126 = vmatpush1.msra.mxu0 0.0
  %1127 = vmatprep.subr.mxu0 0.0
  %1128 = vmatpush1.msra.mxu0 0.0
  %1129 = vmatprep.subr.mxu0 0.0
  %1130 = vmatpush1.msra.mxu0 0.0
  %1131 = vmatprep.mubr.f32.mxu0 0.0
  %1132 = vmatmul.mubr.f32.gmra.mrb[0].mxu0 %v691
  %v1133 = vpop.f32.mrb[0].mxu0
  %v1134 = vadd.f32 %v686, %v1133
  %v1135 = vpop.f32.mrb[0].mxu0
  %1136 = vdwg.mxu0
  %v1137 = vadd.f32 %v1134, %v1065
  %v1139 = vsel %vm59, %v680, 0
  %v1142 = vsel %vm59, %v681, 0
  %v1145 = vsel %vm59, %v682, 0
  %v1148 = vsel %vm59, %v683, 0
  %1150 = vmatprep.subr.mxu0 %v1142
  %1151 = vmatpush1.msra.mxu0 %v1139
  %1152 = vmatprep.subr.mxu0 0.0
  %1153 = vmatpush1.msra.mxu0 0.0
  %1154 = vmatprep.subr.mxu0 0.0
  %1155 = vmatpush1.msra.mxu0 0.0
  %1156 = vmatprep.subr.mxu0 0.0
  %1157 = vmatpush1.msra.mxu0 0.0
  %1158 = vmatprep.subr.mxu0 0.0
  %1159 = vmatpush1.msra.mxu0 0.0
  %1160 = vmatprep.subr.mxu0 0.0
  %1161 = vmatpush1.msra.mxu0 0.0
  %1162 = vmatprep.subr.mxu0 0.0
  %1163 = vmatpush1.msra.mxu0 0.0
  %1164 = vmatprep.subr.mxu0 0.0
  %1165 = vmatpush1.msra.mxu0 0.0
  %1166 = vmatprep.subr.mxu0 0.0
  %1167 = vmatpush1.msra.mxu0 0.0
  %1168 = vmatprep.subr.mxu0 0.0
  %1169 = vmatpush1.msra.mxu0 0.0
  %1170 = vmatprep.subr.mxu0 0.0
  %1171 = vmatpush1.msra.mxu0 0.0
  %1172 = vmatprep.subr.mxu0 0.0
  %1173 = vmatpush1.msra.mxu0 0.0
  %1174 = vmatprep.subr.mxu0 0.0
  %1175 = vmatpush1.msra.mxu0 0.0
  %1176 = vmatprep.subr.mxu0 0.0
  %1177 = vmatpush1.msra.mxu0 0.0
  %1178 = vmatprep.subr.mxu0 0.0
  %1179 = vmatpush1.msra.mxu0 0.0
  %1180 = vmatprep.subr.mxu0 0.0
  %1181 = vmatpush1.msra.mxu0 0.0
  %1182 = vmatprep.subr.mxu0 0.0
  %1183 = vmatpush1.msra.mxu0 0.0
  %1184 = vmatprep.subr.mxu0 0.0
  %1185 = vmatpush1.msra.mxu0 0.0
  %1186 = vmatprep.subr.mxu0 0.0
  %1187 = vmatpush1.msra.mxu0 0.0
  %1188 = vmatprep.subr.mxu0 0.0
  %1189 = vmatpush1.msra.mxu0 0.0
  %1190 = vmatprep.subr.mxu0 0.0
  %1191 = vmatpush1.msra.mxu0 0.0
  %1192 = vmatprep.subr.mxu0 0.0
  %1193 = vmatpush1.msra.mxu0 0.0
  %1194 = vmatprep.subr.mxu0 0.0
  %1195 = vmatpush1.msra.mxu0 0.0
  %1196 = vmatprep.subr.mxu0 0.0
  %1197 = vmatpush1.msra.mxu0 0.0
  %1198 = vmatprep.subr.mxu0 0.0
  %1199 = vmatpush1.msra.mxu0 0.0
  %1200 = vmatprep.subr.mxu0 0.0
  %1201 = vmatpush1.msra.mxu0 0.0
  %1202 = vmatprep.subr.mxu0 0.0
  %1203 = vmatpush1.msra.mxu0 0.0
  %1204 = vmatprep.subr.mxu0 0.0
  %1205 = vmatpush1.msra.mxu0 0.0
  %1206 = vmatprep.subr.mxu0 0.0
  %1207 = vmatpush1.msra.mxu0 0.0
  %1208 = vmatprep.subr.mxu0 0.0
  %1209 = vmatpush1.msra.mxu0 0.0
  %1210 = vmatprep.subr.mxu0 0.0
  %1211 = vmatpush1.msra.mxu0 0.0
  %1212 = vmatprep.subr.mxu0 0.0
  %1213 = vmatpush1.msra.mxu0 0.0
  %1214 = vmatprep.mubr.f32.mxu0 0.0
  %1215 = vmatmul.mubr.f32.gmra.mrb[0].mxu0 %v57
  %v1216 = vpop.f32.mrb[0].mxu0
  %v1217 = vadd.f32 %v49, %v1216
  %v1218 = vpop.f32.mrb[0].mxu0
  %v1219 = vadd.f32 %v49, %v1218
  %1220 = vdwg.mxu0
  %1221 = vmatprep.subr.mxu0 %v1148
  %1222 = vmatpush1.msra.mxu0 %v1145
  %1223 = vmatprep.subr.mxu0 0.0
  %1224 = vmatpush1.msra.mxu0 0.0
  %1225 = vmatprep.subr.mxu0 0.0
  %1226 = vmatpush1.msra.mxu0 0.0
  %1227 = vmatprep.subr.mxu0 0.0
  %1228 = vmatpush1.msra.mxu0 0.0
  %1229 = vmatprep.subr.mxu0 0.0
  %1230 = vmatpush1.msra.mxu0 0.0
  %1231 = vmatprep.subr.mxu0 0.0
  %1232 = vmatpush1.msra.mxu0 0.0
  %1233 = vmatprep.subr.mxu0 0.0
  %1234 = vmatpush1.msra.mxu0 0.0
  %1235 = vmatprep.subr.mxu0 0.0
  %1236 = vmatpush1.msra.mxu0 0.0
  %1237 = vmatprep.subr.mxu0 0.0
  %1238 = vmatpush1.msra.mxu0 0.0
  %1239 = vmatprep.subr.mxu0 0.0
  %1240 = vmatpush1.msra.mxu0 0.0
  %1241 = vmatprep.subr.mxu0 0.0
  %1242 = vmatpush1.msra.mxu0 0.0
  %1243 = vmatprep.subr.mxu0 0.0
  %1244 = vmatpush1.msra.mxu0 0.0
  %1245 = vmatprep.subr.mxu0 0.0
  %1246 = vmatpush1.msra.mxu0 0.0
  %1247 = vmatprep.subr.mxu0 0.0
  %1248 = vmatpush1.msra.mxu0 0.0
  %1249 = vmatprep.subr.mxu0 0.0
  %1250 = vmatpush1.msra.mxu0 0.0
  %1251 = vmatprep.subr.mxu0 0.0
  %1252 = vmatpush1.msra.mxu0 0.0
  %1253 = vmatprep.subr.mxu0 0.0
  %1254 = vmatpush1.msra.mxu0 0.0
  %1255 = vmatprep.subr.mxu0 0.0
  %1256 = vmatpush1.msra.mxu0 0.0
  %1257 = vmatprep.subr.mxu0 0.0
  %1258 = vmatpush1.msra.mxu0 0.0
  %1259 = vmatprep.subr.mxu0 0.0
  %1260 = vmatpush1.msra.mxu0 0.0
  %1261 = vmatprep.subr.mxu0 0.0
  %1262 = vmatpush1.msra.mxu0 0.0
  %1263 = vmatprep.subr.mxu0 0.0
  %1264 = vmatpush1.msra.mxu0 0.0
  %1265 = vmatprep.subr.mxu0 0.0
  %1266 = vmatpush1.msra.mxu0 0.0
  %1267 = vmatprep.subr.mxu0 0.0
  %1268 = vmatpush1.msra.mxu0 0.0
  %1269 = vmatprep.subr.mxu0 0.0
  %1270 = vmatpush1.msra.mxu0 0.0
  %1271 = vmatprep.subr.mxu0 0.0
  %1272 = vmatpush1.msra.mxu0 0.0
  %1273 = vmatprep.subr.mxu0 0.0
  %1274 = vmatpush1.msra.mxu0 0.0
  %1275 = vmatprep.subr.mxu0 0.0
  %1276 = vmatpush1.msra.mxu0 0.0
  %1277 = vmatprep.subr.mxu0 0.0
  %1278 = vmatpush1.msra.mxu0 0.0
  %1279 = vmatprep.subr.mxu0 0.0
  %1280 = vmatpush1.msra.mxu0 0.0
  %1281 = vmatprep.subr.mxu0 0.0
  %1282 = vmatpush1.msra.mxu0 0.0
  %1283 = vmatprep.subr.mxu0 0.0
  %1284 = vmatpush1.msra.mxu0 0.0
  %1285 = vmatprep.mubr.f32.mxu0 0.0
  %1286 = vmatmul.mubr.f32.gmra.mrb[0].mxu0 %v57
  %v1287 = vpop.f32.mrb[0].mxu0
  %v1288 = vadd.f32 %v49, %v1287
  %v1289 = vpop.f32.mrb[0].mxu0
  %v1290 = vadd.f32 %v49, %v1289
  %1291 = vdwg.mxu0
  %v1292 = vadd.f32 %v1217, %v601
  %v1293 = vadd.f32 %v1219, %v603
  %v1294 = vadd.f32 %v1288, %v676
  %v1295 = vadd.f32 %v1290, %v678
  %1296 = vset.pattern.permute.xlu0 5
  %1297 = vperm.xlu0 %1296, %v40
  %v1298 = vpop.permute.xlu0 %1297
  %1300 = vrot.lane.b32.xlu0 %v39, 88
  %v1301 = vpop.permute.xlu0 %1300
  %v1302 = vsel %vm55, %v1301, 0
  %v1305 = vsel %vm59, %v1292, 0
  %v1308 = vsel %vm59, %v1293, 0
  %v1311 = vsel %vm59, %v1294, 0
  %v1314 = vsel %vm59, %v1295, 0
  %1316 = vmatprep.subr.mxu0 %v1308
  %1317 = vmatpush1.msra.mxu0 %v1305
  %1318 = vmatprep.subr.mxu0 0.0
  %1319 = vmatpush1.msra.mxu0 0.0
  %1320 = vmatprep.subr.mxu0 0.0
  %1321 = vmatpush1.msra.mxu0 0.0
  %1322 = vmatprep.subr.mxu0 0.0
  %1323 = vmatpush1.msra.mxu0 0.0
  %1324 = vmatprep.subr.mxu0 0.0
  %1325 = vmatpush1.msra.mxu0 0.0
  %1326 = vmatprep.subr.mxu0 0.0
  %1327 = vmatpush1.msra.mxu0 0.0
  %1328 = vmatprep.subr.mxu0 0.0
  %1329 = vmatpush1.msra.mxu0 0.0
  %1330 = vmatprep.subr.mxu0 0.0
  %1331 = vmatpush1.msra.mxu0 0.0
  %1332 = vmatprep.subr.mxu0 0.0
  %1333 = vmatpush1.msra.mxu0 0.0
  %1334 = vmatprep.subr.mxu0 0.0
  %1335 = vmatpush1.msra.mxu0 0.0
  %1336 = vmatprep.subr.mxu0 0.0
  %1337 = vmatpush1.msra.mxu0 0.0
  %1338 = vmatprep.subr.mxu0 0.0
  %1339 = vmatpush1.msra.mxu0 0.0
  %1340 = vmatprep.subr.mxu0 0.0
  %1341 = vmatpush1.msra.mxu0 0.0
  %1342 = vmatprep.subr.mxu0 0.0
  %1343 = vmatpush1.msra.mxu0 0.0
  %1344 = vmatprep.subr.mxu0 0.0
  %1345 = vmatpush1.msra.mxu0 0.0
  %1346 = vmatprep.subr.mxu0 0.0
  %1347 = vmatpush1.msra.mxu0 0.0
  %1348 = vmatprep.subr.mxu0 0.0
  %1349 = vmatpush1.msra.mxu0 0.0
  %1350 = vmatprep.subr.mxu0 0.0
  %1351 = vmatpush1.msra.mxu0 0.0
  %1352 = vmatprep.subr.mxu0 0.0
  %1353 = vmatpush1.msra.mxu0 0.0
  %1354 = vmatprep.subr.mxu0 0.0
  %1355 = vmatpush1.msra.mxu0 0.0
  %1356 = vmatprep.subr.mxu0 0.0
  %1357 = vmatpush1.msra.mxu0 0.0
  %1358 = vmatprep.subr.mxu0 0.0
  %1359 = vmatpush1.msra.mxu0 0.0
  %1360 = vmatprep.subr.mxu0 0.0
  %1361 = vmatpush1.msra.mxu0 0.0
  %1362 = vmatprep.subr.mxu0 0.0
  %1363 = vmatpush1.msra.mxu0 0.0
  %1364 = vmatprep.subr.mxu0 0.0
  %1365 = vmatpush1.msra.mxu0 0.0
  %1366 = vmatprep.subr.mxu0 0.0
  %1367 = vmatpush1.msra.mxu0 0.0
  %1368 = vmatprep.subr.mxu0 0.0
  %1369 = vmatpush1.msra.mxu0 0.0
  %1370 = vmatprep.subr.mxu0 0.0
  %1371 = vmatpush1.msra.mxu0 0.0
  %1372 = vmatprep.subr.mxu0 0.0
  %1373 = vmatpush1.msra.mxu0 0.0
  %1374 = vmatprep.subr.mxu0 0.0
  %1375 = vmatpush1.msra.mxu0 0.0
  %1376 = vmatprep.subr.mxu0 0.0
  %1377 = vmatpush1.msra.mxu0 0.0
  %1378 = vmatprep.subr.mxu0 0.0
  %1379 = vmatpush1.msra.mxu0 0.0
  %1380 = vmatprep.mubr.f32.mxu0 0.0
  %1381 = vmatmul.mubr.f32.gmra.mrb[0].mxu0 %v1302
  %v1382 = vpop.f32.mrb[0].mxu0
  %v1383 = vadd.f32 %v1298, %v1382
  %v1384 = vpop.f32.mrb[0].mxu0
  %v1385 = vadd.f32 %v1298, %v1384
  %1386 = vdwg.mxu0
  %1387 = vmatprep.subr.mxu0 %v1314
  %1388 = vmatpush1.msra.mxu0 %v1311
  %1389 = vmatprep.subr.mxu0 0.0
  %1390 = vmatpush1.msra.mxu0 0.0
  %1391 = vmatprep.subr.mxu0 0.0
  %1392 = vmatpush1.msra.mxu0 0.0
  %1393 = vmatprep.subr.mxu0 0.0
  %1394 = vmatpush1.msra.mxu0 0.0
  %1395 = vmatprep.subr.mxu0 0.0
  %1396 = vmatpush1.msra.mxu0 0.0
  %1397 = vmatprep.subr.mxu0 0.0
  %1398 = vmatpush1.msra.mxu0 0.0
  %1399 = vmatprep.subr.mxu0 0.0
  %1400 = vmatpush1.msra.mxu0 0.0
  %1401 = vmatprep.subr.mxu0 0.0
  %1402 = vmatpush1.msra.mxu0 0.0
  %1403 = vmatprep.subr.mxu0 0.0
  %1404 = vmatpush1.msra.mxu0 0.0
  %1405 = vmatprep.subr.mxu0 0.0
  %1406 = vmatpush1.msra.mxu0 0.0
  %1407 = vmatprep.subr.mxu0 0.0
  %1408 = vmatpush1.msra.mxu0 0.0
  %1409 = vmatprep.subr.mxu0 0.0
  %1410 = vmatpush1.msra.mxu0 0.0
  %1411 = vmatprep.subr.mxu0 0.0
  %1412 = vmatpush1.msra.mxu0 0.0
  %1413 = vmatprep.subr.mxu0 0.0
  %1414 = vmatpush1.msra.mxu0 0.0
  %1415 = vmatprep.subr.mxu0 0.0
  %1416 = vmatpush1.msra.mxu0 0.0
  %1417 = vmatprep.subr.mxu0 0.0
  %1418 = vmatpush1.msra.mxu0 0.0
  %1419 = vmatprep.subr.mxu0 0.0
  %1420 = vmatpush1.msra.mxu0 0.0
  %1421 = vmatprep.subr.mxu0 0.0
  %1422 = vmatpush1.msra.mxu0 0.0
  %1423 = vmatprep.subr.mxu0 0.0
  %1424 = vmatpush1.msra.mxu0 0.0
  %1425 = vmatprep.subr.mxu0 0.0
  %1426 = vmatpush1.msra.mxu0 0.0
  %1427 = vmatprep.subr.mxu0 0.0
  %1428 = vmatpush1.msra.mxu0 0.0
  %1429 = vmatprep.subr.mxu0 0.0
  %1430 = vmatpush1.msra.mxu0 0.0
  %1431 = vmatprep.subr.mxu0 0.0
  %1432 = vmatpush1.msra.mxu0 0.0
  %1433 = vmatprep.subr.mxu0 0.0
  %1434 = vmatpush1.msra.mxu0 0.0
  %1435 = vmatprep.subr.mxu0 0.0
  %1436 = vmatpush1.msra.mxu0 0.0
  %1437 = vmatprep.subr.mxu0 0.0
  %1438 = vmatpush1.msra.mxu0 0.0
  %1439 = vmatprep.subr.mxu0 0.0
  %1440 = vmatpush1.msra.mxu0 0.0
  %1441 = vmatprep.subr.mxu0 0.0
  %1442 = vmatpush1.msra.mxu0 0.0
  %1443 = vmatprep.subr.mxu0 0.0
  %1444 = vmatpush1.msra.mxu0 0.0
  %1445 = vmatprep.subr.mxu0 0.0
  %1446 = vmatpush1.msra.mxu0 0.0
  %1447 = vmatprep.subr.mxu0 0.0
  %1448 = vmatpush1.msra.mxu0 0.0
  %1449 = vmatprep.subr.mxu0 0.0
  %1450 = vmatpush1.msra.mxu0 0.0
  %1451 = vmatprep.mubr.f32.mxu0 0.0
  %1452 = vmatmul.mubr.f32.gmra.mrb[0].mxu0 %v1302
  %v1453 = vpop.f32.mrb[0].mxu0
  %v1454 = vadd.f32 %v1298, %v1453
  %v1455 = vpop.f32.mrb[0].mxu0
  %v1456 = vadd.f32 %v1298, %v1455
  %1457 = vdwg.mxu0
  %v1458 = vld [vmem:[%s8] sm:$0xff]
  %v1459 = vld [vmem:[%s8 + $0x8] sm:$0xff]
  %v1460 = vld [vmem:[%s8 + $0x10] sm:$0xff]
  %v1461 = vld [vmem:[%s8 + $0x18] sm:$0xff]
  %v1462 = vld [vmem:[%s8 + $0x20] sm:$0xff]
  %v1463 = vld [vmem:[%s8 + $0x28] sm:$0xff]
  %v1464 = vld [vmem:[%s8 + $0x30] sm:$0xff]
  %v1465 = vld [vmem:[%s8 + $0x38] sm:$0xff]
  %v1466 = vld [vmem:[%s8 + $0x40] sm:$0xff]
  %v1467 = vld [vmem:[%s8 + $0x48] sm:$0xff]
  %v1468 = vld [vmem:[%s8 + $0x50] sm:$0xff]
  %v1469 = vld [vmem:[%s8 + $0x58] sm:$0xff]
  %v1470 = vld [vmem:[%s8 + $0x60] sm:$0xff]
  %v1471 = vld [vmem:[%s8 + $0x68] sm:$0xff]
  %v1472 = vld [vmem:[%s8 + $0x70] sm:$0xff]
  %v1473 = vld [vmem:[%s8 + $0x78] sm:$0xff]
  %v1474 = vld [vmem:[%s8 + $0x80] sm:$0xff]
  %v1475 = vld [vmem:[%s8 + $0x88] sm:$0xff]
  %v1476 = vld [vmem:[%s8 + $0x90] sm:$0xff]
  %v1477 = vld [vmem:[%s8 + $0x98] sm:$0xff]
  %v1478 = vld [vmem:[%s8 + $0xa0] sm:$0xff]
  %v1479 = vld [vmem:[%s8 + $0xa8] sm:$0xff]
  %v1480 = vld [vmem:[%s8 + $0xb0] sm:$0xff]
  %v1481 = vld [vmem:[%s8 + $0xb8] sm:$0xff]
  %v1482 = vld [vmem:[%s8 + $0xc0] sm:$0xff]
  %v1483 = vld [vmem:[%s8 + $0xc8] sm:$0xff]
  %v1484 = vld [vmem:[%s8 + $0xd0] sm:$0xff]
  %v1485 = vld [vmem:[%s8 + $0xd8] sm:$0xff]
  %v1486 = vld [vmem:[%s8 + $0xe0] sm:$0xff]
  %v1487 = vld [vmem:[%s8 + $0xe8] sm:$0xff]
  %v1488 = vld [vmem:[%s8 + $0xf0] sm:$0xff]
  %v1489 = vld [vmem:[%s8 + $0xf8] sm:$0xff]
  %1490 = vmatprep.subr.mxu0 0.0
  %1491 = vmatpush1.msra.mxu0 %v1458
  %1492 = vmatprep.subr.mxu0 0.0
  %1493 = vmatpush1.msra.mxu0 %v1459
  %1494 = vmatprep.subr.mxu0 0.0
  %1495 = vmatpush1.msra.mxu0 %v1460
  %1496 = vmatprep.subr.mxu0 0.0
  %1497 = vmatpush1.msra.mxu0 %v1461
  %1498 = vmatprep.subr.mxu0 0.0
  %1499 = vmatpush1.msra.mxu0 %v1462
  %1500 = vmatprep.subr.mxu0 0.0
  %1501 = vmatpush1.msra.mxu0 %v1463
  %1502 = vmatprep.subr.mxu0 0.0
  %1503 = vmatpush1.msra.mxu0 %v1464
  %1504 = vmatprep.subr.mxu0 0.0
  %1505 = vmatpush1.msra.mxu0 %v1465
  %1506 = vmatprep.subr.mxu0 0.0
  %1507 = vmatpush1.msra.mxu0 %v1466
  %1508 = vmatprep.subr.mxu0 0.0
  %1509 = vmatpush1.msra.mxu0 %v1467
  %1510 = vmatprep.subr.mxu0 0.0
  %1511 = vmatpush1.msra.mxu0 %v1468
  %1512 = vmatprep.subr.mxu0 0.0
  %1513 = vmatpush1.msra.mxu0 %v1469
  %1514 = vmatprep.subr.mxu0 0.0
  %1515 = vmatpush1.msra.mxu0 %v1470
  %1516 = vmatprep.subr.mxu0 0.0
  %1517 = vmatpush1.msra.mxu0 %v1471
  %1518 = vmatprep.subr.mxu0 0.0
  %1519 = vmatpush1.msra.mxu0 %v1472
  %1520 = vmatprep.subr.mxu0 0.0
  %1521 = vmatpush1.msra.mxu0 %v1473
  %1522 = vmatprep.subr.mxu0 0.0
  %1523 = vmatpush1.msra.mxu0 %v1474
  %1524 = vmatprep.subr.mxu0 0.0
  %1525 = vmatpush1.msra.mxu0 %v1475
  %1526 = vmatprep.subr.mxu0 0.0
  %1527 = vmatpush1.msra.mxu0 %v1476
  %1528 = vmatprep.subr.mxu0 0.0
  %1529 = vmatpush1.msra.mxu0 %v1477
  %1530 = vmatprep.subr.mxu0 0.0
  %1531 = vmatpush1.msra.mxu0 %v1478
  %1532 = vmatprep.subr.mxu0 0.0
  %1533 = vmatpush1.msra.mxu0 %v1479
  %1534 = vmatprep.subr.mxu0 0.0
  %1535 = vmatpush1.msra.mxu0 %v1480
  %1536 = vmatprep.subr.mxu0 0.0
  %1537 = vmatpush1.msra.mxu0 %v1481
  %1538 = vmatprep.subr.mxu0 0.0
  %1539 = vmatpush1.msra.mxu0 %v1482
  %1540 = vmatprep.subr.mxu0 0.0
  %1541 = vmatpush1.msra.mxu0 %v1483
  %1542 = vmatprep.subr.mxu0 0.0
  %1543 = vmatpush1.msra.mxu0 %v1484
  %1544 = vmatprep.subr.mxu0 0.0
  %1545 = vmatpush1.msra.mxu0 %v1485
  %1546 = vmatprep.subr.mxu0 0.0
  %1547 = vmatpush1.msra.mxu0 %v1486
  %1548 = vmatprep.subr.mxu0 0.0
  %1549 = vmatpush1.msra.mxu0 %v1487
  %1550 = vmatprep.subr.mxu0 0.0
  %1551 = vmatpush1.msra.mxu0 %v1488
  %1552 = vmatprep.subr.mxu0 0.0
  %1553 = vmatpush1.msra.mxu0 %v1489
  %1554 = vmatprep.mubr.f32.mxu0 %v1385
  %1555 = vmatmul.mubr.f32.gmra.mrb[0].mxu0 %v1383
  %v1556 = vpop.f32.mrb[0].mxu0
  %v1557 = vadd.f32 0.0, %v1556
  %v1558 = vpop.f32.mrb[0].mxu0
  %1559 = vdwg.mxu0
  %1560 = vmatprep.subr.mxu0 0.0
  %1561 = vmatpush1.msra.mxu0 %v1458
  %1562 = vmatprep.subr.mxu0 0.0
  %1563 = vmatpush1.msra.mxu0 %v1459
  %1564 = vmatprep.subr.mxu0 0.0
  %1565 = vmatpush1.msra.mxu0 %v1460
  %1566 = vmatprep.subr.mxu0 0.0
  %1567 = vmatpush1.msra.mxu0 %v1461
  %1568 = vmatprep.subr.mxu0 0.0
  %1569 = vmatpush1.msra.mxu0 %v1462
  %1570 = vmatprep.subr.mxu0 0.0
  %1571 = vmatpush1.msra.mxu0 %v1463
  %1572 = vmatprep.subr.mxu0 0.0
  %1573 = vmatpush1.msra.mxu0 %v1464
  %1574 = vmatprep.subr.mxu0 0.0
  %1575 = vmatpush1.msra.mxu0 %v1465
  %1576 = vmatprep.subr.mxu0 0.0
  %1577 = vmatpush1.msra.mxu0 %v1466
  %1578 = vmatprep.subr.mxu0 0.0
  %1579 = vmatpush1.msra.mxu0 %v1467
  %1580 = vmatprep.subr.mxu0 0.0
  %1581 = vmatpush1.msra.mxu0 %v1468
  %1582 = vmatprep.subr.mxu0 0.0
  %1583 = vmatpush1.msra.mxu0 %v1469
  %1584 = vmatprep.subr.mxu0 0.0
  %1585 = vmatpush1.msra.mxu0 %v1470
  %1586 = vmatprep.subr.mxu0 0.0
  %1587 = vmatpush1.msra.mxu0 %v1471
  %1588 = vmatprep.subr.mxu0 0.0
  %1589 = vmatpush1.msra.mxu0 %v1472
  %1590 = vmatprep.subr.mxu0 0.0
  %1591 = vmatpush1.msra.mxu0 %v1473
  %1592 = vmatprep.subr.mxu0 0.0
  %1593 = vmatpush1.msra.mxu0 %v1474
  %1594 = vmatprep.subr.mxu0 0.0
  %1595 = vmatpush1.msra.mxu0 %v1475
  %1596 = vmatprep.subr.mxu0 0.0
  %1597 = vmatpush1.msra.mxu0 %v1476
  %1598 = vmatprep.subr.mxu0 0.0
  %1599 = vmatpush1.msra.mxu0 %v1477
  %1600 = vmatprep.subr.mxu0 0.0
  %1601 = vmatpush1.msra.mxu0 %v1478
  %1602 = vmatprep.subr.mxu0 0.0
  %1603 = vmatpush1.msra.mxu0 %v1479
  %1604 = vmatprep.subr.mxu0 0.0
  %1605 = vmatpush1.msra.mxu0 %v1480
  %1606 = vmatprep.subr.mxu0 0.0
  %1607 = vmatpush1.msra.mxu0 %v1481
  %1608 = vmatprep.subr.mxu0 0.0
  %1609 = vmatpush1.msra.mxu0 %v1482
  %1610 = vmatprep.subr.mxu0 0.0
  %1611 = vmatpush1.msra.mxu0 %v1483
  %1612 = vmatprep.subr.mxu0 0.0
  %1613 = vmatpush1.msra.mxu0 %v1484
  %1614 = vmatprep.subr.mxu0 0.0
  %1615 = vmatpush1.msra.mxu0 %v1485
  %1616 = vmatprep.subr.mxu0 0.0
  %1617 = vmatpush1.msra.mxu0 %v1486
  %1618 = vmatprep.subr.mxu0 0.0
  %1619 = vmatpush1.msra.mxu0 %v1487
  %1620 = vmatprep.subr.mxu0 0.0
  %1621 = vmatpush1.msra.mxu0 %v1488
  %1622 = vmatprep.subr.mxu0 0.0
  %1623 = vmatpush1.msra.mxu0 %v1489
  %1624 = vmatprep.mubr.f32.mxu0 %v1456
  %1625 = vmatmul.mubr.f32.gmra.mrb[0].mxu0 %v1454
  %v1626 = vpop.f32.mrb[0].mxu0
  %v1627 = vadd.f32 0.0, %v1626
  %v1628 = vpop.f32.mrb[0].mxu0
  %1629 = vdwg.mxu0
  %1631 = vrot.lane.b32.xlu0 %v1627, 64
  %v1632 = vpop.permute.xlu0 %1631
  %v1634 = vsel %vm1064, %v1557, %v1632
  %v1635 = vadd.f32 %v1137, %v1634
  %1636 = vmatprep.subr.mxu0 0.0
  %1637 = vmatpush1.msra.mxu0 %v454
  %1638 = vmatprep.subr.mxu0 0.0
  %1639 = vmatpush1.msra.mxu0 0.0
  %1640 = vmatprep.subr.mxu0 0.0
  %1641 = vmatpush1.msra.mxu0 0.0
  %1642 = vmatprep.subr.mxu0 0.0
  %1643 = vmatpush1.msra.mxu0 0.0
  %1644 = vmatprep.subr.mxu0 0.0
  %1645 = vmatpush1.msra.mxu0 0.0
  %1646 = vmatprep.subr.mxu0 0.0
  %1647 = vmatpush1.msra.mxu0 0.0
  %1648 = vmatprep.subr.mxu0 0.0
  %1649 = vmatpush1.msra.mxu0 0.0
  %1650 = vmatprep.subr.mxu0 0.0
  %1651 = vmatpush1.msra.mxu0 0.0
  %1652 = vmatprep.subr.mxu0 0.0
  %1653 = vmatpush1.msra.mxu0 0.0
  %1654 = vmatprep.subr.mxu0 0.0
  %1655 = vmatpush1.msra.mxu0 0.0
  %1656 = vmatprep.subr.mxu0 0.0
  %1657 = vmatpush1.msra.mxu0 0.0
  %1658 = vmatprep.subr.mxu0 0.0
  %1659 = vmatpush1.msra.mxu0 0.0
  %1660 = vmatprep.subr.mxu0 0.0
  %1661 = vmatpush1.msra.mxu0 0.0
  %1662 = vmatprep.subr.mxu0 0.0
  %1663 = vmatpush1.msra.mxu0 0.0
  %1664 = vmatprep.subr.mxu0 0.0
  %1665 = vmatpush1.msra.mxu0 0.0
  %1666 = vmatprep.subr.mxu0 0.0
  %1667 = vmatpush1.msra.mxu0 0.0
  %1668 = vmatprep.subr.mxu0 0.0
  %1669 = vmatpush1.msra.mxu0 0.0
  %1670 = vmatprep.subr.mxu0 0.0
  %1671 = vmatpush1.msra.mxu0 0.0
  %1672 = vmatprep.subr.mxu0 0.0
  %1673 = vmatpush1.msra.mxu0 0.0
  %1674 = vmatprep.subr.mxu0 0.0
  %1675 = vmatpush1.msra.mxu0 0.0
  %1676 = vmatprep.subr.mxu0 0.0
  %1677 = vmatpush1.msra.mxu0 0.0
  %1678 = vmatprep.subr.mxu0 0.0
  %1679 = vmatpush1.msra.mxu0 0.0
  %1680 = vmatprep.subr.mxu0 0.0
  %1681 = vmatpush1.msra.mxu0 0.0
  %1682 = vmatprep.subr.mxu0 0.0
  %1683 = vmatpush1.msra.mxu0 0.0
  %1684 = vmatprep.subr.mxu0 0.0
  %1685 = vmatpush1.msra.mxu0 0.0
  %1686 = vmatprep.subr.mxu0 0.0
  %1687 = vmatpush1.msra.mxu0 0.0
  %1688 = vmatprep.subr.mxu0 0.0
  %1689 = vmatpush1.msra.mxu0 0.0
  %1690 = vmatprep.subr.mxu0 0.0
  %1691 = vmatpush1.msra.mxu0 0.0
  %1692 = vmatprep.subr.mxu0 0.0
  %1693 = vmatpush1.msra.mxu0 0.0
  %1694 = vmatprep.subr.mxu0 0.0
  %1695 = vmatpush1.msra.mxu0 0.0
  %1696 = vmatprep.subr.mxu0 0.0
  %1697 = vmatpush1.msra.mxu0 0.0
  %1698 = vmatprep.subr.mxu0 0.0
  %1699 = vmatpush1.msra.mxu0 0.0
  %1700 = vmatprep.mubr.f32.mxu0 0.0
  %1701 = vmatmul.mubr.f32.gmra.mrb[0].mxu0 %v370
  %v1702 = vpop.f32.mrb[0].mxu0
  %v1703 = vadd.f32 %v366, %v1702
  %v1704 = vpop.f32.mrb[0].mxu0
  %1705 = vdwg.mxu0
  %v1707 = vsel %vm59, %v1703, 0
  %1709 = vmatprep.subr.mxu0 0.0
  %1710 = vmatpush1.msra.mxu0 %v1707
  %1711 = vmatprep.subr.mxu0 0.0
  %1712 = vmatpush1.msra.mxu0 0.0
  %1713 = vmatprep.subr.mxu0 0.0
  %1714 = vmatpush1.msra.mxu0 0.0
  %1715 = vmatprep.subr.mxu0 0.0
  %1716 = vmatpush1.msra.mxu0 0.0
  %1717 = vmatprep.subr.mxu0 0.0
  %1718 = vmatpush1.msra.mxu0 0.0
  %1719 = vmatprep.subr.mxu0 0.0
  %1720 = vmatpush1.msra.mxu0 0.0
  %1721 = vmatprep.subr.mxu0 0.0
  %1722 = vmatpush1.msra.mxu0 0.0
  %1723 = vmatprep.subr.mxu0 0.0
  %1724 = vmatpush1.msra.mxu0 0.0
  %1725 = vmatprep.subr.mxu0 0.0
  %1726 = vmatpush1.msra.mxu0 0.0
  %1727 = vmatprep.subr.mxu0 0.0
  %1728 = vmatpush1.msra.mxu0 0.0
  %1729 = vmatprep.subr.mxu0 0.0
  %1730 = vmatpush1.msra.mxu0 0.0
  %1731 = vmatprep.subr.mxu0 0.0
  %1732 = vmatpush1.msra.mxu0 0.0
  %1733 = vmatprep.subr.mxu0 0.0
  %1734 = vmatpush1.msra.mxu0 0.0
  %1735 = vmatprep.subr.mxu0 0.0
  %1736 = vmatpush1.msra.mxu0 0.0
  %1737 = vmatprep.subr.mxu0 0.0
  %1738 = vmatpush1.msra.mxu0 0.0
  %1739 = vmatprep.subr.mxu0 0.0
  %1740 = vmatpush1.msra.mxu0 0.0
  %1741 = vmatprep.subr.mxu0 0.0
  %1742 = vmatpush1.msra.mxu0 0.0
  %1743 = vmatprep.subr.mxu0 0.0
  %1744 = vmatpush1.msra.mxu0 0.0
  %1745 = vmatprep.subr.mxu0 0.0
  %1746 = vmatpush1.msra.mxu0 0.0
  %1747 = vmatprep.subr.mxu0 0.0
  %1748 = vmatpush1.msra.mxu0 0.0
  %1749 = vmatprep.subr.mxu0 0.0
  %1750 = vmatpush1.msra.mxu0 0.0
  %1751 = vmatprep.subr.mxu0 0.0
  %1752 = vmatpush1.msra.mxu0 0.0
  %1753 = vmatprep.subr.mxu0 0.0
  %1754 = vmatpush1.msra.mxu0 0.0
  %1755 = vmatprep.subr.mxu0 0.0
  %1756 = vmatpush1.msra.mxu0 0.0
  %1757 = vmatprep.subr.mxu0 0.0
  %1758 = vmatpush1.msra.mxu0 0.0
  %1759 = vmatprep.subr.mxu0 0.0
  %1760 = vmatpush1.msra.mxu0 0.0
  %1761 = vmatprep.subr.mxu0 0.0
  %1762 = vmatpush1.msra.mxu0 0.0
  %1763 = vmatprep.subr.mxu0 0.0
  %1764 = vmatpush1.msra.mxu0 0.0
  %1765 = vmatprep.subr.mxu0 0.0
  %1766 = vmatpush1.msra.mxu0 0.0
  %1767 = vmatprep.subr.mxu0 0.0
  %1768 = vmatpush1.msra.mxu0 0.0
  %1769 = vmatprep.subr.mxu0 0.0
  %1770 = vmatpush1.msra.mxu0 0.0
  %1771 = vmatprep.subr.mxu0 0.0
  %1772 = vmatpush1.msra.mxu0 0.0
  %1773 = vmatprep.mubr.f32.mxu0 0.0
  %1774 = vmatmul.mubr.f32.gmra.mrb[0].mxu0 %v451
  %v1775 = vpop.f32.mrb[0].mxu0
  %v1776 = vadd.f32 %v447, %v1775
  %v1777 = vpop.f32.mrb[0].mxu0
  %1778 = vdwg.mxu0
  %v1780 = vsel %vm530, %v1776, 0
  %1782 = vmatprep.subr.mxu0 %v527
  %1783 = vmatpush1.msra.mxu0 %v526
  %1784 = vmatprep.subr.mxu0 %v529
  %1785 = vmatpush1.msra.mxu0 %v528
  %1786 = vmatprep.subr.mxu0 0.0
  %1787 = vmatpush1.msra.mxu0 0.0
  %1788 = vmatprep.subr.mxu0 0.0
  %1789 = vmatpush1.msra.mxu0 0.0
  %1790 = vmatprep.subr.mxu0 0.0
  %1791 = vmatpush1.msra.mxu0 0.0
  %1792 = vmatprep.subr.mxu0 0.0
  %1793 = vmatpush1.msra.mxu0 0.0
  %1794 = vmatprep.subr.mxu0 0.0
  %1795 = vmatpush1.msra.mxu0 0.0
  %1796 = vmatprep.subr.mxu0 0.0
  %1797 = vmatpush1.msra.mxu0 0.0
  %1798 = vmatprep.subr.mxu0 0.0
  %1799 = vmatpush1.msra.mxu0 0.0
  %1800 = vmatprep.subr.mxu0 0.0
  %1801 = vmatpush1.msra.mxu0 0.0
  %1802 = vmatprep.subr.mxu0 0.0
  %1803 = vmatpush1.msra.mxu0 0.0
  %1804 = vmatprep.subr.mxu0 0.0
  %1805 = vmatpush1.msra.mxu0 0.0
  %1806 = vmatprep.subr.mxu0 0.0
  %1807 = vmatpush1.msra.mxu0 0.0
  %1808 = vmatprep.subr.mxu0 0.0
  %1809 = vmatpush1.msra.mxu0 0.0
  %1810 = vmatprep.subr.mxu0 0.0
  %1811 = vmatpush1.msra.mxu0 0.0
  %1812 = vmatprep.subr.mxu0 0.0
  %1813 = vmatpush1.msra.mxu0 0.0
  %1814 = vmatprep.subr.mxu0 0.0
  %1815 = vmatpush1.msra.mxu0 0.0
  %1816 = vmatprep.subr.mxu0 0.0
  %1817 = vmatpush1.msra.mxu0 0.0
  %1818 = vmatprep.subr.mxu0 0.0
  %1819 = vmatpush1.msra.mxu0 0.0
  %1820 = vmatprep.subr.mxu0 0.0
  %1821 = vmatpush1.msra.mxu0 0.0
  %1822 = vmatprep.subr.mxu0 0.0
  %1823 = vmatpush1.msra.mxu0 0.0
  %1824 = vmatprep.subr.mxu0 0.0
  %1825 = vmatpush1.msra.mxu0 0.0
  %1826 = vmatprep.subr.mxu0 0.0
  %1827 = vmatpush1.msra.mxu0 0.0
  %1828 = vmatprep.subr.mxu0 0.0
  %1829 = vmatpush1.msra.mxu0 0.0
  %1830 = vmatprep.subr.mxu0 0.0
  %1831 = vmatpush1.msra.mxu0 0.0
  %1832 = vmatprep.subr.mxu0 0.0
  %1833 = vmatpush1.msra.mxu0 0.0
  %1834 = vmatprep.subr.mxu0 0.0
  %1835 = vmatpush1.msra.mxu0 0.0
  %1836 = vmatprep.subr.mxu0 0.0
  %1837 = vmatpush1.msra.mxu0 0.0
  %1838 = vmatprep.subr.mxu0 0.0
  %1839 = vmatpush1.msra.mxu0 0.0
  %1840 = vmatprep.subr.mxu0 0.0
  %1841 = vmatpush1.msra.mxu0 0.0
  %1842 = vmatprep.subr.mxu0 0.0
  %1843 = vmatpush1.msra.mxu0 0.0
  %1844 = vmatprep.subr.mxu0 0.0
  %1845 = vmatpush1.msra.mxu0 0.0
  %1846 = vmatprep.mubr.f32.mxu0 0.0
  %1847 = vmatmul.mubr.f32.gmra.mrb[0].mxu0 %v1780
  %v1848 = vpop.f32.mrb[0].mxu0
  %v1849 = vadd.f32 0.0, %v1848
  %v1850 = vpop.f32.mrb[0].mxu0
  %v1851 = vadd.f32 0.0, %v1850
  %1852 = vdwg.mxu0
  %1853 = vrot.lane.b32.xlu0 %v1776, 112
  %v1854 = vpop.permute.xlu0 %1853
  %v1855 = vsel %vm530, %v1854, 0
  %1857 = vmatprep.subr.mxu0 %v527
  %1858 = vmatpush1.msra.mxu0 %v526
  %1859 = vmatprep.subr.mxu0 %v529
  %1860 = vmatpush1.msra.mxu0 %v528
  %1861 = vmatprep.subr.mxu0 0.0
  %1862 = vmatpush1.msra.mxu0 0.0
  %1863 = vmatprep.subr.mxu0 0.0
  %1864 = vmatpush1.msra.mxu0 0.0
  %1865 = vmatprep.subr.mxu0 0.0
  %1866 = vmatpush1.msra.mxu0 0.0
  %1867 = vmatprep.subr.mxu0 0.0
  %1868 = vmatpush1.msra.mxu0 0.0
  %1869 = vmatprep.subr.mxu0 0.0
  %1870 = vmatpush1.msra.mxu0 0.0
  %1871 = vmatprep.subr.mxu0 0.0
  %1872 = vmatpush1.msra.mxu0 0.0
  %1873 = vmatprep.subr.mxu0 0.0
  %1874 = vmatpush1.msra.mxu0 0.0
  %1875 = vmatprep.subr.mxu0 0.0
  %1876 = vmatpush1.msra.mxu0 0.0
  %1877 = vmatprep.subr.mxu0 0.0
  %1878 = vmatpush1.msra.mxu0 0.0
  %1879 = vmatprep.subr.mxu0 0.0
  %1880 = vmatpush1.msra.mxu0 0.0
  %1881 = vmatprep.subr.mxu0 0.0
  %1882 = vmatpush1.msra.mxu0 0.0
  %1883 = vmatprep.subr.mxu0 0.0
  %1884 = vmatpush1.msra.mxu0 0.0
  %1885 = vmatprep.subr.mxu0 0.0
  %1886 = vmatpush1.msra.mxu0 0.0
  %1887 = vmatprep.subr.mxu0 0.0
  %1888 = vmatpush1.msra.mxu0 0.0
  %1889 = vmatprep.subr.mxu0 0.0
  %1890 = vmatpush1.msra.mxu0 0.0
  %1891 = vmatprep.subr.mxu0 0.0
  %1892 = vmatpush1.msra.mxu0 0.0
  %1893 = vmatprep.subr.mxu0 0.0
  %1894 = vmatpush1.msra.mxu0 0.0
  %1895 = vmatprep.subr.mxu0 0.0
  %1896 = vmatpush1.msra.mxu0 0.0
  %1897 = vmatprep.subr.mxu0 0.0
  %1898 = vmatpush1.msra.mxu0 0.0
  %1899 = vmatprep.subr.mxu0 0.0
  %1900 = vmatpush1.msra.mxu0 0.0
  %1901 = vmatprep.subr.mxu0 0.0
  %1902 = vmatpush1.msra.mxu0 0.0
  %1903 = vmatprep.subr.mxu0 0.0
  %1904 = vmatpush1.msra.mxu0 0.0
  %1905 = vmatprep.subr.mxu0 0.0
  %1906 = vmatpush1.msra.mxu0 0.0
  %1907 = vmatprep.subr.mxu0 0.0
  %1908 = vmatpush1.msra.mxu0 0.0
  %1909 = vmatprep.subr.mxu0 0.0
  %1910 = vmatpush1.msra.mxu0 0.0
  %1911 = vmatprep.subr.mxu0 0.0
  %1912 = vmatpush1.msra.mxu0 0.0
  %1913 = vmatprep.subr.mxu0 0.0
  %1914 = vmatpush1.msra.mxu0 0.0
  %1915 = vmatprep.subr.mxu0 0.0
  %1916 = vmatpush1.msra.mxu0 0.0
  %1917 = vmatprep.subr.mxu0 0.0
  %1918 = vmatpush1.msra.mxu0 0.0
  %1919 = vmatprep.subr.mxu0 0.0
  %1920 = vmatpush1.msra.mxu0 0.0
  %1921 = vmatprep.mubr.f32.mxu0 0.0
  %1922 = vmatmul.mubr.f32.gmra.mrb[0].mxu0 %v1855
  %v1923 = vpop.f32.mrb[0].mxu0
  %v1924 = vadd.f32 0.0, %v1923
  %v1925 = vpop.f32.mrb[0].mxu0
  %v1926 = vadd.f32 0.0, %v1925
  %1927 = vdwg.mxu0
  %v1928 = vadd.f32 %v1217, %v1849
  %v1929 = vadd.f32 %v1219, %v1851
  %v1930 = vadd.f32 %v1288, %v1924
  %v1931 = vadd.f32 %v1290, %v1926
  %1932 = vset.pattern.permute.xlu0 6
  %1933 = vperm.xlu0 %1932, %v40
  %v1934 = vpop.permute.xlu0 %1933
  %1936 = vrot.lane.b32.xlu0 %v39, 80
  %v1937 = vpop.permute.xlu0 %1936
  %v1938 = vsel %vm55, %v1937, 0
  %v1941 = vsel %vm59, %v1928, 0
  %v1944 = vsel %vm59, %v1929, 0
  %v1947 = vsel %vm59, %v1930, 0
  %v1950 = vsel %vm59, %v1931, 0
  %1952 = vmatprep.subr.mxu0 %v1944
  %1953 = vmatpush1.msra.mxu0 %v1941
  %1954 = vmatprep.subr.mxu0 0.0
  %1955 = vmatpush1.msra.mxu0 0.0
  %1956 = vmatprep.subr.mxu0 0.0
  %1957 = vmatpush1.msra.mxu0 0.0
  %1958 = vmatprep.subr.mxu0 0.0
  %1959 = vmatpush1.msra.mxu0 0.0
  %1960 = vmatprep.subr.mxu0 0.0
  %1961 = vmatpush1.msra.mxu0 0.0
  %1962 = vmatprep.subr.mxu0 0.0
  %1963 = vmatpush1.msra.mxu0 0.0
  %1964 = vmatprep.subr.mxu0 0.0
  %1965 = vmatpush1.msra.mxu0 0.0
  %1966 = vmatprep.subr.mxu0 0.0
  %1967 = vmatpush1.msra.mxu0 0.0
  %1968 = vmatprep.subr.mxu0 0.0
  %1969 = vmatpush1.msra.mxu0 0.0
  %1970 = vmatprep.subr.mxu0 0.0
  %1971 = vmatpush1.msra.mxu0 0.0
  %1972 = vmatprep.subr.mxu0 0.0
  %1973 = vmatpush1.msra.mxu0 0.0
  %1974 = vmatprep.subr.mxu0 0.0
  %1975 = vmatpush1.msra.mxu0 0.0
  %1976 = vmatprep.subr.mxu0 0.0
  %1977 = vmatpush1.msra.mxu0 0.0
  %1978 = vmatprep.subr.mxu0 0.0
  %1979 = vmatpush1.msra.mxu0 0.0
  %1980 = vmatprep.subr.mxu0 0.0
  %1981 = vmatpush1.msra.mxu0 0.0
  %1982 = vmatprep.subr.mxu0 0.0
  %1983 = vmatpush1.msra.mxu0 0.0
  %1984 = vmatprep.subr.mxu0 0.0
  %1985 = vmatpush1.msra.mxu0 0.0
  %1986 = vmatprep.subr.mxu0 0.0
  %1987 = vmatpush1.msra.mxu0 0.0
  %1988 = vmatprep.subr.mxu0 0.0
  %1989 = vmatpush1.msra.mxu0 0.0
  %1990 = vmatprep.subr.mxu0 0.0
  %1991 = vmatpush1.msra.mxu0 0.0
  %1992 = vmatprep.subr.mxu0 0.0
  %1993 = vmatpush1.msra.mxu0 0.0
  %1994 = vmatprep.subr.mxu0 0.0
  %1995 = vmatpush1.msra.mxu0 0.0
  %1996 = vmatprep.subr.mxu0 0.0
  %1997 = vmatpush1.msra.mxu0 0.0
  %1998 = vmatprep.subr.mxu0 0.0
  %1999 = vmatpush1.msra.mxu0 0.0
  %2000 = vmatprep.subr.mxu0 0.0
  %2001 = vmatpush1.msra.mxu0 0.0
  %2002 = vmatprep.subr.mxu0 0.0
  %2003 = vmatpush1.msra.mxu0 0.0
  %2004 = vmatprep.subr.mxu0 0.0
  %2005 = vmatpush1.msra.mxu0 0.0
  %2006 = vmatprep.subr.mxu0 0.0
  %2007 = vmatpush1.msra.mxu0 0.0
  %2008 = vmatprep.subr.mxu0 0.0
  %2009 = vmatpush1.msra.mxu0 0.0
  %2010 = vmatprep.subr.mxu0 0.0
  %2011 = vmatpush1.msra.mxu0 0.0
  %2012 = vmatprep.subr.mxu0 0.0
  %2013 = vmatpush1.msra.mxu0 0.0
  %2014 = vmatprep.subr.mxu0 0.0
  %2015 = vmatpush1.msra.mxu0 0.0
  %2016 = vmatprep.mubr.f32.mxu0 0.0
  %2017 = vmatmul.mubr.f32.gmra.mrb[0].mxu0 %v1938
  %v2018 = vpop.f32.mrb[0].mxu0
  %v2019 = vadd.f32 %v1934, %v2018
  %v2020 = vpop.f32.mrb[0].mxu0
  %v2021 = vadd.f32 %v1934, %v2020
  %2022 = vdwg.mxu0
  %2023 = vmatprep.subr.mxu0 %v1950
  %2024 = vmatpush1.msra.mxu0 %v1947
  %2025 = vmatprep.subr.mxu0 0.0
  %2026 = vmatpush1.msra.mxu0 0.0
  %2027 = vmatprep.subr.mxu0 0.0
  %2028 = vmatpush1.msra.mxu0 0.0
  %2029 = vmatprep.subr.mxu0 0.0
  %2030 = vmatpush1.msra.mxu0 0.0
  %2031 = vmatprep.subr.mxu0 0.0
  %2032 = vmatpush1.msra.mxu0 0.0
  %2033 = vmatprep.subr.mxu0 0.0
  %2034 = vmatpush1.msra.mxu0 0.0
  %2035 = vmatprep.subr.mxu0 0.0
  %2036 = vmatpush1.msra.mxu0 0.0
  %2037 = vmatprep.subr.mxu0 0.0
  %2038 = vmatpush1.msra.mxu0 0.0
  %2039 = vmatprep.subr.mxu0 0.0
  %2040 = vmatpush1.msra.mxu0 0.0
  %2041 = vmatprep.subr.mxu0 0.0
  %2042 = vmatpush1.msra.mxu0 0.0
  %2043 = vmatprep.subr.mxu0 0.0
  %2044 = vmatpush1.msra.mxu0 0.0
  %2045 = vmatprep.subr.mxu0 0.0
  %2046 = vmatpush1.msra.mxu0 0.0
  %2047 = vmatprep.subr.mxu0 0.0
  %2048 = vmatpush1.msra.mxu0 0.0
  %2049 = vmatprep.subr.mxu0 0.0
  %2050 = vmatpush1.msra.mxu0 0.0
  %2051 = vmatprep.subr.mxu0 0.0
  %2052 = vmatpush1.msra.mxu0 0.0
  %2053 = vmatprep.subr.mxu0 0.0
  %2054 = vmatpush1.msra.mxu0 0.0
  %2055 = vmatprep.subr.mxu0 0.0
  %2056 = vmatpush1.msra.mxu0 0.0
  %2057 = vmatprep.subr.mxu0 0.0
  %2058 = vmatpush1.msra.mxu0 0.0
  %2059 = vmatprep.subr.mxu0 0.0
  %2060 = vmatpush1.msra.mxu0 0.0
  %2061 = vmatprep.subr.mxu0 0.0
  %2062 = vmatpush1.msra.mxu0 0.0
  %2063 = vmatprep.subr.mxu0 0.0
  %2064 = vmatpush1.msra.mxu0 0.0
  %2065 = vmatprep.subr.mxu0 0.0
  %2066 = vmatpush1.msra.mxu0 0.0
  %2067 = vmatprep.subr.mxu0 0.0
  %2068 = vmatpush1.msra.mxu0 0.0
  %2069 = vmatprep.subr.mxu0 0.0
  %2070 = vmatpush1.msra.mxu0 0.0
  %2071 = vmatprep.subr.mxu0 0.0
  %2072 = vmatpush1.msra.mxu0 0.0
  %2073 = vmatprep.subr.mxu0 0.0
  %2074 = vmatpush1.msra.mxu0 0.0
  %2075 = vmatprep.subr.mxu0 0.0
  %2076 = vmatpush1.msra.mxu0 0.0
  %2077 = vmatprep.subr.mxu0 0.0
  %2078 = vmatpush1.msra.mxu0 0.0
  %2079 = vmatprep.subr.mxu0 0.0
  %2080 = vmatpush1.msra.mxu0 0.0
  %2081 = vmatprep.subr.mxu0 0.0
  %2082 = vmatpush1.msra.mxu0 0.0
  %2083 = vmatprep.subr.mxu0 0.0
  %2084 = vmatpush1.msra.mxu0 0.0
  %2085 = vmatprep.subr.mxu0 0.0
  %2086 = vmatpush1.msra.mxu0 0.0
  %2087 = vmatprep.mubr.f32.mxu0 0.0
  %2088 = vmatmul.mubr.f32.gmra.mrb[0].mxu0 %v1938
  %v2089 = vpop.f32.mrb[0].mxu0
  %v2090 = vadd.f32 %v1934, %v2089
  %v2091 = vpop.f32.mrb[0].mxu0
  %v2092 = vadd.f32 %v1934, %v2091
  %2093 = vdwg.mxu0
  %v2094 = vld [vmem:[%s9] sm:$0xff]
  %v2095 = vld [vmem:[%s9 + $0x8] sm:$0xff]
  %v2096 = vld [vmem:[%s9 + $0x10] sm:$0xff]
  %v2097 = vld [vmem:[%s9 + $0x18] sm:$0xff]
  %v2098 = vld [vmem:[%s9 + $0x20] sm:$0xff]
  %v2099 = vld [vmem:[%s9 + $0x28] sm:$0xff]
  %v2100 = vld [vmem:[%s9 + $0x30] sm:$0xff]
  %v2101 = vld [vmem:[%s9 + $0x38] sm:$0xff]
  %v2102 = vld [vmem:[%s9 + $0x40] sm:$0xff]
  %v2103 = vld [vmem:[%s9 + $0x48] sm:$0xff]
  %v2104 = vld [vmem:[%s9 + $0x50] sm:$0xff]
  %v2105 = vld [vmem:[%s9 + $0x58] sm:$0xff]
  %v2106 = vld [vmem:[%s9 + $0x60] sm:$0xff]
  %v2107 = vld [vmem:[%s9 + $0x68] sm:$0xff]
  %v2108 = vld [vmem:[%s9 + $0x70] sm:$0xff]
  %v2109 = vld [vmem:[%s9 + $0x78] sm:$0xff]
  %v2110 = vld [vmem:[%s9 + $0x80] sm:$0xff]
  %v2111 = vld [vmem:[%s9 + $0x88] sm:$0xff]
  %v2112 = vld [vmem:[%s9 + $0x90] sm:$0xff]
  %v2113 = vld [vmem:[%s9 + $0x98] sm:$0xff]
  %v2114 = vld [vmem:[%s9 + $0xa0] sm:$0xff]
  %v2115 = vld [vmem:[%s9 + $0xa8] sm:$0xff]
  %v2116 = vld [vmem:[%s9 + $0xb0] sm:$0xff]
  %v2117 = vld [vmem:[%s9 + $0xb8] sm:$0xff]
  %v2118 = vld [vmem:[%s9 + $0xc0] sm:$0xff]
  %v2119 = vld [vmem:[%s9 + $0xc8] sm:$0xff]
  %v2120 = vld [vmem:[%s9 + $0xd0] sm:$0xff]
  %v2121 = vld [vmem:[%s9 + $0xd8] sm:$0xff]
  %v2122 = vld [vmem:[%s9 + $0xe0] sm:$0xff]
  %v2123 = vld [vmem:[%s9 + $0xe8] sm:$0xff]
  %v2124 = vld [vmem:[%s9 + $0xf0] sm:$0xff]
  %v2125 = vld [vmem:[%s9 + $0xf8] sm:$0xff]
  %2126 = vmatprep.subr.mxu0 0.0
  %2127 = vmatpush1.msra.mxu0 %v2094
  %2128 = vmatprep.subr.mxu0 0.0
  %2129 = vmatpush1.msra.mxu0 %v2095
  %2130 = vmatprep.subr.mxu0 0.0
  %2131 = vmatpush1.msra.mxu0 %v2096
  %2132 = vmatprep.subr.mxu0 0.0
  %2133 = vmatpush1.msra.mxu0 %v2097
  %2134 = vmatprep.subr.mxu0 0.0
  %2135 = vmatpush1.msra.mxu0 %v2098
  %2136 = vmatprep.subr.mxu0 0.0
  %2137 = vmatpush1.msra.mxu0 %v2099
  %2138 = vmatprep.subr.mxu0 0.0
  %2139 = vmatpush1.msra.mxu0 %v2100
  %2140 = vmatprep.subr.mxu0 0.0
  %2141 = vmatpush1.msra.mxu0 %v2101
  %2142 = vmatprep.subr.mxu0 0.0
  %2143 = vmatpush1.msra.mxu0 %v2102
  %2144 = vmatprep.subr.mxu0 0.0
  %2145 = vmatpush1.msra.mxu0 %v2103
  %2146 = vmatprep.subr.mxu0 0.0
  %2147 = vmatpush1.msra.mxu0 %v2104
  %2148 = vmatprep.subr.mxu0 0.0
  %2149 = vmatpush1.msra.mxu0 %v2105
  %2150 = vmatprep.subr.mxu0 0.0
  %2151 = vmatpush1.msra.mxu0 %v2106
  %2152 = vmatprep.subr.mxu0 0.0
  %2153 = vmatpush1.msra.mxu0 %v2107
  %2154 = vmatprep.subr.mxu0 0.0
  %2155 = vmatpush1.msra.mxu0 %v2108
  %2156 = vmatprep.subr.mxu0 0.0
  %2157 = vmatpush1.msra.mxu0 %v2109
  %2158 = vmatprep.subr.mxu0 0.0
  %2159 = vmatpush1.msra.mxu0 %v2110
  %2160 = vmatprep.subr.mxu0 0.0
  %2161 = vmatpush1.msra.mxu0 %v2111
  %2162 = vmatprep.subr.mxu0 0.0
  %2163 = vmatpush1.msra.mxu0 %v2112
  %2164 = vmatprep.subr.mxu0 0.0
  %2165 = vmatpush1.msra.mxu0 %v2113
  %2166 = vmatprep.subr.mxu0 0.0
  %2167 = vmatpush1.msra.mxu0 %v2114
  %2168 = vmatprep.subr.mxu0 0.0
  %2169 = vmatpush1.msra.mxu0 %v2115
  %2170 = vmatprep.subr.mxu0 0.0
  %2171 = vmatpush1.msra.mxu0 %v2116
  %2172 = vmatprep.subr.mxu0 0.0
  %2173 = vmatpush1.msra.mxu0 %v2117
  %2174 = vmatprep.subr.mxu0 0.0
  %2175 = vmatpush1.msra.mxu0 %v2118
  %2176 = vmatprep.subr.mxu0 0.0
  %2177 = vmatpush1.msra.mxu0 %v2119
  %2178 = vmatprep.subr.mxu0 0.0
  %2179 = vmatpush1.msra.mxu0 %v2120
  %2180 = vmatprep.subr.mxu0 0.0
  %2181 = vmatpush1.msra.mxu0 %v2121
  %2182 = vmatprep.subr.mxu0 0.0
  %2183 = vmatpush1.msra.mxu0 %v2122
  %2184 = vmatprep.subr.mxu0 0.0
  %2185 = vmatpush1.msra.mxu0 %v2123
  %2186 = vmatprep.subr.mxu0 0.0
  %2187 = vmatpush1.msra.mxu0 %v2124
  %2188 = vmatprep.subr.mxu0 0.0
  %2189 = vmatpush1.msra.mxu0 %v2125
  %2190 = vmatprep.mubr.f32.mxu0 %v2021
  %2191 = vmatmul.mubr.f32.gmra.mrb[0].mxu0 %v2019
  %v2192 = vpop.f32.mrb[0].mxu0
  %v2193 = vadd.f32 0.0, %v2192
  %v2194 = vpop.f32.mrb[0].mxu0
  %2195 = vdwg.mxu0
  %2196 = vmatprep.subr.mxu0 0.0
  %2197 = vmatpush1.msra.mxu0 %v2094
  %2198 = vmatprep.subr.mxu0 0.0
  %2199 = vmatpush1.msra.mxu0 %v2095
  %2200 = vmatprep.subr.mxu0 0.0
  %2201 = vmatpush1.msra.mxu0 %v2096
  %2202 = vmatprep.subr.mxu0 0.0
  %2203 = vmatpush1.msra.mxu0 %v2097
  %2204 = vmatprep.subr.mxu0 0.0
  %2205 = vmatpush1.msra.mxu0 %v2098
  %2206 = vmatprep.subr.mxu0 0.0
  %2207 = vmatpush1.msra.mxu0 %v2099
  %2208 = vmatprep.subr.mxu0 0.0
  %2209 = vmatpush1.msra.mxu0 %v2100
  %2210 = vmatprep.subr.mxu0 0.0
  %2211 = vmatpush1.msra.mxu0 %v2101
  %2212 = vmatprep.subr.mxu0 0.0
  %2213 = vmatpush1.msra.mxu0 %v2102
  %2214 = vmatprep.subr.mxu0 0.0
  %2215 = vmatpush1.msra.mxu0 %v2103
  %2216 = vmatprep.subr.mxu0 0.0
  %2217 = vmatpush1.msra.mxu0 %v2104
  %2218 = vmatprep.subr.mxu0 0.0
  %2219 = vmatpush1.msra.mxu0 %v2105
  %2220 = vmatprep.subr.mxu0 0.0
  %2221 = vmatpush1.msra.mxu0 %v2106
  %2222 = vmatprep.subr.mxu0 0.0
  %2223 = vmatpush1.msra.mxu0 %v2107
  %2224 = vmatprep.subr.mxu0 0.0
  %2225 = vmatpush1.msra.mxu0 %v2108
  %2226 = vmatprep.subr.mxu0 0.0
  %2227 = vmatpush1.msra.mxu0 %v2109
  %2228 = vmatprep.subr.mxu0 0.0
  %2229 = vmatpush1.msra.mxu0 %v2110
  %2230 = vmatprep.subr.mxu0 0.0
  %2231 = vmatpush1.msra.mxu0 %v2111
  %2232 = vmatprep.subr.mxu0 0.0
  %2233 = vmatpush1.msra.mxu0 %v2112
  %2234 = vmatprep.subr.mxu0 0.0
  %2235 = vmatpush1.msra.mxu0 %v2113
  %2236 = vmatprep.subr.mxu0 0.0
  %2237 = vmatpush1.msra.mxu0 %v2114
  %2238 = vmatprep.subr.mxu0 0.0
  %2239 = vmatpush1.msra.mxu0 %v2115
  %2240 = vmatprep.subr.mxu0 0.0
  %2241 = vmatpush1.msra.mxu0 %v2116
  %2242 = vmatprep.subr.mxu0 0.0
  %2243 = vmatpush1.msra.mxu0 %v2117
  %2244 = vmatprep.subr.mxu0 0.0
  %2245 = vmatpush1.msra.mxu0 %v2118
  %2246 = vmatprep.subr.mxu0 0.0
  %2247 = vmatpush1.msra.mxu0 %v2119
  %2248 = vmatprep.subr.mxu0 0.0
  %2249 = vmatpush1.msra.mxu0 %v2120
  %2250 = vmatprep.subr.mxu0 0.0
  %2251 = vmatpush1.msra.mxu0 %v2121
  %2252 = vmatprep.subr.mxu0 0.0
  %2253 = vmatpush1.msra.mxu0 %v2122
  %2254 = vmatprep.subr.mxu0 0.0
  %2255 = vmatpush1.msra.mxu0 %v2123
  %2256 = vmatprep.subr.mxu0 0.0
  %2257 = vmatpush1.msra.mxu0 %v2124
  %2258 = vmatprep.subr.mxu0 0.0
  %2259 = vmatpush1.msra.mxu0 %v2125
  %2260 = vmatprep.mubr.f32.mxu0 %v2092
  %2261 = vmatmul.mubr.f32.gmra.mrb[0].mxu0 %v2090
  %v2262 = vpop.f32.mrb[0].mxu0
  %v2263 = vadd.f32 0.0, %v2262
  %v2264 = vpop.f32.mrb[0].mxu0
  %2265 = vdwg.mxu0
  %2267 = vrot.lane.b32.xlu0 %v2263, 16
  %v2268 = vpop.permute.xlu0 %2267
  %v2270 = vsel %vm530, %v2193, %v2268
  %v2271 = vadd.f32 %v1703, %v2270
  %2272 = vset.pattern.permute.xlu0 7
  %2273 = vperm.xlu0 %2272, %v40
  %v2274 = vpop.permute.xlu0 %2273
  %2276 = vrot.lane.b32.xlu0 %v39, 72
  %v2277 = vpop.permute.xlu0 %2276
  %v2278 = vsel %vm690, %v2277, 0
  %2280 = vmatprep.subr.mxu0 0.0
  %2281 = vmatpush1.msra.mxu0 %v45
  %2282 = vmatprep.subr.mxu0 0.0
  %2283 = vmatpush1.msra.mxu0 0.0
  %2284 = vmatprep.subr.mxu0 0.0
  %2285 = vmatpush1.msra.mxu0 0.0
  %2286 = vmatprep.subr.mxu0 0.0
  %2287 = vmatpush1.msra.mxu0 0.0
  %2288 = vmatprep.subr.mxu0 0.0
  %2289 = vmatpush1.msra.mxu0 0.0
  %2290 = vmatprep.subr.mxu0 0.0
  %2291 = vmatpush1.msra.mxu0 0.0
  %2292 = vmatprep.subr.mxu0 0.0
  %2293 = vmatpush1.msra.mxu0 0.0
  %2294 = vmatprep.subr.mxu0 0.0
  %2295 = vmatpush1.msra.mxu0 0.0
  %2296 = vmatprep.subr.mxu0 0.0
  %2297 = vmatpush1.msra.mxu0 0.0
  %2298 = vmatprep.subr.mxu0 0.0
  %2299 = vmatpush1.msra.mxu0 0.0
  %2300 = vmatprep.subr.mxu0 0.0
  %2301 = vmatpush1.msra.mxu0 0.0
  %2302 = vmatprep.subr.mxu0 0.0
  %2303 = vmatpush1.msra.mxu0 0.0
  %2304 = vmatprep.subr.mxu0 0.0
  %2305 = vmatpush1.msra.mxu0 0.0
  %2306 = vmatprep.subr.mxu0 0.0
  %2307 = vmatpush1.msra.mxu0 0.0
  %2308 = vmatprep.subr.mxu0 0.0
  %2309 = vmatpush1.msra.mxu0 0.0
  %2310 = vmatprep.subr.mxu0 0.0
  %2311 = vmatpush1.msra.mxu0 0.0
  %2312 = vmatprep.subr.mxu0 0.0
  %2313 = vmatpush1.msra.mxu0 0.0
  %2314 = vmatprep.subr.mxu0 0.0
  %2315 = vmatpush1.msra.mxu0 0.0
  %2316 = vmatprep.subr.mxu0 0.0
  %2317 = vmatpush1.msra.mxu0 0.0
  %2318 = vmatprep.subr.mxu0 0.0
  %2319 = vmatpush1.msra.mxu0 0.0
  %2320 = vmatprep.subr.mxu0 0.0
  %2321 = vmatpush1.msra.mxu0 0.0
  %2322 = vmatprep.subr.mxu0 0.0
  %2323 = vmatpush1.msra.mxu0 0.0
  %2324 = vmatprep.subr.mxu0 0.0
  %2325 = vmatpush1.msra.mxu0 0.0
  %2326 = vmatprep.subr.mxu0 0.0
  %2327 = vmatpush1.msra.mxu0 0.0
  %2328 = vmatprep.subr.mxu0 0.0
  %2329 = vmatpush1.msra.mxu0 0.0
  %2330 = vmatprep.subr.mxu0 0.0
  %2331 = vmatpush1.msra.mxu0 0.0
  %2332 = vmatprep.subr.mxu0 0.0
  %2333 = vmatpush1.msra.mxu0 0.0
  %2334 = vmatprep.subr.mxu0 0.0
  %2335 = vmatpush1.msra.mxu0 0.0
  %2336 = vmatprep.subr.mxu0 0.0
  %2337 = vmatpush1.msra.mxu0 0.0
  %2338 = vmatprep.subr.mxu0 0.0
  %2339 = vmatpush1.msra.mxu0 0.0
  %2340 = vmatprep.subr.mxu0 0.0
  %2341 = vmatpush1.msra.mxu0 0.0
  %2342 = vmatprep.subr.mxu0 0.0
  %2343 = vmatpush1.msra.mxu0 0.0
  %2344 = vmatprep.mubr.f32.mxu0 0.0
  %2345 = vmatmul.mubr.f32.gmra.mrb[0].mxu0 %v2278
  %v2346 = vpop.f32.mrb[0].mxu0
  %v2347 = vadd.f32 %v2274, %v2346
  %v2348 = vpop.f32.mrb[0].mxu0
  %2349 = vdwg.mxu0
  %2350 = vmatprep.subr.mxu0 0.0
  %2351 = vmatpush1.msra.mxu0 %v2347
  %2352 = vmatprep.subr.mxu0 0.0
  %2353 = vmatpush1.msra.mxu0 0.0
  %2354 = vmatprep.subr.mxu0 0.0
  %2355 = vmatpush1.msra.mxu0 0.0
  %2356 = vmatprep.subr.mxu0 0.0
  %2357 = vmatpush1.msra.mxu0 0.0
  %2358 = vmatprep.subr.mxu0 0.0
  %2359 = vmatpush1.msra.mxu0 0.0
  %2360 = vmatprep.subr.mxu0 0.0
  %2361 = vmatpush1.msra.mxu0 0.0
  %2362 = vmatprep.subr.mxu0 0.0
  %2363 = vmatpush1.msra.mxu0 0.0
  %2364 = vmatprep.subr.mxu0 0.0
  %2365 = vmatpush1.msra.mxu0 0.0
  %2366 = vmatprep.subr.mxu0 0.0
  %2367 = vmatpush1.msra.mxu0 0.0
  %2368 = vmatprep.subr.mxu0 0.0
  %2369 = vmatpush1.msra.mxu0 0.0
  %2370 = vmatprep.subr.mxu0 0.0
  %2371 = vmatpush1.msra.mxu0 0.0
  %2372 = vmatprep.subr.mxu0 0.0
  %2373 = vmatpush1.msra.mxu0 0.0
  %2374 = vmatprep.subr.mxu0 0.0
  %2375 = vmatpush1.msra.mxu0 0.0
  %2376 = vmatprep.subr.mxu0 0.0
  %2377 = vmatpush1.msra.mxu0 0.0
  %2378 = vmatprep.subr.mxu0 0.0
  %2379 = vmatpush1.msra.mxu0 0.0
  %2380 = vmatprep.subr.mxu0 0.0
  %2381 = vmatpush1.msra.mxu0 0.0
  %2382 = vmatprep.subr.mxu0 0.0
  %2383 = vmatpush1.msra.mxu0 0.0
  %2384 = vmatprep.subr.mxu0 0.0
  %2385 = vmatpush1.msra.mxu0 0.0
  %2386 = vmatprep.subr.mxu0 0.0
  %2387 = vmatpush1.msra.mxu0 0.0
  %2388 = vmatprep.subr.mxu0 0.0
  %2389 = vmatpush1.msra.mxu0 0.0
  %2390 = vmatprep.subr.mxu0 0.0
  %2391 = vmatpush1.msra.mxu0 0.0
  %2392 = vmatprep.subr.mxu0 0.0
  %2393 = vmatpush1.msra.mxu0 0.0
  %2394 = vmatprep.subr.mxu0 0.0
  %2395 = vmatpush1.msra.mxu0 0.0
  %2396 = vmatprep.subr.mxu0 0.0
  %2397 = vmatpush1.msra.mxu0 0.0
  %2398 = vmatprep.subr.mxu0 0.0
  %2399 = vmatpush1.msra.mxu0 0.0
  %2400 = vmatprep.subr.mxu0 0.0
  %2401 = vmatpush1.msra.mxu0 0.0
  %2402 = vmatprep.subr.mxu0 0.0
  %2403 = vmatpush1.msra.mxu0 0.0
  %2404 = vmatprep.subr.mxu0 0.0
  %2405 = vmatpush1.msra.mxu0 0.0
  %2406 = vmatprep.subr.mxu0 0.0
  %2407 = vmatpush1.msra.mxu0 0.0
  %2408 = vmatprep.subr.mxu0 0.0
  %2409 = vmatpush1.msra.mxu0 0.0
  %2410 = vmatprep.subr.mxu0 0.0
  %2411 = vmatpush1.msra.mxu0 0.0
  %2412 = vmatprep.subr.mxu0 0.0
  %2413 = vmatpush1.msra.mxu0 0.0
  %2414 = vmatprep.mubr.f32.mxu0 0.0
  %2415 = vmatmul.mubr.f32.gmra.mrb[0].mxu0 %v2278
  %v2416 = vpop.f32.mrb[0].mxu0
  %v2417 = vadd.f32 %v2274, %v2416
  %v2418 = vpop.f32.mrb[0].mxu0
  %2419 = vdwg.mxu0
  %v2421 = vsel %vm59, %v2271, 0
  %2423 = vmatprep.subr.mxu0 0.0
  %2424 = vmatpush1.msra.mxu0 %v2421
  %2425 = vmatprep.subr.mxu0 0.0
  %2426 = vmatpush1.msra.mxu0 0.0
  %2427 = vmatprep.subr.mxu0 0.0
  %2428 = vmatpush1.msra.mxu0 0.0
  %2429 = vmatprep.subr.mxu0 0.0
  %2430 = vmatpush1.msra.mxu0 0.0
  %2431 = vmatprep.subr.mxu0 0.0
  %2432 = vmatpush1.msra.mxu0 0.0
  %2433 = vmatprep.subr.mxu0 0.0
  %2434 = vmatpush1.msra.mxu0 0.0
  %2435 = vmatprep.subr.mxu0 0.0
  %2436 = vmatpush1.msra.mxu0 0.0
  %2437 = vmatprep.subr.mxu0 0.0
  %2438 = vmatpush1.msra.mxu0 0.0
  %2439 = vmatprep.subr.mxu0 0.0
  %2440 = vmatpush1.msra.mxu0 0.0
  %2441 = vmatprep.subr.mxu0 0.0
  %2442 = vmatpush1.msra.mxu0 0.0
  %2443 = vmatprep.subr.mxu0 0.0
  %2444 = vmatpush1.msra.mxu0 0.0
  %2445 = vmatprep.subr.mxu0 0.0
  %2446 = vmatpush1.msra.mxu0 0.0
  %2447 = vmatprep.subr.mxu0 0.0
  %2448 = vmatpush1.msra.mxu0 0.0
  %2449 = vmatprep.subr.mxu0 0.0
  %2450 = vmatpush1.msra.mxu0 0.0
  %2451 = vmatprep.subr.mxu0 0.0
  %2452 = vmatpush1.msra.mxu0 0.0
  %2453 = vmatprep.subr.mxu0 0.0
  %2454 = vmatpush1.msra.mxu0 0.0
  %2455 = vmatprep.subr.mxu0 0.0
  %2456 = vmatpush1.msra.mxu0 0.0
  %2457 = vmatprep.subr.mxu0 0.0
  %2458 = vmatpush1.msra.mxu0 0.0
  %2459 = vmatprep.subr.mxu0 0.0
  %2460 = vmatpush1.msra.mxu0 0.0
  %2461 = vmatprep.subr.mxu0 0.0
  %2462 = vmatpush1.msra.mxu0 0.0
  %2463 = vmatprep.subr.mxu0 0.0
  %2464 = vmatpush1.msra.mxu0 0.0
  %2465 = vmatprep.subr.mxu0 0.0
  %2466 = vmatpush1.msra.mxu0 0.0
  %2467 = vmatprep.subr.mxu0 0.0
  %2468 = vmatpush1.msra.mxu0 0.0
  %2469 = vmatprep.subr.mxu0 0.0
  %2470 = vmatpush1.msra.mxu0 0.0
  %2471 = vmatprep.subr.mxu0 0.0
  %2472 = vmatpush1.msra.mxu0 0.0
  %2473 = vmatprep.subr.mxu0 0.0
  %2474 = vmatpush1.msra.mxu0 0.0
  %2475 = vmatprep.subr.mxu0 0.0
  %2476 = vmatpush1.msra.mxu0 0.0
  %2477 = vmatprep.subr.mxu0 0.0
  %2478 = vmatpush1.msra.mxu0 0.0
  %2479 = vmatprep.subr.mxu0 0.0
  %2480 = vmatpush1.msra.mxu0 0.0
  %2481 = vmatprep.subr.mxu0 0.0
  %2482 = vmatpush1.msra.mxu0 0.0
  %2483 = vmatprep.subr.mxu0 0.0
  %2484 = vmatpush1.msra.mxu0 0.0
  %2485 = vmatprep.subr.mxu0 0.0
  %2486 = vmatpush1.msra.mxu0 0.0
  %2487 = vmatprep.mubr.f32.mxu0 0.0
  %2488 = vmatmul.mubr.f32.gmra.mrb[0].mxu0 %v370
  %v2489 = vpop.f32.mrb[0].mxu0
  %v2490 = vadd.f32 %v366, %v2489
  %v2491 = vpop.f32.mrb[0].mxu0
  %2492 = vdwg.mxu0
  %v2494 = vsel %vm59, %v2490, 0
  %2496 = vmatprep.subr.mxu0 0.0
  %2497 = vmatpush1.msra.mxu0 %v2494
  %2498 = vmatprep.subr.mxu0 0.0
  %2499 = vmatpush1.msra.mxu0 0.0
  %2500 = vmatprep.subr.mxu0 0.0
  %2501 = vmatpush1.msra.mxu0 0.0
  %2502 = vmatprep.subr.mxu0 0.0
  %2503 = vmatpush1.msra.mxu0 0.0
  %2504 = vmatprep.subr.mxu0 0.0
  %2505 = vmatpush1.msra.mxu0 0.0
  %2506 = vmatprep.subr.mxu0 0.0
  %2507 = vmatpush1.msra.mxu0 0.0
  %2508 = vmatprep.subr.mxu0 0.0
  %2509 = vmatpush1.msra.mxu0 0.0
  %2510 = vmatprep.subr.mxu0 0.0
  %2511 = vmatpush1.msra.mxu0 0.0
  %2512 = vmatprep.subr.mxu0 0.0
  %2513 = vmatpush1.msra.mxu0 0.0
  %2514 = vmatprep.subr.mxu0 0.0
  %2515 = vmatpush1.msra.mxu0 0.0
  %2516 = vmatprep.subr.mxu0 0.0
  %2517 = vmatpush1.msra.mxu0 0.0
  %2518 = vmatprep.subr.mxu0 0.0
  %2519 = vmatpush1.msra.mxu0 0.0
  %2520 = vmatprep.subr.mxu0 0.0
  %2521 = vmatpush1.msra.mxu0 0.0
  %2522 = vmatprep.subr.mxu0 0.0
  %2523 = vmatpush1.msra.mxu0 0.0
  %2524 = vmatprep.subr.mxu0 0.0
  %2525 = vmatpush1.msra.mxu0 0.0
  %2526 = vmatprep.subr.mxu0 0.0
  %2527 = vmatpush1.msra.mxu0 0.0
  %2528 = vmatprep.subr.mxu0 0.0
  %2529 = vmatpush1.msra.mxu0 0.0
  %2530 = vmatprep.subr.mxu0 0.0
  %2531 = vmatpush1.msra.mxu0 0.0
  %2532 = vmatprep.subr.mxu0 0.0
  %2533 = vmatpush1.msra.mxu0 0.0
  %2534 = vmatprep.subr.mxu0 0.0
  %2535 = vmatpush1.msra.mxu0 0.0
  %2536 = vmatprep.subr.mxu0 0.0
  %2537 = vmatpush1.msra.mxu0 0.0
  %2538 = vmatprep.subr.mxu0 0.0
  %2539 = vmatpush1.msra.mxu0 0.0
  %2540 = vmatprep.subr.mxu0 0.0
  %2541 = vmatpush1.msra.mxu0 0.0
  %2542 = vmatprep.subr.mxu0 0.0
  %2543 = vmatpush1.msra.mxu0 0.0
  %2544 = vmatprep.subr.mxu0 0.0
  %2545 = vmatpush1.msra.mxu0 0.0
  %2546 = vmatprep.subr.mxu0 0.0
  %2547 = vmatpush1.msra.mxu0 0.0
  %2548 = vmatprep.subr.mxu0 0.0
  %2549 = vmatpush1.msra.mxu0 0.0
  %2550 = vmatprep.subr.mxu0 0.0
  %2551 = vmatpush1.msra.mxu0 0.0
  %2552 = vmatprep.subr.mxu0 0.0
  %2553 = vmatpush1.msra.mxu0 0.0
  %2554 = vmatprep.subr.mxu0 0.0
  %2555 = vmatpush1.msra.mxu0 0.0
  %2556 = vmatprep.subr.mxu0 0.0
  %2557 = vmatpush1.msra.mxu0 0.0
  %2558 = vmatprep.subr.mxu0 0.0
  %2559 = vmatpush1.msra.mxu0 0.0
  %2560 = vmatprep.mubr.f32.mxu0 0.0
  %2561 = vmatmul.mubr.f32.gmra.mrb[0].mxu0 %v451
  %v2562 = vpop.f32.mrb[0].mxu0
  %v2563 = vadd.f32 %v447, %v2562
  %v2564 = vpop.f32.mrb[0].mxu0
  %2565 = vdwg.mxu0
  %v2567 = vsel %vm530, %v2563, 0
  %2569 = vmatprep.subr.mxu0 %v527
  %2570 = vmatpush1.msra.mxu0 %v526
  %2571 = vmatprep.subr.mxu0 %v529
  %2572 = vmatpush1.msra.mxu0 %v528
  %2573 = vmatprep.subr.mxu0 0.0
  %2574 = vmatpush1.msra.mxu0 0.0
  %2575 = vmatprep.subr.mxu0 0.0
  %2576 = vmatpush1.msra.mxu0 0.0
  %2577 = vmatprep.subr.mxu0 0.0
  %2578 = vmatpush1.msra.mxu0 0.0
  %2579 = vmatprep.subr.mxu0 0.0
  %2580 = vmatpush1.msra.mxu0 0.0
  %2581 = vmatprep.subr.mxu0 0.0
  %2582 = vmatpush1.msra.mxu0 0.0
  %2583 = vmatprep.subr.mxu0 0.0
  %2584 = vmatpush1.msra.mxu0 0.0
  %2585 = vmatprep.subr.mxu0 0.0
  %2586 = vmatpush1.msra.mxu0 0.0
  %2587 = vmatprep.subr.mxu0 0.0
  %2588 = vmatpush1.msra.mxu0 0.0
  %2589 = vmatprep.subr.mxu0 0.0
  %2590 = vmatpush1.msra.mxu0 0.0
  %2591 = vmatprep.subr.mxu0 0.0
  %2592 = vmatpush1.msra.mxu0 0.0
  %2593 = vmatprep.subr.mxu0 0.0
  %2594 = vmatpush1.msra.mxu0 0.0
  %2595 = vmatprep.subr.mxu0 0.0
  %2596 = vmatpush1.msra.mxu0 0.0
  %2597 = vmatprep.subr.mxu0 0.0
  %2598 = vmatpush1.msra.mxu0 0.0
  %2599 = vmatprep.subr.mxu0 0.0
  %2600 = vmatpush1.msra.mxu0 0.0
  %2601 = vmatprep.subr.mxu0 0.0
  %2602 = vmatpush1.msra.mxu0 0.0
  %2603 = vmatprep.subr.mxu0 0.0
  %2604 = vmatpush1.msra.mxu0 0.0
  %2605 = vmatprep.subr.mxu0 0.0
  %2606 = vmatpush1.msra.mxu0 0.0
  %2607 = vmatprep.subr.mxu0 0.0
  %2608 = vmatpush1.msra.mxu0 0.0
  %2609 = vmatprep.subr.mxu0 0.0
  %2610 = vmatpush1.msra.mxu0 0.0
  %2611 = vmatprep.subr.mxu0 0.0
  %2612 = vmatpush1.msra.mxu0 0.0
  %2613 = vmatprep.subr.mxu0 0.0
  %2614 = vmatpush1.msra.mxu0 0.0
  %2615 = vmatprep.subr.mxu0 0.0
  %2616 = vmatpush1.msra.mxu0 0.0
  %2617 = vmatprep.subr.mxu0 0.0
  %2618 = vmatpush1.msra.mxu0 0.0
  %2619 = vmatprep.subr.mxu0 0.0
  %2620 = vmatpush1.msra.mxu0 0.0
  %2621 = vmatprep.subr.mxu0 0.0
  %2622 = vmatpush1.msra.mxu0 0.0
  %2623 = vmatprep.subr.mxu0 0.0
  %2624 = vmatpush1.msra.mxu0 0.0
  %2625 = vmatprep.subr.mxu0 0.0
  %2626 = vmatpush1.msra.mxu0 0.0
  %2627 = vmatprep.subr.mxu0 0.0
  %2628 = vmatpush1.msra.mxu0 0.0
  %2629 = vmatprep.subr.mxu0 0.0
  %2630 = vmatpush1.msra.mxu0 0.0
  %2631 = vmatprep.subr.mxu0 0.0
  %2632 = vmatpush1.msra.mxu0 0.0
  %2633 = vmatprep.mubr.f32.mxu0 0.0
  %2634 = vmatmul.mubr.f32.gmra.mrb[0].mxu0 %v2567
  %v2635 = vpop.f32.mrb[0].mxu0
  %v2636 = vadd.f32 0.0, %v2635
  %v2637 = vpop.f32.mrb[0].mxu0
  %v2638 = vadd.f32 0.0, %v2637
  %2639 = vdwg.mxu0
  %2640 = vrot.lane.b32.xlu0 %v2563, 112
  %v2641 = vpop.permute.xlu0 %2640
  %v2642 = vsel %vm530, %v2641, 0
  %2644 = vmatprep.subr.mxu0 %v527
  %2645 = vmatpush1.msra.mxu0 %v526
  %2646 = vmatprep.subr.mxu0 %v529
  %2647 = vmatpush1.msra.mxu0 %v528
  %2648 = vmatprep.subr.mxu0 0.0
  %2649 = vmatpush1.msra.mxu0 0.0
  %2650 = vmatprep.subr.mxu0 0.0
  %2651 = vmatpush1.msra.mxu0 0.0
  %2652 = vmatprep.subr.mxu0 0.0
  %2653 = vmatpush1.msra.mxu0 0.0
  %2654 = vmatprep.subr.mxu0 0.0
  %2655 = vmatpush1.msra.mxu0 0.0
  %2656 = vmatprep.subr.mxu0 0.0
  %2657 = vmatpush1.msra.mxu0 0.0
  %2658 = vmatprep.subr.mxu0 0.0
  %2659 = vmatpush1.msra.mxu0 0.0
  %2660 = vmatprep.subr.mxu0 0.0
  %2661 = vmatpush1.msra.mxu0 0.0
  %2662 = vmatprep.subr.mxu0 0.0
  %2663 = vmatpush1.msra.mxu0 0.0
  %2664 = vmatprep.subr.mxu0 0.0
  %2665 = vmatpush1.msra.mxu0 0.0
  %2666 = vmatprep.subr.mxu0 0.0
  %2667 = vmatpush1.msra.mxu0 0.0
  %2668 = vmatprep.subr.mxu0 0.0
  %2669 = vmatpush1.msra.mxu0 0.0
  %2670 = vmatprep.subr.mxu0 0.0
  %2671 = vmatpush1.msra.mxu0 0.0
  %2672 = vmatprep.subr.mxu0 0.0
  %2673 = vmatpush1.msra.mxu0 0.0
  %2674 = vmatprep.subr.mxu0 0.0
  %2675 = vmatpush1.msra.mxu0 0.0
  %2676 = vmatprep.subr.mxu0 0.0
  %2677 = vmatpush1.msra.mxu0 0.0
  %2678 = vmatprep.subr.mxu0 0.0
  %2679 = vmatpush1.msra.mxu0 0.0
  %2680 = vmatprep.subr.mxu0 0.0
  %2681 = vmatpush1.msra.mxu0 0.0
  %2682 = vmatprep.subr.mxu0 0.0
  %2683 = vmatpush1.msra.mxu0 0.0
  %2684 = vmatprep.subr.mxu0 0.0
  %2685 = vmatpush1.msra.mxu0 0.0
  %2686 = vmatprep.subr.mxu0 0.0
  %2687 = vmatpush1.msra.mxu0 0.0
  %2688 = vmatprep.subr.mxu0 0.0
  %2689 = vmatpush1.msra.mxu0 0.0
  %2690 = vmatprep.subr.mxu0 0.0
  %2691 = vmatpush1.msra.mxu0 0.0
  %2692 = vmatprep.subr.mxu0 0.0
  %2693 = vmatpush1.msra.mxu0 0.0
  %2694 = vmatprep.subr.mxu0 0.0
  %2695 = vmatpush1.msra.mxu0 0.0
  %2696 = vmatprep.subr.mxu0 0.0
  %2697 = vmatpush1.msra.mxu0 0.0
  %2698 = vmatprep.subr.mxu0 0.0
  %2699 = vmatpush1.msra.mxu0 0.0
  %2700 = vmatprep.subr.mxu0 0.0
  %2701 = vmatpush1.msra.mxu0 0.0
  %2702 = vmatprep.subr.mxu0 0.0
  %2703 = vmatpush1.msra.mxu0 0.0
  %2704 = vmatprep.subr.mxu0 0.0
  %2705 = vmatpush1.msra.mxu0 0.0
  %2706 = vmatprep.subr.mxu0 0.0
  %2707 = vmatpush1.msra.mxu0 0.0
  %2708 = vmatprep.mubr.f32.mxu0 0.0
  %2709 = vmatmul.mubr.f32.gmra.mrb[0].mxu0 %v2642
  %v2710 = vpop.f32.mrb[0].mxu0
  %v2711 = vadd.f32 0.0, %v2710
  %v2712 = vpop.f32.mrb[0].mxu0
  %v2713 = vadd.f32 0.0, %v2712
  %2714 = vdwg.mxu0
  %v2715 = vadd.f32 %v1217, %v2636
  %v2716 = vadd.f32 %v1219, %v2638
  %v2717 = vadd.f32 %v1288, %v2711
  %v2718 = vadd.f32 %v1290, %v2713
  %v2720 = vsel %vm59, %v2715, 0
  %v2723 = vsel %vm59, %v2716, 0
  %v2726 = vsel %vm59, %v2717, 0
  %v2729 = vsel %vm59, %v2718, 0
  %2731 = vmatprep.subr.mxu0 %v2723
  %2732 = vmatpush1.msra.mxu0 %v2720
  %2733 = vmatprep.subr.mxu0 0.0
  %2734 = vmatpush1.msra.mxu0 0.0
  %2735 = vmatprep.subr.mxu0 0.0
  %2736 = vmatpush1.msra.mxu0 0.0
  %2737 = vmatprep.subr.mxu0 0.0
  %2738 = vmatpush1.msra.mxu0 0.0
  %2739 = vmatprep.subr.mxu0 0.0
  %2740 = vmatpush1.msra.mxu0 0.0
  %2741 = vmatprep.subr.mxu0 0.0
  %2742 = vmatpush1.msra.mxu0 0.0
  %2743 = vmatprep.subr.mxu0 0.0
  %2744 = vmatpush1.msra.mxu0 0.0
  %2745 = vmatprep.subr.mxu0 0.0
  %2746 = vmatpush1.msra.mxu0 0.0
  %2747 = vmatprep.subr.mxu0 0.0
  %2748 = vmatpush1.msra.mxu0 0.0
  %2749 = vmatprep.subr.mxu0 0.0
  %2750 = vmatpush1.msra.mxu0 0.0
  %2751 = vmatprep.subr.mxu0 0.0
  %2752 = vmatpush1.msra.mxu0 0.0
  %2753 = vmatprep.subr.mxu0 0.0
  %2754 = vmatpush1.msra.mxu0 0.0
  %2755 = vmatprep.subr.mxu0 0.0
  %2756 = vmatpush1.msra.mxu0 0.0
  %2757 = vmatprep.subr.mxu0 0.0
  %2758 = vmatpush1.msra.mxu0 0.0
  %2759 = vmatprep.subr.mxu0 0.0
  %2760 = vmatpush1.msra.mxu0 0.0
  %2761 = vmatprep.subr.mxu0 0.0
  %2762 = vmatpush1.msra.mxu0 0.0
  %2763 = vmatprep.subr.mxu0 0.0
  %2764 = vmatpush1.msra.mxu0 0.0
  %2765 = vmatprep.subr.mxu0 0.0
  %2766 = vmatpush1.msra.mxu0 0.0
  %2767 = vmatprep.subr.mxu0 0.0
  %2768 = vmatpush1.msra.mxu0 0.0
  %2769 = vmatprep.subr.mxu0 0.0
  %2770 = vmatpush1.msra.mxu0 0.0
  %2771 = vmatprep.subr.mxu0 0.0
  %2772 = vmatpush1.msra.mxu0 0.0
  %2773 = vmatprep.subr.mxu0 0.0
  %2774 = vmatpush1.msra.mxu0 0.0
  %2775 = vmatprep.subr.mxu0 0.0
  %2776 = vmatpush1.msra.mxu0 0.0
  %2777 = vmatprep.subr.mxu0 0.0
  %2778 = vmatpush1.msra.mxu0 0.0
  %2779 = vmatprep.subr.mxu0 0.0
  %2780 = vmatpush1.msra.mxu0 0.0
  %2781 = vmatprep.subr.mxu0 0.0
  %2782 = vmatpush1.msra.mxu0 0.0
  %2783 = vmatprep.subr.mxu0 0.0
  %2784 = vmatpush1.msra.mxu0 0.0
  %2785 = vmatprep.subr.mxu0 0.0
  %2786 = vmatpush1.msra.mxu0 0.0
  %2787 = vmatprep.subr.mxu0 0.0
  %2788 = vmatpush1.msra.mxu0 0.0
  %2789 = vmatprep.subr.mxu0 0.0
  %2790 = vmatpush1.msra.mxu0 0.0
  %2791 = vmatprep.subr.mxu0 0.0
  %2792 = vmatpush1.msra.mxu0 0.0
  %2793 = vmatprep.subr.mxu0 0.0
  %2794 = vmatpush1.msra.mxu0 0.0
  %2795 = vmatprep.mubr.f32.mxu0 0.0
  %2796 = vmatmul.mubr.f32.gmra.mrb[0].mxu0 %v1938
  %v2797 = vpop.f32.mrb[0].mxu0
  %v2798 = vadd.f32 %v1934, %v2797
  %v2799 = vpop.f32.mrb[0].mxu0
  %v2800 = vadd.f32 %v1934, %v2799
  %2801 = vdwg.mxu0
  %2802 = vmatprep.subr.mxu0 %v2729
  %2803 = vmatpush1.msra.mxu0 %v2726
  %2804 = vmatprep.subr.mxu0 0.0
  %2805 = vmatpush1.msra.mxu0 0.0
  %2806 = vmatprep.subr.mxu0 0.0
  %2807 = vmatpush1.msra.mxu0 0.0
  %2808 = vmatprep.subr.mxu0 0.0
  %2809 = vmatpush1.msra.mxu0 0.0
  %2810 = vmatprep.subr.mxu0 0.0
  %2811 = vmatpush1.msra.mxu0 0.0
  %2812 = vmatprep.subr.mxu0 0.0
  %2813 = vmatpush1.msra.mxu0 0.0
  %2814 = vmatprep.subr.mxu0 0.0
  %2815 = vmatpush1.msra.mxu0 0.0
  %2816 = vmatprep.subr.mxu0 0.0
  %2817 = vmatpush1.msra.mxu0 0.0
  %2818 = vmatprep.subr.mxu0 0.0
  %2819 = vmatpush1.msra.mxu0 0.0
  %2820 = vmatprep.subr.mxu0 0.0
  %2821 = vmatpush1.msra.mxu0 0.0
  %2822 = vmatprep.subr.mxu0 0.0
  %2823 = vmatpush1.msra.mxu0 0.0
  %2824 = vmatprep.subr.mxu0 0.0
  %2825 = vmatpush1.msra.mxu0 0.0
  %2826 = vmatprep.subr.mxu0 0.0
  %2827 = vmatpush1.msra.mxu0 0.0
  %2828 = vmatprep.subr.mxu0 0.0
  %2829 = vmatpush1.msra.mxu0 0.0
  %2830 = vmatprep.subr.mxu0 0.0
  %2831 = vmatpush1.msra.mxu0 0.0
  %2832 = vmatprep.subr.mxu0 0.0
  %2833 = vmatpush1.msra.mxu0 0.0
  %2834 = vmatprep.subr.mxu0 0.0
  %2835 = vmatpush1.msra.mxu0 0.0
  %2836 = vmatprep.subr.mxu0 0.0
  %2837 = vmatpush1.msra.mxu0 0.0
  %2838 = vmatprep.subr.mxu0 0.0
  %2839 = vmatpush1.msra.mxu0 0.0
  %2840 = vmatprep.subr.mxu0 0.0
  %2841 = vmatpush1.msra.mxu0 0.0
  %2842 = vmatprep.subr.mxu0 0.0
  %2843 = vmatpush1.msra.mxu0 0.0
  %2844 = vmatprep.subr.mxu0 0.0
  %2845 = vmatpush1.msra.mxu0 0.0
  %2846 = vmatprep.subr.mxu0 0.0
  %2847 = vmatpush1.msra.mxu0 0.0
  %2848 = vmatprep.subr.mxu0 0.0
  %2849 = vmatpush1.msra.mxu0 0.0
  %2850 = vmatprep.subr.mxu0 0.0
  %2851 = vmatpush1.msra.mxu0 0.0
  %2852 = vmatprep.subr.mxu0 0.0
  %2853 = vmatpush1.msra.mxu0 0.0
  %2854 = vmatprep.subr.mxu0 0.0
  %2855 = vmatpush1.msra.mxu0 0.0
  %2856 = vmatprep.subr.mxu0 0.0
  %2857 = vmatpush1.msra.mxu0 0.0
  %2858 = vmatprep.subr.mxu0 0.0
  %2859 = vmatpush1.msra.mxu0 0.0
  %2860 = vmatprep.subr.mxu0 0.0
  %2861 = vmatpush1.msra.mxu0 0.0
  %2862 = vmatprep.subr.mxu0 0.0
  %2863 = vmatpush1.msra.mxu0 0.0
  %2864 = vmatprep.subr.mxu0 0.0
  %2865 = vmatpush1.msra.mxu0 0.0
  %2866 = vmatprep.mubr.f32.mxu0 0.0
  %2867 = vmatmul.mubr.f32.gmra.mrb[0].mxu0 %v1938
  %v2868 = vpop.f32.mrb[0].mxu0
  %v2869 = vadd.f32 %v1934, %v2868
  %v2870 = vpop.f32.mrb[0].mxu0
  %v2871 = vadd.f32 %v1934, %v2870
  %2872 = vdwg.mxu0
  %2873 = vmatprep.subr.mxu0 0.0
  %2874 = vmatpush1.msra.mxu0 %v2094
  %2875 = vmatprep.subr.mxu0 0.0
  %2876 = vmatpush1.msra.mxu0 %v2095
  %2877 = vmatprep.subr.mxu0 0.0
  %2878 = vmatpush1.msra.mxu0 %v2096
  %2879 = vmatprep.subr.mxu0 0.0
  %2880 = vmatpush1.msra.mxu0 %v2097
  %2881 = vmatprep.subr.mxu0 0.0
  %2882 = vmatpush1.msra.mxu0 %v2098
  %2883 = vmatprep.subr.mxu0 0.0
  %2884 = vmatpush1.msra.mxu0 %v2099
  %2885 = vmatprep.subr.mxu0 0.0
  %2886 = vmatpush1.msra.mxu0 %v2100
  %2887 = vmatprep.subr.mxu0 0.0
  %2888 = vmatpush1.msra.mxu0 %v2101
  %2889 = vmatprep.subr.mxu0 0.0
  %2890 = vmatpush1.msra.mxu0 %v2102
  %2891 = vmatprep.subr.mxu0 0.0
  %2892 = vmatpush1.msra.mxu0 %v2103
  %2893 = vmatprep.subr.mxu0 0.0
  %2894 = vmatpush1.msra.mxu0 %v2104
  %2895 = vmatprep.subr.mxu0 0.0
  %2896 = vmatpush1.msra.mxu0 %v2105
  %2897 = vmatprep.subr.mxu0 0.0
  %2898 = vmatpush1.msra.mxu0 %v2106
  %2899 = vmatprep.subr.mxu0 0.0
  %2900 = vmatpush1.msra.mxu0 %v2107
  %2901 = vmatprep.subr.mxu0 0.0
  %2902 = vmatpush1.msra.mxu0 %v2108
  %2903 = vmatprep.subr.mxu0 0.0
  %2904 = vmatpush1.msra.mxu0 %v2109
  %2905 = vmatprep.subr.mxu0 0.0
  %2906 = vmatpush1.msra.mxu0 %v2110
  %2907 = vmatprep.subr.mxu0 0.0
  %2908 = vmatpush1.msra.mxu0 %v2111
  %2909 = vmatprep.subr.mxu0 0.0
  %2910 = vmatpush1.msra.mxu0 %v2112
  %2911 = vmatprep.subr.mxu0 0.0
  %2912 = vmatpush1.msra.mxu0 %v2113
  %2913 = vmatprep.subr.mxu0 0.0
  %2914 = vmatpush1.msra.mxu0 %v2114
  %2915 = vmatprep.subr.mxu0 0.0
  %2916 = vmatpush1.msra.mxu0 %v2115
  %2917 = vmatprep.subr.mxu0 0.0
  %2918 = vmatpush1.msra.mxu0 %v2116
  %2919 = vmatprep.subr.mxu0 0.0
  %2920 = vmatpush1.msra.mxu0 %v2117
  %2921 = vmatprep.subr.mxu0 0.0
  %2922 = vmatpush1.msra.mxu0 %v2118
  %2923 = vmatprep.subr.mxu0 0.0
  %2924 = vmatpush1.msra.mxu0 %v2119
  %2925 = vmatprep.subr.mxu0 0.0
  %2926 = vmatpush1.msra.mxu0 %v2120
  %2927 = vmatprep.subr.mxu0 0.0
  %2928 = vmatpush1.msra.mxu0 %v2121
  %2929 = vmatprep.subr.mxu0 0.0
  %2930 = vmatpush1.msra.mxu0 %v2122
  %2931 = vmatprep.subr.mxu0 0.0
  %2932 = vmatpush1.msra.mxu0 %v2123
  %2933 = vmatprep.subr.mxu0 0.0
  %2934 = vmatpush1.msra.mxu0 %v2124
  %2935 = vmatprep.subr.mxu0 0.0
  %2936 = vmatpush1.msra.mxu0 %v2125
  %2937 = vmatprep.mubr.f32.mxu0 %v2800
  %2938 = vmatmul.mubr.f32.gmra.mrb[0].mxu0 %v2798
  %v2939 = vpop.f32.mrb[0].mxu0
  %v2940 = vadd.f32 0.0, %v2939
  %v2941 = vpop.f32.mrb[0].mxu0
  %2942 = vdwg.mxu0
  %2943 = vmatprep.subr.mxu0 0.0
  %2944 = vmatpush1.msra.mxu0 %v2094
  %2945 = vmatprep.subr.mxu0 0.0
  %2946 = vmatpush1.msra.mxu0 %v2095
  %2947 = vmatprep.subr.mxu0 0.0
  %2948 = vmatpush1.msra.mxu0 %v2096
  %2949 = vmatprep.subr.mxu0 0.0
  %2950 = vmatpush1.msra.mxu0 %v2097
  %2951 = vmatprep.subr.mxu0 0.0
  %2952 = vmatpush1.msra.mxu0 %v2098
  %2953 = vmatprep.subr.mxu0 0.0
  %2954 = vmatpush1.msra.mxu0 %v2099
  %2955 = vmatprep.subr.mxu0 0.0
  %2956 = vmatpush1.msra.mxu0 %v2100
  %2957 = vmatprep.subr.mxu0 0.0
  %2958 = vmatpush1.msra.mxu0 %v2101
  %2959 = vmatprep.subr.mxu0 0.0
  %2960 = vmatpush1.msra.mxu0 %v2102
  %2961 = vmatprep.subr.mxu0 0.0
  %2962 = vmatpush1.msra.mxu0 %v2103
  %2963 = vmatprep.subr.mxu0 0.0
  %2964 = vmatpush1.msra.mxu0 %v2104
  %2965 = vmatprep.subr.mxu0 0.0
  %2966 = vmatpush1.msra.mxu0 %v2105
  %2967 = vmatprep.subr.mxu0 0.0
  %2968 = vmatpush1.msra.mxu0 %v2106
  %2969 = vmatprep.subr.mxu0 0.0
  %2970 = vmatpush1.msra.mxu0 %v2107
  %2971 = vmatprep.subr.mxu0 0.0
  %2972 = vmatpush1.msra.mxu0 %v2108
  %2973 = vmatprep.subr.mxu0 0.0
  %2974 = vmatpush1.msra.mxu0 %v2109
  %2975 = vmatprep.subr.mxu0 0.0
  %2976 = vmatpush1.msra.mxu0 %v2110
  %2977 = vmatprep.subr.mxu0 0.0
  %2978 = vmatpush1.msra.mxu0 %v2111
  %2979 = vmatprep.subr.mxu0 0.0
  %2980 = vmatpush1.msra.mxu0 %v2112
  %2981 = vmatprep.subr.mxu0 0.0
  %2982 = vmatpush1.msra.mxu0 %v2113
  %2983 = vmatprep.subr.mxu0 0.0
  %2984 = vmatpush1.msra.mxu0 %v2114
  %2985 = vmatprep.subr.mxu0 0.0
  %2986 = vmatpush1.msra.mxu0 %v2115
  %2987 = vmatprep.subr.mxu0 0.0
  %2988 = vmatpush1.msra.mxu0 %v2116
  %2989 = vmatprep.subr.mxu0 0.0
  %2990 = vmatpush1.msra.mxu0 %v2117
  %2991 = vmatprep.subr.mxu0 0.0
  %2992 = vmatpush1.msra.mxu0 %v2118
  %2993 = vmatprep.subr.mxu0 0.0
  %2994 = vmatpush1.msra.mxu0 %v2119
  %2995 = vmatprep.subr.mxu0 0.0
  %2996 = vmatpush1.msra.mxu0 %v2120
  %2997 = vmatprep.subr.mxu0 0.0
  %2998 = vmatpush1.msra.mxu0 %v2121
  %2999 = vmatprep.subr.mxu0 0.0
  %3000 = vmatpush1.msra.mxu0 %v2122
  %3001 = vmatprep.subr.mxu0 0.0
  %3002 = vmatpush1.msra.mxu0 %v2123
  %3003 = vmatprep.subr.mxu0 0.0
  %3004 = vmatpush1.msra.mxu0 %v2124
  %3005 = vmatprep.subr.mxu0 0.0
  %3006 = vmatpush1.msra.mxu0 %v2125
  %3007 = vmatprep.mubr.f32.mxu0 %v2871
  %3008 = vmatmul.mubr.f32.gmra.mrb[0].mxu0 %v2869
  %v3009 = vpop.f32.mrb[0].mxu0
  %v3010 = vadd.f32 0.0, %v3009
  %v3011 = vpop.f32.mrb[0].mxu0
  %3012 = vdwg.mxu0
  %3014 = vrot.lane.b32.xlu0 %v3010, 16
  %v3015 = vpop.permute.xlu0 %3014
  %v3017 = vsel %vm530, %v2940, %v3015
  %v3018 = vadd.f32 %v2490, %v3017
  %3019 = vset.pattern.permute.xlu0 8
  %3020 = vperm.xlu0 %3019, %v40
  %v3021 = vpop.permute.xlu0 %3020
  %3023 = vrot.lane.b32.xlu0 %v39, 64
  %v3024 = vpop.permute.xlu0 %3023
  %v3025 = vsel %vm55, %v3024, 0
  %v3028 = vsel %vm59, %v3018, 0
  %3030 = vmatprep.subr.mxu0 0.0
  %3031 = vmatpush1.msra.mxu0 %v3028
  %3032 = vmatprep.subr.mxu0 0.0
  %3033 = vmatpush1.msra.mxu0 0.0
  %3034 = vmatprep.subr.mxu0 0.0
  %3035 = vmatpush1.msra.mxu0 0.0
  %3036 = vmatprep.subr.mxu0 0.0
  %3037 = vmatpush1.msra.mxu0 0.0
  %3038 = vmatprep.subr.mxu0 0.0
  %3039 = vmatpush1.msra.mxu0 0.0
  %3040 = vmatprep.subr.mxu0 0.0
  %3041 = vmatpush1.msra.mxu0 0.0
  %3042 = vmatprep.subr.mxu0 0.0
  %3043 = vmatpush1.msra.mxu0 0.0
  %3044 = vmatprep.subr.mxu0 0.0
  %3045 = vmatpush1.msra.mxu0 0.0
  %3046 = vmatprep.subr.mxu0 0.0
  %3047 = vmatpush1.msra.mxu0 0.0
  %3048 = vmatprep.subr.mxu0 0.0
  %3049 = vmatpush1.msra.mxu0 0.0
  %3050 = vmatprep.subr.mxu0 0.0
  %3051 = vmatpush1.msra.mxu0 0.0
  %3052 = vmatprep.subr.mxu0 0.0
  %3053 = vmatpush1.msra.mxu0 0.0
  %3054 = vmatprep.subr.mxu0 0.0
  %3055 = vmatpush1.msra.mxu0 0.0
  %3056 = vmatprep.subr.mxu0 0.0
  %3057 = vmatpush1.msra.mxu0 0.0
  %3058 = vmatprep.subr.mxu0 0.0
  %3059 = vmatpush1.msra.mxu0 0.0
  %3060 = vmatprep.subr.mxu0 0.0
  %3061 = vmatpush1.msra.mxu0 0.0
  %3062 = vmatprep.subr.mxu0 0.0
  %3063 = vmatpush1.msra.mxu0 0.0
  %3064 = vmatprep.subr.mxu0 0.0
  %3065 = vmatpush1.msra.mxu0 0.0
  %3066 = vmatprep.subr.mxu0 0.0
  %3067 = vmatpush1.msra.mxu0 0.0
  %3068 = vmatprep.subr.mxu0 0.0
  %3069 = vmatpush1.msra.mxu0 0.0
  %3070 = vmatprep.subr.mxu0 0.0
  %3071 = vmatpush1.msra.mxu0 0.0
  %3072 = vmatprep.subr.mxu0 0.0
  %3073 = vmatpush1.msra.mxu0 0.0
  %3074 = vmatprep.subr.mxu0 0.0
  %3075 = vmatpush1.msra.mxu0 0.0
  %3076 = vmatprep.subr.mxu0 0.0
  %3077 = vmatpush1.msra.mxu0 0.0
  %3078 = vmatprep.subr.mxu0 0.0
  %3079 = vmatpush1.msra.mxu0 0.0
  %3080 = vmatprep.subr.mxu0 0.0
  %3081 = vmatpush1.msra.mxu0 0.0
  %3082 = vmatprep.subr.mxu0 0.0
  %3083 = vmatpush1.msra.mxu0 0.0
  %3084 = vmatprep.subr.mxu0 0.0
  %3085 = vmatpush1.msra.mxu0 0.0
  %3086 = vmatprep.subr.mxu0 0.0
  %3087 = vmatpush1.msra.mxu0 0.0
  %3088 = vmatprep.subr.mxu0 0.0
  %3089 = vmatpush1.msra.mxu0 0.0
  %3090 = vmatprep.subr.mxu0 0.0
  %3091 = vmatpush1.msra.mxu0 0.0
  %3092 = vmatprep.subr.mxu0 0.0
  %3093 = vmatpush1.msra.mxu0 0.0
  %3094 = vmatprep.mubr.f32.mxu0 0.0
  %3095 = vmatmul.mubr.f32.gmra.mrb[0].mxu0 %v3025
  %v3096 = vpop.f32.mrb[0].mxu0
  %v3097 = vadd.f32 %v3021, %v3096
  %v3098 = vpop.f32.mrb[0].mxu0
  %3099 = vdwg.mxu0
  %v3100 = vadd.f32 %v2417, %v3097
  %3101 = vmatprep.subr.mxu0 0.0
  %3102 = vmatpush1.msra.mxu0 %v3100
  %3103 = vmatprep.subr.mxu0 0.0
  %3104 = vmatpush1.msra.mxu0 0.0
  %3105 = vmatprep.subr.mxu0 0.0
  %3106 = vmatpush1.msra.mxu0 0.0
  %3107 = vmatprep.subr.mxu0 0.0
  %3108 = vmatpush1.msra.mxu0 0.0
  %3109 = vmatprep.subr.mxu0 0.0
  %3110 = vmatpush1.msra.mxu0 0.0
  %3111 = vmatprep.subr.mxu0 0.0
  %3112 = vmatpush1.msra.mxu0 0.0
  %3113 = vmatprep.subr.mxu0 0.0
  %3114 = vmatpush1.msra.mxu0 0.0
  %3115 = vmatprep.subr.mxu0 0.0
  %3116 = vmatpush1.msra.mxu0 0.0
  %3117 = vmatprep.subr.mxu0 0.0
  %3118 = vmatpush1.msra.mxu0 0.0
  %3119 = vmatprep.subr.mxu0 0.0
  %3120 = vmatpush1.msra.mxu0 0.0
  %3121 = vmatprep.subr.mxu0 0.0
  %3122 = vmatpush1.msra.mxu0 0.0
  %3123 = vmatprep.subr.mxu0 0.0
  %3124 = vmatpush1.msra.mxu0 0.0
  %3125 = vmatprep.subr.mxu0 0.0
  %3126 = vmatpush1.msra.mxu0 0.0
  %3127 = vmatprep.subr.mxu0 0.0
  %3128 = vmatpush1.msra.mxu0 0.0
  %3129 = vmatprep.subr.mxu0 0.0
  %3130 = vmatpush1.msra.mxu0 0.0
  %3131 = vmatprep.subr.mxu0 0.0
  %3132 = vmatpush1.msra.mxu0 0.0
  %3133 = vmatprep.subr.mxu0 0.0
  %3134 = vmatpush1.msra.mxu0 0.0
  %3135 = vmatprep.subr.mxu0 0.0
  %3136 = vmatpush1.msra.mxu0 0.0
  %3137 = vmatprep.subr.mxu0 0.0
  %3138 = vmatpush1.msra.mxu0 0.0
  %3139 = vmatprep.subr.mxu0 0.0
  %3140 = vmatpush1.msra.mxu0 0.0
  %3141 = vmatprep.subr.mxu0 0.0
  %3142 = vmatpush1.msra.mxu0 0.0
  %3143 = vmatprep.subr.mxu0 0.0
  %3144 = vmatpush1.msra.mxu0 0.0
  %3145 = vmatprep.subr.mxu0 0.0
  %3146 = vmatpush1.msra.mxu0 0.0
  %3147 = vmatprep.subr.mxu0 0.0
  %3148 = vmatpush1.msra.mxu0 0.0
  %3149 = vmatprep.subr.mxu0 0.0
  %3150 = vmatpush1.msra.mxu0 0.0
  %3151 = vmatprep.subr.mxu0 0.0
  %3152 = vmatpush1.msra.mxu0 0.0
  %3153 = vmatprep.subr.mxu0 0.0
  %3154 = vmatpush1.msra.mxu0 0.0
  %3155 = vmatprep.subr.mxu0 0.0
  %3156 = vmatpush1.msra.mxu0 0.0
  %3157 = vmatprep.subr.mxu0 0.0
  %3158 = vmatpush1.msra.mxu0 0.0
  %3159 = vmatprep.subr.mxu0 0.0
  %3160 = vmatpush1.msra.mxu0 0.0
  %3161 = vmatprep.subr.mxu0 0.0
  %3162 = vmatpush1.msra.mxu0 0.0
  %3163 = vmatprep.subr.mxu0 0.0
  %3164 = vmatpush1.msra.mxu0 0.0
  %3165 = vmatprep.mubr.f32.mxu0 0.0
  %3166 = vmatmul.mubr.f32.gmra.mrb[0].mxu0 %v2278
  %v3167 = vpop.f32.mrb[0].mxu0
  %v3168 = vadd.f32 %v2274, %v3167
  %v3169 = vpop.f32.mrb[0].mxu0
  %3170 = vdwg.mxu0
  %v3171 = vadd.f32 %v3168, %v3097
  %3172 = vset.pattern.permute.xlu0 9
  %3173 = vperm.xlu0 %3172, %v40
  %v3174 = vpop.permute.xlu0 %3173
  %3176 = vrot.lane.b32.xlu0 %v39, 56
  %v3177 = vpop.permute.xlu0 %3176
  %v3178 = vsel %vm55, %v3177, 0
  %3180 = vmatprep.subr.mxu0 %v2723
  %3181 = vmatpush1.msra.mxu0 %v2720
  %3182 = vmatprep.subr.mxu0 0.0
  %3183 = vmatpush1.msra.mxu0 0.0
  %3184 = vmatprep.subr.mxu0 0.0
  %3185 = vmatpush1.msra.mxu0 0.0
  %3186 = vmatprep.subr.mxu0 0.0
  %3187 = vmatpush1.msra.mxu0 0.0
  %3188 = vmatprep.subr.mxu0 0.0
  %3189 = vmatpush1.msra.mxu0 0.0
  %3190 = vmatprep.subr.mxu0 0.0
  %3191 = vmatpush1.msra.mxu0 0.0
  %3192 = vmatprep.subr.mxu0 0.0
  %3193 = vmatpush1.msra.mxu0 0.0
  %3194 = vmatprep.subr.mxu0 0.0
  %3195 = vmatpush1.msra.mxu0 0.0
  %3196 = vmatprep.subr.mxu0 0.0
  %3197 = vmatpush1.msra.mxu0 0.0
  %3198 = vmatprep.subr.mxu0 0.0
  %3199 = vmatpush1.msra.mxu0 0.0
  %3200 = vmatprep.subr.mxu0 0.0
  %3201 = vmatpush1.msra.mxu0 0.0
  %3202 = vmatprep.subr.mxu0 0.0
  %3203 = vmatpush1.msra.mxu0 0.0
  %3204 = vmatprep.subr.mxu0 0.0
  %3205 = vmatpush1.msra.mxu0 0.0
  %3206 = vmatprep.subr.mxu0 0.0
  %3207 = vmatpush1.msra.mxu0 0.0
  %3208 = vmatprep.subr.mxu0 0.0
  %3209 = vmatpush1.msra.mxu0 0.0
  %3210 = vmatprep.subr.mxu0 0.0
  %3211 = vmatpush1.msra.mxu0 0.0
  %3212 = vmatprep.subr.mxu0 0.0
  %3213 = vmatpush1.msra.mxu0 0.0
  %3214 = vmatprep.subr.mxu0 0.0
  %3215 = vmatpush1.msra.mxu0 0.0
  %3216 = vmatprep.subr.mxu0 0.0
  %3217 = vmatpush1.msra.mxu0 0.0
  %3218 = vmatprep.subr.mxu0 0.0
  %3219 = vmatpush1.msra.mxu0 0.0
  %3220 = vmatprep.subr.mxu0 0.0
  %3221 = vmatpush1.msra.mxu0 0.0
  %3222 = vmatprep.subr.mxu0 0.0
  %3223 = vmatpush1.msra.mxu0 0.0
  %3224 = vmatprep.subr.mxu0 0.0
  %3225 = vmatpush1.msra.mxu0 0.0
  %3226 = vmatprep.subr.mxu0 0.0
  %3227 = vmatpush1.msra.mxu0 0.0
  %3228 = vmatprep.subr.mxu0 0.0
  %3229 = vmatpush1.msra.mxu0 0.0
  %3230 = vmatprep.subr.mxu0 0.0
  %3231 = vmatpush1.msra.mxu0 0.0
  %3232 = vmatprep.subr.mxu0 0.0
  %3233 = vmatpush1.msra.mxu0 0.0
  %3234 = vmatprep.subr.mxu0 0.0
  %3235 = vmatpush1.msra.mxu0 0.0
  %3236 = vmatprep.subr.mxu0 0.0
  %3237 = vmatpush1.msra.mxu0 0.0
  %3238 = vmatprep.subr.mxu0 0.0
  %3239 = vmatpush1.msra.mxu0 0.0
  %3240 = vmatprep.subr.mxu0 0.0
  %3241 = vmatpush1.msra.mxu0 0.0
  %3242 = vmatprep.subr.mxu0 0.0
  %3243 = vmatpush1.msra.mxu0 0.0
  %3244 = vmatprep.mubr.f32.mxu0 0.0
  %3245 = vmatmul.mubr.f32.gmra.mrb[0].mxu0 %v3178
  %v3246 = vpop.f32.mrb[0].mxu0
  %v3247 = vadd.f32 %v3174, %v3246
  %v3248 = vpop.f32.mrb[0].mxu0
  %v3249 = vadd.f32 %v3174, %v3248
  %3250 = vdwg.mxu0
  %3251 = vmatprep.subr.mxu0 %v2729
  %3252 = vmatpush1.msra.mxu0 %v2726
  %3253 = vmatprep.subr.mxu0 0.0
  %3254 = vmatpush1.msra.mxu0 0.0
  %3255 = vmatprep.subr.mxu0 0.0
  %3256 = vmatpush1.msra.mxu0 0.0
  %3257 = vmatprep.subr.mxu0 0.0
  %3258 = vmatpush1.msra.mxu0 0.0
  %3259 = vmatprep.subr.mxu0 0.0
  %3260 = vmatpush1.msra.mxu0 0.0
  %3261 = vmatprep.subr.mxu0 0.0
  %3262 = vmatpush1.msra.mxu0 0.0
  %3263 = vmatprep.subr.mxu0 0.0
  %3264 = vmatpush1.msra.mxu0 0.0
  %3265 = vmatprep.subr.mxu0 0.0
  %3266 = vmatpush1.msra.mxu0 0.0
  %3267 = vmatprep.subr.mxu0 0.0
  %3268 = vmatpush1.msra.mxu0 0.0
  %3269 = vmatprep.subr.mxu0 0.0
  %3270 = vmatpush1.msra.mxu0 0.0
  %3271 = vmatprep.subr.mxu0 0.0
  %3272 = vmatpush1.msra.mxu0 0.0
  %3273 = vmatprep.subr.mxu0 0.0
  %3274 = vmatpush1.msra.mxu0 0.0
  %3275 = vmatprep.subr.mxu0 0.0
  %3276 = vmatpush1.msra.mxu0 0.0
  %3277 = vmatprep.subr.mxu0 0.0
  %3278 = vmatpush1.msra.mxu0 0.0
  %3279 = vmatprep.subr.mxu0 0.0
  %3280 = vmatpush1.msra.mxu0 0.0
  %3281 = vmatprep.subr.mxu0 0.0
  %3282 = vmatpush1.msra.mxu0 0.0
  %3283 = vmatprep.subr.mxu0 0.0
  %3284 = vmatpush1.msra.mxu0 0.0
  %3285 = vmatprep.subr.mxu0 0.0
  %3286 = vmatpush1.msra.mxu0 0.0
  %3287 = vmatprep.subr.mxu0 0.0
  %3288 = vmatpush1.msra.mxu0 0.0
  %3289 = vmatprep.subr.mxu0 0.0
  %3290 = vmatpush1.msra.mxu0 0.0
  %3291 = vmatprep.subr.mxu0 0.0
  %3292 = vmatpush1.msra.mxu0 0.0
  %3293 = vmatprep.subr.mxu0 0.0
  %3294 = vmatpush1.msra.mxu0 0.0
  %3295 = vmatprep.subr.mxu0 0.0
  %3296 = vmatpush1.msra.mxu0 0.0
  %3297 = vmatprep.subr.mxu0 0.0
  %3298 = vmatpush1.msra.mxu0 0.0
  %3299 = vmatprep.subr.mxu0 0.0
  %3300 = vmatpush1.msra.mxu0 0.0
  %3301 = vmatprep.subr.mxu0 0.0
  %3302 = vmatpush1.msra.mxu0 0.0
  %3303 = vmatprep.subr.mxu0 0.0
  %3304 = vmatpush1.msra.mxu0 0.0
  %3305 = vmatprep.subr.mxu0 0.0
  %3306 = vmatpush1.msra.mxu0 0.0
  %3307 = vmatprep.subr.mxu0 0.0
  %3308 = vmatpush1.msra.mxu0 0.0
  %3309 = vmatprep.subr.mxu0 0.0
  %3310 = vmatpush1.msra.mxu0 0.0
  %3311 = vmatprep.subr.mxu0 0.0
  %3312 = vmatpush1.msra.mxu0 0.0
  %3313 = vmatprep.subr.mxu0 0.0
  %3314 = vmatpush1.msra.mxu0 0.0
  %3315 = vmatprep.mubr.f32.mxu0 0.0
  %3316 = vmatmul.mubr.f32.gmra.mrb[0].mxu0 %v3178
  %v3317 = vpop.f32.mrb[0].mxu0
  %v3318 = vadd.f32 %v3174, %v3317
  %v3319 = vpop.f32.mrb[0].mxu0
  %v3320 = vadd.f32 %v3174, %v3319
  %3321 = vdwg.mxu0
  %3322 = vmatprep.subr.mxu0 0.0
  %3323 = vmatpush1.msra.mxu0 %v2094
  %3324 = vmatprep.subr.mxu0 0.0
  %3325 = vmatpush1.msra.mxu0 %v2095
  %3326 = vmatprep.subr.mxu0 0.0
  %3327 = vmatpush1.msra.mxu0 %v2096
  %3328 = vmatprep.subr.mxu0 0.0
  %3329 = vmatpush1.msra.mxu0 %v2097
  %3330 = vmatprep.subr.mxu0 0.0
  %3331 = vmatpush1.msra.mxu0 %v2098
  %3332 = vmatprep.subr.mxu0 0.0
  %3333 = vmatpush1.msra.mxu0 %v2099
  %3334 = vmatprep.subr.mxu0 0.0
  %3335 = vmatpush1.msra.mxu0 %v2100
  %3336 = vmatprep.subr.mxu0 0.0
  %3337 = vmatpush1.msra.mxu0 %v2101
  %3338 = vmatprep.subr.mxu0 0.0
  %3339 = vmatpush1.msra.mxu0 %v2102
  %3340 = vmatprep.subr.mxu0 0.0
  %3341 = vmatpush1.msra.mxu0 %v2103
  %3342 = vmatprep.subr.mxu0 0.0
  %3343 = vmatpush1.msra.mxu0 %v2104
  %3344 = vmatprep.subr.mxu0 0.0
  %3345 = vmatpush1.msra.mxu0 %v2105
  %3346 = vmatprep.subr.mxu0 0.0
  %3347 = vmatpush1.msra.mxu0 %v2106
  %3348 = vmatprep.subr.mxu0 0.0
  %3349 = vmatpush1.msra.mxu0 %v2107
  %3350 = vmatprep.subr.mxu0 0.0
  %3351 = vmatpush1.msra.mxu0 %v2108
  %3352 = vmatprep.subr.mxu0 0.0
  %3353 = vmatpush1.msra.mxu0 %v2109
  %3354 = vmatprep.subr.mxu0 0.0
  %3355 = vmatpush1.msra.mxu0 %v2110
  %3356 = vmatprep.subr.mxu0 0.0
  %3357 = vmatpush1.msra.mxu0 %v2111
  %3358 = vmatprep.subr.mxu0 0.0
  %3359 = vmatpush1.msra.mxu0 %v2112
  %3360 = vmatprep.subr.mxu0 0.0
  %3361 = vmatpush1.msra.mxu0 %v2113
  %3362 = vmatprep.subr.mxu0 0.0
  %3363 = vmatpush1.msra.mxu0 %v2114
  %3364 = vmatprep.subr.mxu0 0.0
  %3365 = vmatpush1.msra.mxu0 %v2115
  %3366 = vmatprep.subr.mxu0 0.0
  %3367 = vmatpush1.msra.mxu0 %v2116
  %3368 = vmatprep.subr.mxu0 0.0
  %3369 = vmatpush1.msra.mxu0 %v2117
  %3370 = vmatprep.subr.mxu0 0.0
  %3371 = vmatpush1.msra.mxu0 %v2118
  %3372 = vmatprep.subr.mxu0 0.0
  %3373 = vmatpush1.msra.mxu0 %v2119
  %3374 = vmatprep.subr.mxu0 0.0
  %3375 = vmatpush1.msra.mxu0 %v2120
  %3376 = vmatprep.subr.mxu0 0.0
  %3377 = vmatpush1.msra.mxu0 %v2121
  %3378 = vmatprep.subr.mxu0 0.0
  %3379 = vmatpush1.msra.mxu0 %v2122
  %3380 = vmatprep.subr.mxu0 0.0
  %3381 = vmatpush1.msra.mxu0 %v2123
  %3382 = vmatprep.subr.mxu0 0.0
  %3383 = vmatpush1.msra.mxu0 %v2124
  %3384 = vmatprep.subr.mxu0 0.0
  %3385 = vmatpush1.msra.mxu0 %v2125
  %3386 = vmatprep.mubr.f32.mxu0 %v3249
  %3387 = vmatmul.mubr.f32.gmra.mrb[0].mxu0 %v3247
  %v3388 = vpop.f32.mrb[0].mxu0
  %v3389 = vadd.f32 0.0, %v3388
  %v3390 = vpop.f32.mrb[0].mxu0
  %3391 = vdwg.mxu0
  %3392 = vmatprep.subr.mxu0 0.0
  %3393 = vmatpush1.msra.mxu0 %v2094
  %3394 = vmatprep.subr.mxu0 0.0
  %3395 = vmatpush1.msra.mxu0 %v2095
  %3396 = vmatprep.subr.mxu0 0.0
  %3397 = vmatpush1.msra.mxu0 %v2096
  %3398 = vmatprep.subr.mxu0 0.0
  %3399 = vmatpush1.msra.mxu0 %v2097
  %3400 = vmatprep.subr.mxu0 0.0
  %3401 = vmatpush1.msra.mxu0 %v2098
  %3402 = vmatprep.subr.mxu0 0.0
  %3403 = vmatpush1.msra.mxu0 %v2099
  %3404 = vmatprep.subr.mxu0 0.0
  %3405 = vmatpush1.msra.mxu0 %v2100
  %3406 = vmatprep.subr.mxu0 0.0
  %3407 = vmatpush1.msra.mxu0 %v2101
  %3408 = vmatprep.subr.mxu0 0.0
  %3409 = vmatpush1.msra.mxu0 %v2102
  %3410 = vmatprep.subr.mxu0 0.0
  %3411 = vmatpush1.msra.mxu0 %v2103
  %3412 = vmatprep.subr.mxu0 0.0
  %3413 = vmatpush1.msra.mxu0 %v2104
  %3414 = vmatprep.subr.mxu0 0.0
  %3415 = vmatpush1.msra.mxu0 %v2105
  %3416 = vmatprep.subr.mxu0 0.0
  %3417 = vmatpush1.msra.mxu0 %v2106
  %3418 = vmatprep.subr.mxu0 0.0
  %3419 = vmatpush1.msra.mxu0 %v2107
  %3420 = vmatprep.subr.mxu0 0.0
  %3421 = vmatpush1.msra.mxu0 %v2108
  %3422 = vmatprep.subr.mxu0 0.0
  %3423 = vmatpush1.msra.mxu0 %v2109
  %3424 = vmatprep.subr.mxu0 0.0
  %3425 = vmatpush1.msra.mxu0 %v2110
  %3426 = vmatprep.subr.mxu0 0.0
  %3427 = vmatpush1.msra.mxu0 %v2111
  %3428 = vmatprep.subr.mxu0 0.0
  %3429 = vmatpush1.msra.mxu0 %v2112
  %3430 = vmatprep.subr.mxu0 0.0
  %3431 = vmatpush1.msra.mxu0 %v2113
  %3432 = vmatprep.subr.mxu0 0.0
  %3433 = vmatpush1.msra.mxu0 %v2114
  %3434 = vmatprep.subr.mxu0 0.0
  %3435 = vmatpush1.msra.mxu0 %v2115
  %3436 = vmatprep.subr.mxu0 0.0
  %3437 = vmatpush1.msra.mxu0 %v2116
  %3438 = vmatprep.subr.mxu0 0.0
  %3439 = vmatpush1.msra.mxu0 %v2117
  %3440 = vmatprep.subr.mxu0 0.0
  %3441 = vmatpush1.msra.mxu0 %v2118
  %3442 = vmatprep.subr.mxu0 0.0
  %3443 = vmatpush1.msra.mxu0 %v2119
  %3444 = vmatprep.subr.mxu0 0.0
  %3445 = vmatpush1.msra.mxu0 %v2120
  %3446 = vmatprep.subr.mxu0 0.0
  %3447 = vmatpush1.msra.mxu0 %v2121
  %3448 = vmatprep.subr.mxu0 0.0
  %3449 = vmatpush1.msra.mxu0 %v2122
  %3450 = vmatprep.subr.mxu0 0.0
  %3451 = vmatpush1.msra.mxu0 %v2123
  %3452 = vmatprep.subr.mxu0 0.0
  %3453 = vmatpush1.msra.mxu0 %v2124
  %3454 = vmatprep.subr.mxu0 0.0
  %3455 = vmatpush1.msra.mxu0 %v2125
  %3456 = vmatprep.mubr.f32.mxu0 %v3320
  %3457 = vmatmul.mubr.f32.gmra.mrb[0].mxu0 %v3318
  %v3458 = vpop.f32.mrb[0].mxu0
  %v3459 = vadd.f32 0.0, %v3458
  %v3460 = vpop.f32.mrb[0].mxu0
  %3461 = vdwg.mxu0
  %3463 = vrot.lane.b32.xlu0 %v3459, 16
  %v3464 = vpop.permute.xlu0 %3463
  %v3466 = vsel %vm530, %v3389, %v3464
  %v3467 = vadd.f32 %v3171, %v3466
  %v3468 = vcombine.low %v680, %v681
  %v3469 = vcombine.low %v682, %v683
  %3472 = vst [vmem:[%s10] sm:$0xff] %v3468
  %3473 = vst [vmem:[%s10 + $0x8] sm:$0xff] %v3469
  %3474 = vst [vmem:[%s11] sm:$0xff] %v1635
  %vm3475 = vcmask 261120
  %v3476 = vsel %vm3475, %v2271, 0.0
  %3477 = vst [vmem:[%s12] sm:$0xf] %v3476
  %v3478 = vsel %vm3475, %v3467, 0.0
  %3479 = vst [vmem:[%s13] sm:$0xff] %v3478
  // Predicated region
  $region42: #{forward.1} parent=0 // pred_check
    _
  $region43: #{forward.1} parent=0 // pred_check_branch
    %3481 = sbr.rel (0) target = $region45
  $region44: #{forward.1} parent=0 // pred_region
    _
  $region45: #{forward.1} parent=0 // pred_fallthru
    _
  // Predicated region
  $region46: #{forward.1} parent=0 // pred_check
    _
  $region47: #{forward.1} parent=0 // pred_check_branch
    %3483 = sbr.rel (0) target = $region49
  $region48: #{forward.1} parent=0 // pred_region
    _
  $region49: #{forward.1} parent=0 // pred_fallthru
    _
  // Predicated region
  $region50: #{forward.1} parent=0 // pred_check
    _
  $region51: #{forward.1} parent=0 // pred_check_branch
    %3485 = sbr.rel (0) target = $region53
  $region52: #{forward.1} parent=0 // pred_region
    _
  $region53: #{forward.1} parent=0 // pred_fallthru
    _
  // Predicated region
  $region54: #{forward.1} parent=0 // pred_check
    _
  $region55: #{forward.1} parent=0 // pred_check_branch
    %3487 = sbr.rel (0) target = $region57
  $region56: #{forward.1} parent=0 // pred_region
    _
  $region57: #{forward.1} parent=0 // pred_fallthru
    _
  // Predicated region
  $region58: #{forward.1} parent=0 // pred_check
    _
  $region59: #{forward.1} parent=0 // pred_check_branch
    %3489 = sbr.rel (0) target = $region61
  $region60: #{forward.1} parent=0 // pred_region
    _
  $region61: #{forward.1} parent=0 // pred_fallthru
    _
  // Predicated region
  $region62: #{forward.1} parent=0 // pred_check
    _
  $region63: #{forward.1} parent=0 // pred_check_branch
    %3491 = sbr.rel (0) target = $region65
  $region64: #{forward.1} parent=0 // pred_region
    _
  $region65: #{forward.1} parent=0 // pred_fallthru
    _
  // Predicated region
  $region66: #{forward.1} parent=0 // pred_check
    _
  $region67: #{forward.1} parent=0 // pred_check_branch
    %3493 = sbr.rel (0) target = $region69
  $region68: #{forward.1} parent=0 // pred_region
    _
  $region69: #{forward.1} parent=0 // pred_fallthru
    _
  // Predicated region
  $region70: #{forward.1} parent=0 // pred_check
    _
  $region71: #{forward.1} parent=0 // pred_check_branch
    %3495 = sbr.rel (0) target = $region73
  $region72: #{forward.1} parent=0 // pred_region
    _
  $region73: #{forward.1} parent=0 // pred_fallthru
    _

</llo_original>
